<compile_context>
chip_gen: v5e
topology: v5e:2x2
jax: 0.10.0
libtpu: 0.0.40
codegen_flags: <defaults>
</compile_context>

<pallas_src>
import functools

import jax
import jax.numpy as jnp
from jax import lax
from jax.experimental import pallas as pl
from jax.experimental.pallas import tpu as pltpu


def _round_up(x, m):
    return ((x + m - 1) // m) * m


def _basic_block_kernel(x_ref, w1_ref, w2_ref, b1_ref, b2_ref, cm_ref,
                        o_ref, mid_ref, *, width, soff, guard, bw, m_rows):
    """One (image, row-block) step of the fused BasicBlock forward.

    x_ref  : (SRC, Cp)          cdt  per-block input slab (spatially flattened,
                                     channels on lanes, zero rows outside image)
    w*_ref : (3, 3*Cp, Cp)      cdt  conv taps, dx-major, BN scale folded in
    b*_ref : (1, Cp)            f32  folded BN shift
    cm_ref : (2, M, 1)          f32  column validity masks for dx = -1 / +1
    o_ref  : (BW, Cp)                output row-block (lane-dense)
    mid_ref: (M + 2*guard, Cp)  cdt  VMEM scratch for the conv1 -> conv2 staging
    """
    Cp = o_ref.shape[-1]
    cdt = w1_ref.dtype  # MXU input dtype; accumulation / elementwise stay f32

    def conv3x3(src_ref, center, rows, w_ref):
        # dx-grouped tap stacking: one K = 3*Cp matmul per dx group.
        acc = None
        for kx in range(3):
            dx = kx - 1
            base = center + dx - width
            stacked = jnp.concatenate(
                [src_ref[base + ky * width: base + ky * width + rows, :]
                 for ky in range(3)], axis=-1)                      # (rows, 3*Cp)
            part = jnp.dot(stacked, w_ref[kx],
                           preferred_element_type=jnp.float32)      # (rows, Cp)
            if dx != 0:
                # column wrap of the flattened layout, masked AFTER the matmul
                part = part * cm_ref[0 if dx < 0 else 1, 0:rows]
            acc = part if acc is None else acc + part
        return acc

    r = pl.program_id(1)

    # ---- conv1 (+ folded bn1 scale) -> + bn1 shift -> ReLU over block+halo ----
    out1 = jnp.maximum(
        conv3x3(x_ref, soff - width, m_rows, w1_ref) + b1_ref[...], 0.0)

    # ---- stage the intermediate; guard strips kept finite (zero) every step ----
    mid_ref[0:guard, :] = jnp.zeros((guard, Cp), cdt)
    mid_ref[guard + m_rows:guard + m_rows + guard, :] = jnp.zeros((guard, Cp), cdt)
    mid_ref[guard:guard + m_rows, :] = out1.astype(cdt)

    # conv2's zero padding: rows outside the image must be zero.  Re-done every
    # step: scratch is per-core under "parallel" semantics (review concern).
    @pl.when(r == 0)
    def _():
        mid_ref[guard:guard + width, :] = jnp.zeros((width, Cp), cdt)

    @pl.when(r == pl.num_programs(1) - 1)
    def _():
        mid_ref[guard + m_rows - width:guard + m_rows, :] = \
            jnp.zeros((width, Cp), cdt)

    # ---- conv2 (+ folded bn2 scale) -> + bn2 shift -> + residual -> ReLU ----
    out2 = conv3x3(mid_ref, guard + width, bw, w2_ref) + b2_ref[...]
    residual = x_ref[soff:soff + bw, :].astype(jnp.float32)
    o_ref[...] = jnp.maximum(out2 + residual, 0.0).astype(o_ref.dtype)


def basic_block_forward(x_nchw, w1_oihw, w2_oihw,
                        bn1_gamma, bn1_beta, bn1_mean, bn1_var,
                        bn2_gamma, bn2_beta, bn2_mean, bn2_var,
                        eps=1e-5, compute_dtype=jnp.bfloat16, block_rows=8):
    """Wrapper: layout plumbing + BN folding; the hot path lives in the kernel."""
    N, Cin, H, W = x_nchw.shape
    Cout = w1_oihw.shape[0]
    assert Cin == Cout, "no downsample branch => inplanes must equal planes"
    out_dtype = x_nchw.dtype

    # Lane-dense channel padding (unmasked stores, aligned lane concats).
    Cp = _round_up(Cin, 128)

    # Row-block size: largest divisor of H that is <= block_rows.
    BH = max(d for d in range(1, min(block_rows, H) + 1) if H % d == 0)
    R = H // BH
    HW, BW = H * W, BH * W
    M = (BH + 2) * W                       # conv1/mid rows per block (+1 image row each side)

    pack = 8 * (4 // jnp.dtype(compute_dtype).itemsize)   # sublane rows per tile
    SOFF = _round_up(2 * W + 1, pack)      # slab rows above the block start
    SRC = _round_up(SOFF + M + 1, pack)    # slab rows per block
    PADB = SRC - SOFF - BW                 # zero rows appended below the image
    guard = pack                           # guard rows in the mid scratch

    # NCHW -> flattened (N, H*W, Cp), channels on lanes, compute dtype.
    x_nhwc = jnp.transpose(x_nchw, (0, 2, 3, 1)).reshape(N, HW, Cin)
    x2d = jnp.pad(x_nhwc, ((0, 0), (0, 0), (0, Cp - Cin))).astype(compute_dtype)
    # Zero halo above/below the image, then cut overlapping per-block slabs so
    # every in-kernel slice is static and tile-aligned.
    x_pad = jnp.pad(x2d, ((0, 0), (SOFF, PADB), (0, 0)))
    x_blocks = jnp.stack(
        [x_pad[:, r * BW: r * BW + SRC, :] for r in range(R)], axis=1)

    # Fold BN (inference) scale into the conv weights; keep only the shift.
    s1 = (bn1_gamma / jnp.sqrt(bn1_var + eps)).astype(jnp.float32)
    s2 = (bn2_gamma / jnp.sqrt(bn2_var + eps)).astype(jnp.float32)
    b1 = jnp.pad(bn1_beta - bn1_mean * s1, (0, Cp - Cout)) \
        .reshape(1, Cp).astype(jnp.float32)
    b2 = jnp.pad(bn2_beta - bn2_mean * s2, (0, Cp - Cout)) \
        .reshape(1, Cp).astype(jnp.float32)

    def pack_w(w_oihw, scale):
        # OIHW -> (kx, ky, i, o), BN scale folded into o, channel-padded,
        # collapsed to (3, 3*Cp, Cp) matching the in-kernel ky lane-stack order.
        w = jnp.transpose(w_oihw.astype(jnp.float32), (3, 2, 1, 0)) * scale
        w = jnp.pad(w, ((0, 0), (0, 0), (0, Cp - Cin), (0, Cp - Cout)))
        return w.reshape(3, 3 * Cp, Cp).astype(compute_dtype)

    w1 = pack_w(w1_oihw, s1)
    w2 = pack_w(w2_oihw, s2)

    # Column-edge masks for the flattened layout (dx = -1 and dx = +1); the
    # column pattern is W-periodic so one M-row table serves both convs.
    col = jnp.arange(M, dtype=jnp.int32) % W
    cmask = jnp.stack([col >= 1, col <= W - 2]) \
        .astype(jnp.float32).reshape(2, M, 1)

    kernel = functools.partial(_basic_block_kernel, width=W, soff=SOFF,
                               guard=guard, bw=BW, m_rows=M)
    out2d = pl.pallas_call(
        kernel,
        out_shape=jax.ShapeDtypeStruct((N, HW, Cp), out_dtype),
        grid=(N, R),
        in_specs=[
            pl.BlockSpec((None, None, SRC, Cp), lambda n, r: (n, r, 0, 0)),
            pl.BlockSpec((3, 3 * Cp, Cp), lambda n, r: (0, 0, 0)),   # resident
            pl.BlockSpec((3, 3 * Cp, Cp), lambda n, r: (0, 0, 0)),   # resident
            pl.BlockSpec((1, Cp), lambda n, r: (0, 0)),              # resident
            pl.BlockSpec((1, Cp), lambda n, r: (0, 0)),              # resident
            pl.BlockSpec((2, M, 1), lambda n, r: (0, 0, 0)),         # resident
        ],
        out_specs=pl.BlockSpec((None, BW, Cp), lambda n, r: (n, r, 0)),
        scratch_shapes=[pltpu.VMEM((M + 2 * guard, Cp), compute_dtype)],
        compiler_params=pltpu.CompilerParams(
            dimension_semantics=("parallel", "parallel"),
            vmem_limit_bytes=32 * 1024 * 1024,
        ),
    )(x_blocks, w1, w2, b1, b2, cmask)

    # Strip channel padding, flattened NHWC -> NCHW (PyTorch convention).
    out = out2d[:, :, :Cout].reshape(N, H, W, Cout)
    return jnp.transpose(out, (0, 3, 1, 2))


def _reference_forward(x_nchw, w1_oihw, w2_oihw,
                       bn1_gamma, bn1_beta, bn1_mean, bn1_var,
                       bn2_gamma, bn2_beta, bn2_mean, bn2_var,
                       eps=1e-5):
    """Pure-JAX reference (lax.conv) for correctness checking."""
    def conv(x, w):
        return lax.conv_general_dilated(
            x, w, window_strides=(1, 1), padding=((1, 1), (1, 1)),
            dimension_numbers=("NCHW", "OIHW", "NCHW"),
            precision=lax.Precision.HIGHEST)

    def bn(x, g, b, m, v):
        g = g.reshape(1, -1, 1, 1); b = b.reshape(1, -1, 1, 1)
        m = m.reshape(1, -1, 1, 1); v = v.reshape(1, -1, 1, 1)
        return (x - m) / jnp.sqrt(v + eps) * g + b

    out = jnp.maximum(
        bn(conv(x_nchw, w1_oihw), bn1_gamma, bn1_beta, bn1_mean, bn1_var), 0.0)
    out = bn(conv(out, w2_oihw), bn2_gamma, bn2_beta, bn2_mean, bn2_var)
    return jnp.maximum(out + x_nchw, 0.0)


if __name__ == "__main__":
    key = jax.random.PRNGKey(0)
    ks = jax.random.split(key, 10)

    N, C, H, W = 2, 4, 16, 16  # inplanes == planes (no downsample)
    x = jax.random.normal(ks[0], (N, C, H, W), jnp.float32)

    w1 = jax.random.normal(ks[1], (C, C, 3, 3), jnp.float32) * 0.1
    w2 = jax.random.normal(ks[2], (C, C, 3, 3), jnp.float32) * 0.1

    bn1_gamma = 1.0 + 0.1 * jax.random.normal(ks[3], (C,), jnp.float32)
    bn1_beta = 0.1 * jax.random.normal(ks[4], (C,), jnp.float32)
    bn1_mean = 0.1 * jax.random.normal(ks[5], (C,), jnp.float32)
    bn1_var = jnp.abs(1.0 + 0.1 * jax.random.normal(ks[6], (C,), jnp.float32))

    bn2_gamma = 1.0 + 0.1 * jax.random.normal(ks[7], (C,), jnp.float32)
    bn2_beta = 0.1 * jax.random.normal(ks[8], (C,), jnp.float32)
    bn2_mean = 0.1 * jax.random.normal(ks[9], (C,), jnp.float32)
    bn2_var = jnp.ones((C,), jnp.float32)

    args = (x, w1, w2,
            bn1_gamma, bn1_beta, bn1_mean, bn1_var,
            bn2_gamma, bn2_beta, bn2_mean, bn2_var)

    ref = _reference_forward(*args)

    # f32 MXU path: must match the reference tightly.
    out_f32 = jax.block_until_ready(
        basic_block_forward(*args, compute_dtype=jnp.float32))
    assert out_f32.shape == (N, C, H, W)
    assert jnp.allclose(out_f32, ref, atol=5e-4, rtol=5e-4), "f32 mismatch"

    # bf16 I/O + bf16 MXU inputs (v6e/v7x fast path), f32 accumulation.
    out_bf16 = jax.block_until_ready(
        basic_block_forward(*args, compute_dtype=jnp.bfloat16))
    assert out_bf16.shape == (N, C, H, W)
    assert jnp.allclose(out_bf16, ref, atol=5e-2, rtol=5e-2), "bf16 mismatch"

    print("KERNEL_OK")
</pallas_src>

<mosaic_0001>
module attributes {stable_mosaic.version = 11 : i64} {
  func.func @_basic_block_kernel(%arg0: i32, %arg1: i32, %arg2: memref<1x1x208x128xf32, #tpu.memory_space<vmem>>, %arg3: memref<3x384x128xf32, #tpu.memory_space<vmem>>, %arg4: memref<3x384x128xf32, #tpu.memory_space<vmem>>, %arg5: memref<1x128xf32, #tpu.memory_space<vmem>>, %arg6: memref<1x128xf32, #tpu.memory_space<vmem>>, %arg7: memref<2x160x1xf32, #tpu.memory_space<vmem>>, %arg8: memref<1x128x128xf32, #tpu.memory_space<vmem>>, %arg9: memref<176x128xf32, #tpu.memory_space<vmem>>) attributes {dimension_semantics = [#tpu.dimension_semantics<parallel>, #tpu.dimension_semantics<parallel>], iteration_bounds = array<i64: 2, 2>, scalar_prefetch = 0 : i64, scratch_operands = 1 : i64, tpu.core_type = #tpu.core_type<tc>, window_params = [{transform_indices = @transform_0, window_bounds = array<i64: 1, 1, 208, 128>}, {pipeline_mode = #tpu.pipeline_mode<synchronous>, transform_indices = @transform_1, window_bounds = array<i64: 3, 384, 128>}, {pipeline_mode = #tpu.pipeline_mode<synchronous>, transform_indices = @transform_2, window_bounds = array<i64: 3, 384, 128>}, {pipeline_mode = #tpu.pipeline_mode<synchronous>, transform_indices = @transform_3, window_bounds = array<i64: 1, 128>}, {pipeline_mode = #tpu.pipeline_mode<synchronous>, transform_indices = @transform_4, window_bounds = array<i64: 1, 128>}, {pipeline_mode = #tpu.pipeline_mode<synchronous>, transform_indices = @transform_5, window_bounds = array<i64: 2, 160, 1>}, {transform_indices = @transform_6, window_bounds = array<i64: 1, 128, 128>}]} {
    %c0 = arith.constant 0 : index
    %c0_0 = arith.constant 0 : index
    %c7 = arith.constant 7 : index
    %c0_1 = arith.constant 0 : index
    %0 = vector.load %arg2[%c0, %c0_0, %c7, %c0_1] : memref<1x1x208x128xf32, #tpu.memory_space<vmem>>, vector<1x1x160x128xf32>
    %1 = vector.shape_cast %0 : vector<1x1x160x128xf32> to vector<160x128xf32>
    %c0_2 = arith.constant 0 : index
    %c0_3 = arith.constant 0 : index
    %c23 = arith.constant 23 : index
    %c0_4 = arith.constant 0 : index
    %2 = vector.load %arg2[%c0_2, %c0_3, %c23, %c0_4] : memref<1x1x208x128xf32, #tpu.memory_space<vmem>>, vector<1x1x160x128xf32>
    %3 = vector.shape_cast %2 : vector<1x1x160x128xf32> to vector<160x128xf32>
    %c0_5 = arith.constant 0 : index
    %c0_6 = arith.constant 0 : index
    %c39 = arith.constant 39 : index
    %c0_7 = arith.constant 0 : index
    %4 = vector.load %arg2[%c0_5, %c0_6, %c39, %c0_7] : memref<1x1x208x128xf32, #tpu.memory_space<vmem>>, vector<1x1x160x128xf32>
    %5 = vector.shape_cast %4 : vector<1x1x160x128xf32> to vector<160x128xf32>
    %6 = tpu.concatenate %1, %3, %5 in 1 : vector<160x128xf32>, vector<160x128xf32>, vector<160x128xf32> -> vector<160x384xf32>
    %c0_8 = arith.constant 0 : index
    %c0_9 = arith.constant 0 : index
    %c0_10 = arith.constant 0 : index
    %7 = vector.load %arg3[%c0_8, %c0_9, %c0_10] : memref<3x384x128xf32, #tpu.memory_space<vmem>>, vector<1x384x128xf32>
    %8 = vector.shape_cast %7 : vector<1x384x128xf32> to vector<384x128xf32>
    %cst = arith.constant dense<0.000000e+00> : vector<160x128xf32>
    %9 = tpu.matmul %6, %8, %cst {dimension_numbers = #tpu.dot_dimension_numbers<[1], [0], [0], [1], [0, 0, 1, 1], [], []>} : vector<160x384xf32>, vector<384x128xf32>, vector<160x128xf32> -> vector<160x128xf32>
    %c0_11 = arith.constant 0 : index
    %c0_12 = arith.constant 0 : index
    %c0_13 = arith.constant 0 : index
    %10 = vector.load %arg7[%c0_11, %c0_12, %c0_13] : memref<2x160x1xf32, #tpu.memory_space<vmem>>, vector<1x160x1xf32>
    %11 = vector.shape_cast %10 : vector<1x160x1xf32> to vector<160x1xf32>
    %12 = vector.broadcast %11 : vector<160x1xf32> to vector<160x128xf32>
    %13 = arith.mulf %9, %12 : vector<160x128xf32>
    %c0_14 = arith.constant 0 : index
    %c0_15 = arith.constant 0 : index
    %c8 = arith.constant 8 : index
    %c0_16 = arith.constant 0 : index
    %14 = vector.load %arg2[%c0_14, %c0_15, %c8, %c0_16] : memref<1x1x208x128xf32, #tpu.memory_space<vmem>>, vector<1x1x160x128xf32>
    %15 = vector.shape_cast %14 : vector<1x1x160x128xf32> to vector<160x128xf32>
    %c0_17 = arith.constant 0 : index
    %c0_18 = arith.constant 0 : index
    %c24 = arith.constant 24 : index
    %c0_19 = arith.constant 0 : index
    %16 = vector.load %arg2[%c0_17, %c0_18, %c24, %c0_19] : memref<1x1x208x128xf32, #tpu.memory_space<vmem>>, vector<1x1x160x128xf32>
    %17 = vector.shape_cast %16 : vector<1x1x160x128xf32> to vector<160x128xf32>
    %c0_20 = arith.constant 0 : index
    %c0_21 = arith.constant 0 : index
    %c40 = arith.constant 40 : index
    %c0_22 = arith.constant 0 : index
    %18 = vector.load %arg2[%c0_20, %c0_21, %c40, %c0_22] : memref<1x1x208x128xf32, #tpu.memory_space<vmem>>, vector<1x1x160x128xf32>
    %19 = vector.shape_cast %18 : vector<1x1x160x128xf32> to vector<160x128xf32>
    %20 = tpu.concatenate %15, %17, %19 in 1 : vector<160x128xf32>, vector<160x128xf32>, vector<160x128xf32> -> vector<160x384xf32>
    %c1 = arith.constant 1 : index
    %c0_23 = arith.constant 0 : index
    %c0_24 = arith.constant 0 : index
    %21 = vector.load %arg3[%c1, %c0_23, %c0_24] : memref<3x384x128xf32, #tpu.memory_space<vmem>>, vector<1x384x128xf32>
    %22 = vector.shape_cast %21 : vector<1x384x128xf32> to vector<384x128xf32>
    %cst_25 = arith.constant dense<0.000000e+00> : vector<160x128xf32>
    %23 = tpu.matmul %20, %22, %cst_25 {dimension_numbers = #tpu.dot_dimension_numbers<[1], [0], [0], [1], [0, 0, 1, 1], [], []>} : vector<160x384xf32>, vector<384x128xf32>, vector<160x128xf32> -> vector<160x128xf32>
    %24 = arith.addf %13, %23 : vector<160x128xf32>
    %c0_26 = arith.constant 0 : index
    %c0_27 = arith.constant 0 : index
    %c9 = arith.constant 9 : index
    %c0_28 = arith.constant 0 : index
    %25 = vector.load %arg2[%c0_26, %c0_27, %c9, %c0_28] : memref<1x1x208x128xf32, #tpu.memory_space<vmem>>, vector<1x1x160x128xf32>
    %26 = vector.shape_cast %25 : vector<1x1x160x128xf32> to vector<160x128xf32>
    %c0_29 = arith.constant 0 : index
    %c0_30 = arith.constant 0 : index
    %c25 = arith.constant 25 : index
    %c0_31 = arith.constant 0 : index
    %27 = vector.load %arg2[%c0_29, %c0_30, %c25, %c0_31] : memref<1x1x208x128xf32, #tpu.memory_space<vmem>>, vector<1x1x160x128xf32>
    %28 = vector.shape_cast %27 : vector<1x1x160x128xf32> to vector<160x128xf32>
    %c0_32 = arith.constant 0 : index
    %c0_33 = arith.constant 0 : index
    %c41 = arith.constant 41 : index
    %c0_34 = arith.constant 0 : index
    %29 = vector.load %arg2[%c0_32, %c0_33, %c41, %c0_34] : memref<1x1x208x128xf32, #tpu.memory_space<vmem>>, vector<1x1x160x128xf32>
    %30 = vector.shape_cast %29 : vector<1x1x160x128xf32> to vector<160x128xf32>
    %31 = tpu.concatenate %26, %28, %30 in 1 : vector<160x128xf32>, vector<160x128xf32>, vector<160x128xf32> -> vector<160x384xf32>
    %c2 = arith.constant 2 : index
    %c0_35 = arith.constant 0 : index
    %c0_36 = arith.constant 0 : index
    %32 = vector.load %arg3[%c2, %c0_35, %c0_36] : memref<3x384x128xf32, #tpu.memory_space<vmem>>, vector<1x384x128xf32>
    %33 = vector.shape_cast %32 : vector<1x384x128xf32> to vector<384x128xf32>
    %cst_37 = arith.constant dense<0.000000e+00> : vector<160x128xf32>
    %34 = tpu.matmul %31, %33, %cst_37 {dimension_numbers = #tpu.dot_dimension_numbers<[1], [0], [0], [1], [0, 0, 1, 1], [], []>} : vector<160x384xf32>, vector<384x128xf32>, vector<160x128xf32> -> vector<160x128xf32>
    %c1_38 = arith.constant 1 : index
    %c0_39 = arith.constant 0 : index
    %c0_40 = arith.constant 0 : index
    %35 = vector.load %arg7[%c1_38, %c0_39, %c0_40] : memref<2x160x1xf32, #tpu.memory_space<vmem>>, vector<1x160x1xf32>
    %36 = vector.shape_cast %35 : vector<1x160x1xf32> to vector<160x1xf32>
    %37 = vector.broadcast %36 : vector<160x1xf32> to vector<160x128xf32>
    %38 = arith.mulf %34, %37 : vector<160x128xf32>
    %39 = arith.addf %24, %38 : vector<160x128xf32>
    %c0_41 = arith.constant 0 : index
    %c0_42 = arith.constant 0 : index
    %40 = vector.load %arg5[%c0_41, %c0_42] : memref<1x128xf32, #tpu.memory_space<vmem>>, vector<1x128xf32>
    %41 = vector.broadcast %40 : vector<1x128xf32> to vector<160x128xf32>
    %42 = arith.addf %39, %41 : vector<160x128xf32>
    %cst_43 = arith.constant 0.000000e+00 : f32
    %43 = vector.broadcast %cst_43 : f32 to vector<160x128xf32>
    %44 = arith.maximumf %42, %43 : vector<160x128xf32>
    %cst_44 = arith.constant 0.000000e+00 : f32
    %45 = vector.broadcast %cst_44 : f32 to vector<8x128xf32>
    %c0_45 = arith.constant 0 : index
    %c0_46 = arith.constant 0 : index
    %46 = vector.load %arg9[%c0_45, %c0_46] : memref<176x128xf32, #tpu.memory_space<vmem>>, vector<8x128xf32>
    tpu.vector_store %arg9[%c0_45, %c0_46], %45 {strides = array<i32>} : memref<176x128xf32, #tpu.memory_space<vmem>>, vector<8x128xf32>,
    %cst_47 = arith.constant 0.000000e+00 : f32
    %47 = vector.broadcast %cst_47 : f32 to vector<8x128xf32>
    %c168 = arith.constant 168 : index
    %c0_48 = arith.constant 0 : index
    %48 = vector.load %arg9[%c168, %c0_48] : memref<176x128xf32, #tpu.memory_space<vmem>>, vector<8x128xf32>
    tpu.vector_store %arg9[%c168, %c0_48], %47 {strides = array<i32>} : memref<176x128xf32, #tpu.memory_space<vmem>>, vector<8x128xf32>,
    %c8_49 = arith.constant 8 : index
    %c0_50 = arith.constant 0 : index
    %49 = vector.load %arg9[%c8_49, %c0_50] : memref<176x128xf32, #tpu.memory_space<vmem>>, vector<160x128xf32>
    tpu.vector_store %arg9[%c8_49, %c0_50], %44 {strides = array<i32>} : memref<176x128xf32, #tpu.memory_space<vmem>>, vector<160x128xf32>,
    %c0_i32 = arith.constant 0 : i32
    %50 = arith.cmpi eq, %arg1, %c0_i32 : i32
    %51 = arith.extui %50 : i1 to i32
    %c0_i32_51 = arith.constant 0 : i32
    %52 = arith.cmpi ne, %51, %c0_i32_51 : i32
    scf.if %52 {
      %cst_99 = arith.constant 0.000000e+00 : f32
      %98 = vector.broadcast %cst_99 : f32 to vector<16x128xf32>
      %c8_100 = arith.constant 8 : index
      %c0_101 = arith.constant 0 : index
      %99 = vector.load %arg9[%c8_100, %c0_101] : memref<176x128xf32, #tpu.memory_space<vmem>>, vector<16x128xf32>
      tpu.vector_store %arg9[%c8_100, %c0_101], %98 {strides = array<i32>} : memref<176x128xf32, #tpu.memory_space<vmem>>, vector<16x128xf32>,
    } else {
    }
    %c1_i32 = arith.constant 1 : i32
    %53 = arith.cmpi eq, %arg1, %c1_i32 : i32
    %54 = arith.extui %53 : i1 to i32
    %c0_i32_52 = arith.constant 0 : i32
    %55 = arith.cmpi ne, %54, %c0_i32_52 : i32
    scf.if %55 {
      %cst_99 = arith.constant 0.000000e+00 : f32
      %98 = vector.broadcast %cst_99 : f32 to vector<16x128xf32>
      %c152 = arith.constant 152 : index
      %c0_100 = arith.constant 0 : index
      %99 = vector.load %arg9[%c152, %c0_100] : memref<176x128xf32, #tpu.memory_space<vmem>>, vector<16x128xf32>
      tpu.vector_store %arg9[%c152, %c0_100], %98 {strides = array<i32>} : memref<176x128xf32, #tpu.memory_space<vmem>>, vector<16x128xf32>,
    } else {
    }
    %c7_53 = arith.constant 7 : index
    %c0_54 = arith.constant 0 : index
    %56 = vector.load %arg9[%c7_53, %c0_54] : memref<176x128xf32, #tpu.memory_space<vmem>>, vector<128x128xf32>
    %c23_55 = arith.constant 23 : index
    %c0_56 = arith.constant 0 : index
    %57 = vector.load %arg9[%c23_55, %c0_56] : memref<176x128xf32, #tpu.memory_space<vmem>>, vector<128x128xf32>
    %c39_57 = arith.constant 39 : index
    %c0_58 = arith.constant 0 : index
    %58 = vector.load %arg9[%c39_57, %c0_58] : memref<176x128xf32, #tpu.memory_space<vmem>>, vector<128x128xf32>
    %59 = tpu.concatenate %56, %57, %58 in 1 : vector<128x128xf32>, vector<128x128xf32>, vector<128x128xf32> -> vector<128x384xf32>
    %c0_59 = arith.constant 0 : index
    %c0_60 = arith.constant 0 : index
    %c0_61 = arith.constant 0 : index
    %60 = vector.load %arg4[%c0_59, %c0_60, %c0_61] : memref<3x384x128xf32, #tpu.memory_space<vmem>>, vector<1x384x128xf32>
    %61 = vector.shape_cast %60 : vector<1x384x128xf32> to vector<384x128xf32>
    %cst_62 = arith.constant dense<0.000000e+00> : vector<128x128xf32>
    %62 = tpu.matmul %59, %61, %cst_62 {dimension_numbers = #tpu.dot_dimension_numbers<[1], [0], [0], [1], [0, 0, 1, 1], [], []>} : vector<128x384xf32>, vector<384x128xf32>, vector<128x128xf32> -> vector<128x128xf32>
    %c0_63 = arith.constant 0 : index
    %c0_64 = arith.constant 0 : index
    %c0_65 = arith.constant 0 : index
    %63 = vector.load %arg7[%c0_63, %c0_64, %c0_65] : memref<2x160x1xf32, #tpu.memory_space<vmem>>, vector<1x128x1xf32>
    %64 = vector.shape_cast %63 : vector<1x128x1xf32> to vector<128x1xf32>
    %65 = vector.broadcast %64 : vector<128x1xf32> to vector<128x128xf32>
    %66 = arith.mulf %62, %65 : vector<128x128xf32>
    %c8_66 = arith.constant 8 : index
    %c0_67 = arith.constant 0 : index
    %67 = vector.load %arg9[%c8_66, %c0_67] : memref<176x128xf32, #tpu.memory_space<vmem>>, vector<128x128xf32>
    %c24_68 = arith.constant 24 : index
    %c0_69 = arith.constant 0 : index
    %68 = vector.load %arg9[%c24_68, %c0_69] : memref<176x128xf32, #tpu.memory_space<vmem>>, vector<128x128xf32>
    %c40_70 = arith.constant 40 : index
    %c0_71 = arith.constant 0 : index
    %69 = vector.load %arg9[%c40_70, %c0_71] : memref<176x128xf32, #tpu.memory_space<vmem>>, vector<128x128xf32>
    %70 = tpu.concatenate %67, %68, %69 in 1 : vector<128x128xf32>, vector<128x128xf32>, vector<128x128xf32> -> vector<128x384xf32>
    %c1_72 = arith.constant 1 : index
    %c0_73 = arith.constant 0 : index
    %c0_74 = arith.constant 0 : index
    %71 = vector.load %arg4[%c1_72, %c0_73, %c0_74] : memref<3x384x128xf32, #tpu.memory_space<vmem>>, vector<1x384x128xf32>
    %72 = vector.shape_cast %71 : vector<1x384x128xf32> to vector<384x128xf32>
    %cst_75 = arith.constant dense<0.000000e+00> : vector<128x128xf32>
    %73 = tpu.matmul %70, %72, %cst_75 {dimension_numbers = #tpu.dot_dimension_numbers<[1], [0], [0], [1], [0, 0, 1, 1], [], []>} : vector<128x384xf32>, vector<384x128xf32>, vector<128x128xf32> -> vector<128x128xf32>
    %74 = arith.addf %66, %73 : vector<128x128xf32>
    %c9_76 = arith.constant 9 : index
    %c0_77 = arith.constant 0 : index
    %75 = vector.load %arg9[%c9_76, %c0_77] : memref<176x128xf32, #tpu.memory_space<vmem>>, vector<128x128xf32>
    %c25_78 = arith.constant 25 : index
    %c0_79 = arith.constant 0 : index
    %76 = vector.load %arg9[%c25_78, %c0_79] : memref<176x128xf32, #tpu.memory_space<vmem>>, vector<128x128xf32>
    %c41_80 = arith.constant 41 : index
    %c0_81 = arith.constant 0 : index
    %77 = vector.load %arg9[%c41_80, %c0_81] : memref<176x128xf32, #tpu.memory_space<vmem>>, vector<128x128xf32>
    %78 = tpu.concatenate %75, %76, %77 in 1 : vector<128x128xf32>, vector<128x128xf32>, vector<128x128xf32> -> vector<128x384xf32>
    %c2_82 = arith.constant 2 : index
    %c0_83 = arith.constant 0 : index
    %c0_84 = arith.constant 0 : index
    %79 = vector.load %arg4[%c2_82, %c0_83, %c0_84] : memref<3x384x128xf32, #tpu.memory_space<vmem>>, vector<1x384x128xf32>
    %80 = vector.shape_cast %79 : vector<1x384x128xf32> to vector<384x128xf32>
    %cst_85 = arith.constant dense<0.000000e+00> : vector<128x128xf32>
    %81 = tpu.matmul %78, %80, %cst_85 {dimension_numbers = #tpu.dot_dimension_numbers<[1], [0], [0], [1], [0, 0, 1, 1], [], []>} : vector<128x384xf32>, vector<384x128xf32>, vector<128x128xf32> -> vector<128x128xf32>
    %c1_86 = arith.constant 1 : index
    %c0_87 = arith.constant 0 : index
    %c0_88 = arith.constant 0 : index
    %82 = vector.load %arg7[%c1_86, %c0_87, %c0_88] : memref<2x160x1xf32, #tpu.memory_space<vmem>>, vector<1x128x1xf32>
    %83 = vector.shape_cast %82 : vector<1x128x1xf32> to vector<128x1xf32>
    %84 = vector.broadcast %83 : vector<128x1xf32> to vector<128x128xf32>
    %85 = arith.mulf %81, %84 : vector<128x128xf32>
    %86 = arith.addf %74, %85 : vector<128x128xf32>
    %c0_89 = arith.constant 0 : index
    %c0_90 = arith.constant 0 : index
    %87 = vector.load %arg6[%c0_89, %c0_90] : memref<1x128xf32, #tpu.memory_space<vmem>>, vector<1x128xf32>
    %88 = vector.broadcast %87 : vector<1x128xf32> to vector<128x128xf32>
    %89 = arith.addf %86, %88 : vector<128x128xf32>
    %c0_91 = arith.constant 0 : index
    %c0_92 = arith.constant 0 : index
    %c40_93 = arith.constant 40 : index
    %c0_94 = arith.constant 0 : index
    %90 = vector.load %arg2[%c0_91, %c0_92, %c40_93, %c0_94] : memref<1x1x208x128xf32, #tpu.memory_space<vmem>>, vector<1x1x128x128xf32>
    %91 = vector.shape_cast %90 : vector<1x1x128x128xf32> to vector<128x128xf32>
    %92 = arith.addf %89, %91 : vector<128x128xf32>
    %cst_95 = arith.constant 0.000000e+00 : f32
    %93 = vector.broadcast %cst_95 : f32 to vector<128x128xf32>
    %94 = arith.maximumf %92, %93 : vector<128x128xf32>
    %c0_96 = arith.constant 0 : index
    %c0_97 = arith.constant 0 : index
    %c0_98 = arith.constant 0 : index
    %95 = vector.load %arg8[%c0_96, %c0_97, %c0_98] : memref<1x128x128xf32, #tpu.memory_space<vmem>>, vector<1x128x128xf32>
    %96 = vector.shape_cast %95 : vector<1x128x128xf32> to vector<128x128xf32>
    %97 = vector.shape_cast %94 : vector<128x128xf32> to vector<1x128x128xf32>
    tpu.vector_store %arg8[%c0_96, %c0_97, %c0_98], %97 {strides = array<i32>} : memref<1x128x128xf32, #tpu.memory_space<vmem>>, vector<1x128x128xf32>,
    return
  }
  func.func @transform_0(%arg0: i32, %arg1: i32) -> (i32, i32, i32, i32) {
    %c0_i32 = arith.constant 0 : i32
    %c0_i32_0 = arith.constant 0 : i32
    %c0_i32_1 = arith.constant 0 : i32
    return %arg0, %arg1, %c0_i32, %c0_i32_0 : i32, i32, i32, i32
  }
  func.func @transform_1(%arg0: i32, %arg1: i32) -> (i32, i32, i32) {
    %c0_i32 = arith.constant 0 : i32
    %c0_i32_0 = arith.constant 0 : i32
    %c0_i32_1 = arith.constant 0 : i32
    %c0_i32_2 = arith.constant 0 : i32
    return %c0_i32, %c0_i32_0, %c0_i32_1 : i32, i32, i32
  }
  func.func @transform_2(%arg0: i32, %arg1: i32) -> (i32, i32, i32) {
    %c0_i32 = arith.constant 0 : i32
    %c0_i32_0 = arith.constant 0 : i32
    %c0_i32_1 = arith.constant 0 : i32
    %c0_i32_2 = arith.constant 0 : i32
    return %c0_i32, %c0_i32_0, %c0_i32_1 : i32, i32, i32
  }
  func.func @transform_3(%arg0: i32, %arg1: i32) -> (i32, i32) {
    %c0_i32 = arith.constant 0 : i32
    %c0_i32_0 = arith.constant 0 : i32
    %c0_i32_1 = arith.constant 0 : i32
    return %c0_i32, %c0_i32_0 : i32, i32
  }
  func.func @transform_4(%arg0: i32, %arg1: i32) -> (i32, i32) {
    %c0_i32 = arith.constant 0 : i32
    %c0_i32_0 = arith.constant 0 : i32
    %c0_i32_1 = arith.constant 0 : i32
    return %c0_i32, %c0_i32_0 : i32, i32
  }
  func.func @transform_5(%arg0: i32, %arg1: i32) -> (i32, i32, i32) {
    %c0_i32 = arith.constant 0 : i32
    %c0_i32_0 = arith.constant 0 : i32
    %c0_i32_1 = arith.constant 0 : i32
    %c0_i32_2 = arith.constant 0 : i32
    return %c0_i32, %c0_i32_0, %c0_i32_1 : i32, i32, i32
  }
  func.func @transform_6(%arg0: i32, %arg1: i32) -> (i32, i32, i32) {
    %c0_i32 = arith.constant 0 : i32
    %c0_i32_0 = arith.constant 0 : i32
    return %arg0, %arg1, %c0_i32 : i32, i32, i32
  }
}

</mosaic_0001>

<llo_original>
// kernel: tpu_custom_call.1
$region0: #{tpu_custom_call.1}
  #allocation0 [shape = 'u32[]', space=smem, size = 0x4, offset = 0x4, fixed_abs, tag = 'smem constant byte address 0x4 - core index']
  #allocation1 [shape = 'u32[72,128]{1,0:T(1,128)}', space=vmem, size = 0x9000, scoped, tag = 'internal scratch']
  #allocation2 [shape = 'f32[176,128]{1,0:T(8,128)}', space=vmem, size = 0x16000, scoped, tag = 'scratch operand']
  %s0 = inlined_call_operand.hbm [shape: f32[2,2,208,128], index: 0, kind: input, shape index: {}]
  %s1 = inlined_call_operand.hbm [shape: f32[3,384,128], index: 1, kind: input, shape index: {}]
  %s2 = inlined_call_operand.hbm [shape: f32[3,384,128], index: 2, kind: input, shape index: {}]
  %s3 = inlined_call_operand.vmem [shape: f32[1,128], index: 3, kind: input, shape index: {}]
  %s4 = inlined_call_operand.vmem [shape: f32[1,128], index: 4, kind: input, shape index: {}]
  %s5 = inlined_call_operand.vmem [shape: f32[2,160,1], index: 5, kind: input, shape index: {}]
  %s6 = inlined_call_operand.hbm [shape: f32[2,256,128], index: 6, kind: output, shape index: {}]
  %s7 = sld [smem:[#allocation0]]
  $region77: #{tpu_custom_call.1} parent=0
    _
  %s9 = ssub.s32 1, %s7
  %s10 = scalar_select 0, %s9, %s7
  $region1: #{tpu_custom_call.1} parent=0
    #allocation3 [shape = 'u8[212992]{0}', space=vmem, size = 0x34000, scoped, tag = 'input window, operand 0']
    #allocation4 [shape = 's32[2]{0}', space=sflag, size = 0x8, scoped, tag = 'scoped memory for tpu_custom_call.1']
    #allocation5 [shape = 's32[2]{0}', space=sflag, size = 0x8, scoped, tag = 'scoped memory for tpu_custom_call.1']
    #allocation6 [shape = 'u8[589824]{0}', space=vmem, size = 0x90000, scoped, tag = 'input window, operand 1, single buffered']
    #allocation7 [shape = 's32[1]{0}', space=sflag, size = 0x4, scoped, tag = 'scoped memory for tpu_custom_call.1']
    #allocation8 [shape = 'u8[589824]{0}', space=vmem, size = 0x90000, scoped, tag = 'input window, operand 2, single buffered']
    #allocation9 [shape = 'u8[131072]{0}', space=vmem, size = 0x20000, scoped, tag = 'output window, operand 0']
    %11 = vsyncpa [#allocation4], 0
    %s12 = scalar_lea.sflag [#allocation4], 1
    %13 = vsyncpa %s12, 0
    %14 = vsyncpa [#allocation7], 0
    %15 = vsyncpa [#allocation5], 0
    %s16 = scalar_lea.sflag [#allocation5], 1
    %17 = vsyncpa %s16, 0
    loop: start=0, step=1, limit=6
    $region2: #{tpu_custom_call.1} parent=1 // loop_pre_header
      _
    $region3: #{tpu_custom_call.1} parent=1 // loop_header
      %s19 = sphi 0, %s23
      %p20 = scmp.ge.s32.totalorder %s19, 6
      %s26 = sphi 0, %s38
      %s27 = sphi 0, %s34
      %s28 = sphi 0, %s26
      %s29 = sphi 0, %s27
      %s30 = sphi 0, %s28
      %s31 = sphi 0, %s29
      %s43 = sphi 0, %s45
      %s46 = sphi 0, %s43
      %s47 = sphi 0, %s46
      %s63 = sphi 0, %s47
      %s67 = sphi 0, %s67
      %s69 = sphi 0, %s67
      %s70 = sphi 0, %s69
      %s84 = sphi 0, %s70
      %s88 = sphi 0, %s88
      %s90 = sphi 0, %s88
      %s91 = sphi 0, %s90
      %s105 = sphi 0, %s91
      %s109 = sphi 0, %s109
      %s111 = sphi 0, %s109
      %s112 = sphi 0, %s111
      %s126 = sphi 0, %s112
      %s130 = sphi 0, %s130
      %s132 = sphi 0, %s130
      %s133 = sphi 0, %s132
      %s147 = sphi 0, %s133
      %s151 = sphi 0, %s151
      %s153 = sphi 0, %s151
      %s154 = sphi 0, %s153
      %s168 = sphi 0, %s154
      %s176 = sphi 0, %s178
      %s179 = sphi 0, %s176
      %s180 = sphi 0, %s179
      %s196 = sphi 0, %s180
    $region4: #{tpu_custom_call.1} parent=1 // loop_header_branch
      %22 = sbr.rel (%p20) target = $region8
    $region5: #{tpu_custom_call.1} parent=1 // loop_body
      %s24 = ssub.s32 %s19, 1
      %s25 = ssub.s32 %s19, 2
      %s32 = sadd.s32 1, %s27
      %p33 = scmp.ge.s32.totalorder %s32, 2
      %s34 = scalar_select %p33, 0, %s32
      %s35 = sadd.s32 1, %s26
      %s36 = scalar_select %p33, %s35, %s26
      %p37 = scmp.ge.s32.totalorder %s36, 2
      %s38 = scalar_select %p37, 0, %s36
      %s39 = ssub.s32 %s26, %s38
      %s40 = ssub.s32 %s27, %s34
      %s41 = sor.u32 %s39, %s40
      %p42 = scmp.eq.s32.totalorder %s41, 0
      %s44 = sadd.s32 %s43, 1
      %s45 = scalar_select %p42, %s43, %s44
      %p48 = pneg %p42
      %p49 = scmp.eq.s32.totalorder %s19, 3
      %p50 = por %p48, %p49
      %p51 = scmp.ne.s32.totalorder %s43, %s46
      %p52 = scmp.eq.s32.totalorder %s19, 0
      %p53 = por %p51, %p52
      %p54 = scmp.ne.s32.totalorder %s43, %s46
      %p55 = scmp.eq.s32.totalorder %s24, 3
      %p56 = por %p54, %p55
      %p57 = scmp.ne.s32.totalorder %s46, %s47
      %p58 = scmp.eq.s32.totalorder %s24, 0
      %p59 = por %p57, %p58
      %p60 = scmp.ne.s32.totalorder %s46, %s47
      %p61 = scmp.eq.s32.totalorder %s25, 3
      %p62 = por %p60, %p61
      %p64 = scmp.ne.s32.totalorder %s47, %s63
      %p65 = scmp.eq.s32.totalorder %s25, 0
      %p66 = por %p64, %p65
      %s68 = sadd.s32 %s67, 1
      %p71 = scmp.eq.s32.totalorder %s19, 3
      %p72 = scmp.ne.s32.totalorder %s67, %s69
      %p73 = scmp.eq.s32.totalorder %s19, 0
      %p74 = por %p72, %p73
      %p75 = scmp.ne.s32.totalorder %s67, %s69
      %p76 = scmp.eq.s32.totalorder %s24, 3
      %p77 = por %p75, %p76
      %p78 = scmp.ne.s32.totalorder %s69, %s70
      %p79 = scmp.eq.s32.totalorder %s24, 0
      %p80 = por %p78, %p79
      %p81 = scmp.ne.s32.totalorder %s69, %s70
      %p82 = scmp.eq.s32.totalorder %s25, 3
      %p83 = por %p81, %p82
      %p85 = scmp.ne.s32.totalorder %s70, %s84
      %p86 = scmp.eq.s32.totalorder %s25, 0
      %p87 = por %p85, %p86
      %s89 = sadd.s32 %s88, 1
      %p92 = scmp.eq.s32.totalorder %s19, 3
      %p93 = scmp.ne.s32.totalorder %s88, %s90
      %p94 = scmp.eq.s32.totalorder %s19, 0
      %p95 = por %p93, %p94
      %p96 = scmp.ne.s32.totalorder %s88, %s90
      %p97 = scmp.eq.s32.totalorder %s24, 3
      %p98 = por %p96, %p97
      %p99 = scmp.ne.s32.totalorder %s90, %s91
      %p100 = scmp.eq.s32.totalorder %s24, 0
      %p101 = por %p99, %p100
      %p102 = scmp.ne.s32.totalorder %s90, %s91
      %p103 = scmp.eq.s32.totalorder %s25, 3
      %p104 = por %p102, %p103
      %p106 = scmp.ne.s32.totalorder %s91, %s105
      %p107 = scmp.eq.s32.totalorder %s25, 0
      %p108 = por %p106, %p107
      %s110 = sadd.s32 %s109, 1
      %p113 = scmp.eq.s32.totalorder %s19, 3
      %p114 = scmp.ne.s32.totalorder %s109, %s111
      %p115 = scmp.eq.s32.totalorder %s19, 0
      %p116 = por %p114, %p115
      %p117 = scmp.ne.s32.totalorder %s109, %s111
      %p118 = scmp.eq.s32.totalorder %s24, 3
      %p119 = por %p117, %p118
      %p120 = scmp.ne.s32.totalorder %s111, %s112
      %p121 = scmp.eq.s32.totalorder %s24, 0
      %p122 = por %p120, %p121
      %p123 = scmp.ne.s32.totalorder %s111, %s112
      %p124 = scmp.eq.s32.totalorder %s25, 3
      %p125 = por %p123, %p124
      %p127 = scmp.ne.s32.totalorder %s112, %s126
      %p128 = scmp.eq.s32.totalorder %s25, 0
      %p129 = por %p127, %p128
      %s131 = sadd.s32 %s130, 1
      %p134 = scmp.eq.s32.totalorder %s19, 3
      %p135 = scmp.ne.s32.totalorder %s130, %s132
      %p136 = scmp.eq.s32.totalorder %s19, 0
      %p137 = por %p135, %p136
      %p138 = scmp.ne.s32.totalorder %s130, %s132
      %p139 = scmp.eq.s32.totalorder %s24, 3
      %p140 = por %p138, %p139
      %p141 = scmp.ne.s32.totalorder %s132, %s133
      %p142 = scmp.eq.s32.totalorder %s24, 0
      %p143 = por %p141, %p142
      %p144 = scmp.ne.s32.totalorder %s132, %s133
      %p145 = scmp.eq.s32.totalorder %s25, 3
      %p146 = por %p144, %p145
      %p148 = scmp.ne.s32.totalorder %s133, %s147
      %p149 = scmp.eq.s32.totalorder %s25, 0
      %p150 = por %p148, %p149
      %s152 = sadd.s32 %s151, 1
      %p155 = scmp.eq.s32.totalorder %s19, 3
      %p156 = scmp.ne.s32.totalorder %s151, %s153
      %p157 = scmp.eq.s32.totalorder %s19, 0
      %p158 = por %p156, %p157
      %p159 = scmp.ne.s32.totalorder %s151, %s153
      %p160 = scmp.eq.s32.totalorder %s24, 3
      %p161 = por %p159, %p160
      %p162 = scmp.ne.s32.totalorder %s153, %s154
      %p163 = scmp.eq.s32.totalorder %s24, 0
      %p164 = por %p162, %p163
      %p165 = scmp.ne.s32.totalorder %s153, %s154
      %p166 = scmp.eq.s32.totalorder %s25, 3
      %p167 = por %p165, %p166
      %p169 = scmp.ne.s32.totalorder %s154, %s168
      %p170 = scmp.eq.s32.totalorder %s25, 0
      %p171 = por %p169, %p170
      %s172 = ssub.s32 %s26, %s38
      %s173 = ssub.s32 %s27, %s34
      %s174 = sor.u32 %s172, %s173
      %p175 = scmp.eq.s32.totalorder %s174, 0
      %s177 = sadd.s32 %s176, 1
      %s178 = scalar_select %p175, %s176, %s177
      %p181 = pneg %p175
      %p182 = scmp.eq.s32.totalorder %s19, 3
      %p183 = por %p181, %p182
      %p184 = scmp.ne.s32.totalorder %s176, %s179
      %p185 = scmp.eq.s32.totalorder %s19, 0
      %p186 = por %p184, %p185
      %p187 = scmp.ne.s32.totalorder %s176, %s179
      %p188 = scmp.eq.s32.totalorder %s24, 3
      %p189 = por %p187, %p188
      %p190 = scmp.ne.s32.totalorder %s179, %s180
      %p191 = scmp.eq.s32.totalorder %s24, 0
      %p192 = por %p190, %p191
      %p193 = scmp.ne.s32.totalorder %s179, %s180
      %p194 = scmp.eq.s32.totalorder %s25, 3
      %p195 = por %p193, %p194
      %p197 = scmp.ne.s32.totalorder %s180, %s196
      %p198 = scmp.eq.s32.totalorder %s25, 0
      %p199 = por %p197, %p198
      %p200 = scmp.le.s32.totalorder 1, %s19
      %p201 = scmp.lt.s32.totalorder %s19, 5
      %p202 = pnand %p200, %p201
      %p203 = pneg %p202
      // Predicated region
      $region9: #{tpu_custom_call.1} parent=5 // pred_check
        _
      $region10: #{tpu_custom_call.1} parent=5 // pred_check_branch
        %205 = sbr.rel (%p202) target = $region12
      $region11: #{tpu_custom_call.1} parent=5 // pred_region
        %s206 = ssub.s32 %s19, 1
        // Predicated region
        $region13: #{tpu_custom_call.1} parent=11 // pred_check
          %p207 = pneg %p80
        $region14: #{tpu_custom_call.1} parent=11 // pred_check_branch
          %209 = sbr.rel (%p207) target = $region16
        $region15: #{tpu_custom_call.1} parent=11 // pred_region
          %211 = vsyncadd [#allocation7], 0
          %s212 = sshll.u32 %s1, 4
          %s213 = int_to_ptr.hbm [resolvable:$true] %s212
          %s214 = sshll.u32 [#allocation6], 4
          %s215 = int_to_ptr.vmem [resolvable:$true] %s214
          %220 = dma.hbm_to_vmem [thread:$0]  %s213, 18432, %s215, [#allocation7], 128, 128, 8
        $region16: #{tpu_custom_call.1} parent=11 // pred_fallthru
          _
        // Predicated region
        $region17: #{tpu_custom_call.1} parent=11 // pred_check
          %p221 = pneg %p101
        $region18: #{tpu_custom_call.1} parent=11 // pred_check_branch
          %223 = sbr.rel (%p221) target = $region20
        $region19: #{tpu_custom_call.1} parent=11 // pred_region
          %225 = vsyncadd [#allocation7], 0
          %s226 = sshll.u32 %s2, 4
          %s227 = int_to_ptr.hbm [resolvable:$true] %s226
          %s228 = sshll.u32 [#allocation8], 4
          %s229 = int_to_ptr.vmem [resolvable:$true] %s228
          %234 = dma.hbm_to_vmem [thread:$0]  %s227, 18432, %s229, [#allocation7], 128, 128, 8
        $region20: #{tpu_custom_call.1} parent=11 // pred_fallthru
          _
        // Predicated region
        $region21: #{tpu_custom_call.1} parent=11 // pred_check
          %p235 = pneg %p122
        $region22: #{tpu_custom_call.1} parent=11 // pred_check_branch
          %237 = sbr.rel (%p235) target = $region24
        $region23: #{tpu_custom_call.1} parent=11 // pred_region
          _
        $region24: #{tpu_custom_call.1} parent=11 // pred_fallthru
          _
        // Predicated region
        $region25: #{tpu_custom_call.1} parent=11 // pred_check
          %p238 = pneg %p143
        $region26: #{tpu_custom_call.1} parent=11 // pred_check_branch
          %240 = sbr.rel (%p238) target = $region28
        $region27: #{tpu_custom_call.1} parent=11 // pred_region
          _
        $region28: #{tpu_custom_call.1} parent=11 // pred_fallthru
          _
        // Predicated region
        $region29: #{tpu_custom_call.1} parent=11 // pred_check
          %p241 = pneg %p164
        $region30: #{tpu_custom_call.1} parent=11 // pred_check_branch
          %243 = sbr.rel (%p241) target = $region32
        $region31: #{tpu_custom_call.1} parent=11 // pred_region
          _
        $region32: #{tpu_custom_call.1} parent=11 // pred_fallthru
          _
      $region12: #{tpu_custom_call.1} parent=5 // pred_fallthru
        _
      %p244 = scmp.lt.s32.totalorder %s19, 4
      // Predicated region
      $region33: #{tpu_custom_call.1} parent=5 // pred_check
        %p245 = pneg %p244
      $region34: #{tpu_custom_call.1} parent=5 // pred_check_branch
        %247 = sbr.rel (%p245) target = $region36
      $region35: #{tpu_custom_call.1} parent=5 // pred_region
        // Predicated region
        $region37: #{tpu_custom_call.1} parent=35 // pred_check
          %p248 = pneg %p53
        $region38: #{tpu_custom_call.1} parent=35 // pred_check_branch
          %250 = sbr.rel (%p248) target = $region40
        $region39: #{tpu_custom_call.1} parent=35 // pred_region
          %s251 = sand.u32 %s43, 1
          %s252 = scalar_lea.sflag [#allocation4], %s251
          %s253 = sand.u32 %s43, 1
          %s254 = smul.addr %s253, 208
          %s255 = scalar_lea.vmem [#allocation3], %s254
          %257 = vsyncadd %s252, 0
          %s258 = smul.addr %s27, 26
          %s259 = smul.addr %s26, 52
          %s260 = sadd.s32 %s258, %s259
          %s261 = smul.addr %s260, 8
          %s262 = scalar_lea.hbm %s0, %s261
          %s263 = sshll.u32 %s262, 4
          %s264 = int_to_ptr.hbm [resolvable:$true] %s263
          %s265 = sshll.u32 %s255, 4
          %s266 = int_to_ptr.vmem [resolvable:$true] %s265
          %271 = dma.hbm_to_vmem [thread:$0]  %s264, 3328, %s266, %s252, 128, 128, 8
        $region40: #{tpu_custom_call.1} parent=35 // pred_fallthru
          _
      $region36: #{tpu_custom_call.1} parent=5 // pred_fallthru
        _
      %p272 = scmp.le.s32.totalorder 1, %s19
      %p273 = scmp.lt.s32.totalorder %s19, 5
      %p274 = pnand %p272, %p273
      %p275 = pneg %p274
      // Predicated region
      $region41: #{tpu_custom_call.1} parent=5 // pred_check
        _
      $region42: #{tpu_custom_call.1} parent=5 // pred_check_branch
        %277 = sbr.rel (%p274) target = $region44
      $region43: #{tpu_custom_call.1} parent=5 // pred_region
        %s278 = ssub.s32 %s19, 1
        %s279 = sand.u32 %s46, 1
        %s280 = scalar_lea.sflag [#allocation4], %s279
        %s281 = sand.u32 %s46, 1
        %s282 = smul.addr %s281, 208
        %s283 = scalar_lea.vmem [#allocation3], %s282
        // Predicated region
        $region45: #{tpu_custom_call.1} parent=43 // pred_check
          %p284 = pneg %p59
        $region46: #{tpu_custom_call.1} parent=43 // pred_check_branch
          %286 = sbr.rel (%p284) target = $region48
        $region47: #{tpu_custom_call.1} parent=43 // pred_region
          %288 = dma.done %s280, 3328
        $region48: #{tpu_custom_call.1} parent=43 // pred_fallthru
          _
        // Predicated region
        $region49: #{tpu_custom_call.1} parent=43 // pred_check
          %p289 = pneg %p80
        $region50: #{tpu_custom_call.1} parent=43 // pred_check_branch
          %291 = sbr.rel (%p289) target = $region52
        $region51: #{tpu_custom_call.1} parent=43 // pred_region
          %293 = dma.done [#allocation7], 18432
        $region52: #{tpu_custom_call.1} parent=43 // pred_fallthru
          _
        // Predicated region
        $region53: #{tpu_custom_call.1} parent=43 // pred_check
          %p294 = pneg %p101
        $region54: #{tpu_custom_call.1} parent=43 // pred_check_branch
          %296 = sbr.rel (%p294) target = $region56
        $region55: #{tpu_custom_call.1} parent=43 // pred_region
          %298 = dma.done [#allocation7], 18432
        $region56: #{tpu_custom_call.1} parent=43 // pred_fallthru
          _
        %s299 = sand.u32 %s46, 1
        %s300 = scalar_lea.sflag [#allocation4], %s299
        %s301 = sand.u32 %s46, 1
        %s302 = smul.addr %s301, 208
        %s303 = scalar_lea.vmem [#allocation3], %s302
        %p304 = pneg %p59
        %p305 = pneg %p56
        %p306 = pneg %p80
        %p307 = pneg %p77
        %p308 = pneg %p101
        %p309 = pneg %p98
        %p310 = pneg %p122
        %p311 = pneg %p119
        %p312 = pneg %p143
        %p313 = pneg %p140
        %p314 = pneg %p164
        %p315 = pneg %p161
        %p316 = pneg %p192
        %p317 = pneg %p189
        %s318 = sand.u32 %s179, 1
        %s319 = scalar_lea.sflag [#allocation5], %s318
        %s320 = sand.u32 %s179, 1
        %s321 = smul.addr %s320, 128
        %s322 = scalar_lea.vmem [#allocation9], %s321
        %s323 = smul.u32 16, %s29
        %v324 = vld [vmem:[%s283 + $0x7] sm:$0xff]
        %v325 = vld [vmem:[%s283 + $0xf] sm:$0xff]
        %v326 = vld [vmem:[%s283 + $0x17] sm:$0xff]
        %v327 = vld [vmem:[%s283 + $0x1f] sm:$0xff]
        %v328 = vld [vmem:[%s283 + $0x27] sm:$0xff]
        %v329 = vld [vmem:[%s283 + $0x2f] sm:$0xff]
        %v330 = vld [vmem:[%s283 + $0x37] sm:$0xff]
        %v331 = vld [vmem:[%s283 + $0x3f] sm:$0xff]
        %v332 = vld [vmem:[%s283 + $0x47] sm:$0xff]
        %v333 = vld [vmem:[%s283 + $0x4f] sm:$0xff]
        %v334 = vld [vmem:[%s283 + $0x57] sm:$0xff]
        %v335 = vld [vmem:[%s283 + $0x5f] sm:$0xff]
        %v336 = vld [vmem:[%s283 + $0x67] sm:$0xff]
        %v337 = vld [vmem:[%s283 + $0x6f] sm:$0xff]
        %v338 = vld [vmem:[%s283 + $0x77] sm:$0xff]
        %v339 = vld [vmem:[%s283 + $0x7f] sm:$0xff]
        %v340 = vld [vmem:[%s283 + $0x87] sm:$0xff]
        %v341 = vld [vmem:[%s283 + $0x8f] sm:$0xff]
        %v342 = vld [vmem:[%s283 + $0x97] sm:$0xff]
        %v343 = vld [vmem:[%s283 + $0x9f] sm:$0xff]
        %v344 = vld [vmem:[%s283 + $0xa7] sm:$0xff]
        %v345 = vld [vmem:[%s283 + $0xaf] sm:$0xff]
        %v346 = vld [vmem:[%s283 + $0xb7] sm:$0xff]
        %v347 = vld [vmem:[%s283 + $0xbf] sm:$0xff]
        %v348 = vld [vmem:[#allocation6] sm:$0xff]
        %v349 = vld [vmem:[#allocation6 + $0x8] sm:$0xff]
        %v350 = vld [vmem:[#allocation6 + $0x10] sm:$0xff]
        %v351 = vld [vmem:[#allocation6 + $0x18] sm:$0xff]
        %v352 = vld [vmem:[#allocation6 + $0x20] sm:$0xff]
        %v353 = vld [vmem:[#allocation6 + $0x28] sm:$0xff]
        %v354 = vld [vmem:[#allocation6 + $0x30] sm:$0xff]
        %v355 = vld [vmem:[#allocation6 + $0x38] sm:$0xff]
        %v356 = vld [vmem:[#allocation6 + $0x40] sm:$0xff]
        %v357 = vld [vmem:[#allocation6 + $0x48] sm:$0xff]
        %v358 = vld [vmem:[#allocation6 + $0x50] sm:$0xff]
        %v359 = vld [vmem:[#allocation6 + $0x58] sm:$0xff]
        %v360 = vld [vmem:[#allocation6 + $0x60] sm:$0xff]
        %v361 = vld [vmem:[#allocation6 + $0x68] sm:$0xff]
        %v362 = vld [vmem:[#allocation6 + $0x70] sm:$0xff]
        %v363 = vld [vmem:[#allocation6 + $0x78] sm:$0xff]
        %v364 = vld [vmem:[#allocation6 + $0x80] sm:$0xff]
        %v365 = vld [vmem:[#allocation6 + $0x88] sm:$0xff]
        %v366 = vld [vmem:[#allocation6 + $0x90] sm:$0xff]
        %v367 = vld [vmem:[#allocation6 + $0x98] sm:$0xff]
        %v368 = vld [vmem:[#allocation6 + $0xa0] sm:$0xff]
        %v369 = vld [vmem:[#allocation6 + $0xa8] sm:$0xff]
        %v370 = vld [vmem:[#allocation6 + $0xb0] sm:$0xff]
        %v371 = vld [vmem:[#allocation6 + $0xb8] sm:$0xff]
        %v372 = vld [vmem:[#allocation6 + $0xc0] sm:$0xff]
        %v373 = vld [vmem:[#allocation6 + $0xc8] sm:$0xff]
        %v374 = vld [vmem:[#allocation6 + $0xd0] sm:$0xff]
        %v375 = vld [vmem:[#allocation6 + $0xd8] sm:$0xff]
        %v376 = vld [vmem:[#allocation6 + $0xe0] sm:$0xff]
        %v377 = vld [vmem:[#allocation6 + $0xe8] sm:$0xff]
        %v378 = vld [vmem:[#allocation6 + $0xf0] sm:$0xff]
        %v379 = vld [vmem:[#allocation6 + $0xf8] sm:$0xff]
        %v380 = vld [vmem:[#allocation6 + $0x100] sm:$0xff]
        %v381 = vld [vmem:[#allocation6 + $0x108] sm:$0xff]
        %v382 = vld [vmem:[#allocation6 + $0x110] sm:$0xff]
        %v383 = vld [vmem:[#allocation6 + $0x118] sm:$0xff]
        %v384 = vld [vmem:[#allocation6 + $0x120] sm:$0xff]
        %v385 = vld [vmem:[#allocation6 + $0x128] sm:$0xff]
        %v386 = vld [vmem:[#allocation6 + $0x130] sm:$0xff]
        %v387 = vld [vmem:[#allocation6 + $0x138] sm:$0xff]
        %v388 = vld [vmem:[#allocation6 + $0x140] sm:$0xff]
        %v389 = vld [vmem:[#allocation6 + $0x148] sm:$0xff]
        %v390 = vld [vmem:[#allocation6 + $0x150] sm:$0xff]
        %v391 = vld [vmem:[#allocation6 + $0x158] sm:$0xff]
        %v392 = vld [vmem:[#allocation6 + $0x160] sm:$0xff]
        %v393 = vld [vmem:[#allocation6 + $0x168] sm:$0xff]
        %v394 = vld [vmem:[#allocation6 + $0x170] sm:$0xff]
        %v395 = vld [vmem:[#allocation6 + $0x178] sm:$0xff]
        %396 = vmatpush.msra.mxu0 %v363
        %397 = vmatpush.msra.mxu0 %v362
        %398 = vmatpush.msra.mxu0 %v361
        %399 = vmatpush.msra.mxu0 %v360
        %400 = vmatpush.msra.mxu0 %v359
        %401 = vmatpush.msra.mxu0 %v358
        %402 = vmatpush.msra.mxu0 %v357
        %403 = vmatpush.msra.mxu0 %v356
        %404 = vmatpush.msra.mxu0 %v355
        %405 = vmatpush.msra.mxu0 %v354
        %406 = vmatpush.msra.mxu0 %v353
        %407 = vmatpush.msra.mxu0 %v352
        %408 = vmatpush.msra.mxu0 %v351
        %409 = vmatpush.msra.mxu0 %v350
        %410 = vmatpush.msra.mxu0 %v349
        %411 = vmatpush.msra.mxu0 %v348
        %412 = vmatmul.f32.gmra.mxu0 %v324
        %v413 = vpop.f32.mrf.mxu0
        %v414 = vadd.f32 0.0, %v413
        %415 = vmatmul.f32.gmra.mxu0 %v325
        %v416 = vpop.f32.mrf.mxu0
        %v417 = vadd.f32 0.0, %v416
        %418 = vmatmul.f32.gmra.mxu0 %v326
        %v419 = vpop.f32.mrf.mxu0
        %v420 = vadd.f32 0.0, %v419
        %421 = vmatmul.f32.gmra.mxu0 %v327
        %v422 = vpop.f32.mrf.mxu0
        %v423 = vadd.f32 0.0, %v422
        %424 = vmatmul.f32.gmra.mxu0 %v328
        %v425 = vpop.f32.mrf.mxu0
        %v426 = vadd.f32 0.0, %v425
        %427 = vmatmul.f32.gmra.mxu0 %v329
        %v428 = vpop.f32.mrf.mxu0
        %v429 = vadd.f32 0.0, %v428
        %430 = vmatmul.f32.gmra.mxu0 %v330
        %v431 = vpop.f32.mrf.mxu0
        %v432 = vadd.f32 0.0, %v431
        %433 = vmatmul.f32.gmra.mxu0 %v331
        %v434 = vpop.f32.mrf.mxu0
        %v435 = vadd.f32 0.0, %v434
        %436 = vmatmul.f32.gmra.mxu0 %v332
        %v437 = vpop.f32.mrf.mxu0
        %v438 = vadd.f32 0.0, %v437
        %439 = vmatmul.f32.gmra.mxu0 %v333
        %v440 = vpop.f32.mrf.mxu0
        %v441 = vadd.f32 0.0, %v440
        %442 = vmatmul.f32.gmra.mxu0 %v334
        %v443 = vpop.f32.mrf.mxu0
        %v444 = vadd.f32 0.0, %v443
        %445 = vmatmul.f32.gmra.mxu0 %v335
        %v446 = vpop.f32.mrf.mxu0
        %v447 = vadd.f32 0.0, %v446
        %448 = vmatmul.f32.gmra.mxu0 %v336
        %v449 = vpop.f32.mrf.mxu0
        %v450 = vadd.f32 0.0, %v449
        %451 = vmatmul.f32.gmra.mxu0 %v337
        %v452 = vpop.f32.mrf.mxu0
        %v453 = vadd.f32 0.0, %v452
        %454 = vmatmul.f32.gmra.mxu0 %v338
        %v455 = vpop.f32.mrf.mxu0
        %v456 = vadd.f32 0.0, %v455
        %457 = vmatmul.f32.gmra.mxu0 %v339
        %v458 = vpop.f32.mrf.mxu0
        %v459 = vadd.f32 0.0, %v458
        %460 = vmatmul.f32.gmra.mxu0 %v340
        %v461 = vpop.f32.mrf.mxu0
        %v462 = vadd.f32 0.0, %v461
        %463 = vmatmul.f32.gmra.mxu0 %v341
        %v464 = vpop.f32.mrf.mxu0
        %v465 = vadd.f32 0.0, %v464
        %466 = vmatmul.f32.gmra.mxu0 %v342
        %v467 = vpop.f32.mrf.mxu0
        %v468 = vadd.f32 0.0, %v467
        %469 = vmatmul.f32.gmra.mxu0 %v343
        %v470 = vpop.f32.mrf.mxu0
        %v471 = vadd.f32 0.0, %v470
        %472 = vdwg.mxu0
        %473 = vmatpush.msra.mxu0 %v379
        %474 = vmatpush.msra.mxu0 %v378
        %475 = vmatpush.msra.mxu0 %v377
        %476 = vmatpush.msra.mxu0 %v376
        %477 = vmatpush.msra.mxu0 %v375
        %478 = vmatpush.msra.mxu0 %v374
        %479 = vmatpush.msra.mxu0 %v373
        %480 = vmatpush.msra.mxu0 %v372
        %481 = vmatpush.msra.mxu0 %v371
        %482 = vmatpush.msra.mxu0 %v370
        %483 = vmatpush.msra.mxu0 %v369
        %484 = vmatpush.msra.mxu0 %v368
        %485 = vmatpush.msra.mxu0 %v367
        %486 = vmatpush.msra.mxu0 %v366
        %487 = vmatpush.msra.mxu0 %v365
        %488 = vmatpush.msra.mxu0 %v364
        %489 = vmatmul.f32.gmra.mxu0 %v326
        %v490 = vpop.f32.mrf.mxu0
        %v491 = vadd.f32 %v414, %v490
        %492 = vmatmul.f32.gmra.mxu0 %v327
        %v493 = vpop.f32.mrf.mxu0
        %v494 = vadd.f32 %v417, %v493
        %495 = vmatmul.f32.gmra.mxu0 %v328
        %v496 = vpop.f32.mrf.mxu0
        %v497 = vadd.f32 %v420, %v496
        %498 = vmatmul.f32.gmra.mxu0 %v329
        %v499 = vpop.f32.mrf.mxu0
        %v500 = vadd.f32 %v423, %v499
        %501 = vmatmul.f32.gmra.mxu0 %v330
        %v502 = vpop.f32.mrf.mxu0
        %v503 = vadd.f32 %v426, %v502
        %504 = vmatmul.f32.gmra.mxu0 %v331
        %v505 = vpop.f32.mrf.mxu0
        %v506 = vadd.f32 %v429, %v505
        %507 = vmatmul.f32.gmra.mxu0 %v332
        %v508 = vpop.f32.mrf.mxu0
        %v509 = vadd.f32 %v432, %v508
        %510 = vmatmul.f32.gmra.mxu0 %v333
        %v511 = vpop.f32.mrf.mxu0
        %v512 = vadd.f32 %v435, %v511
        %513 = vmatmul.f32.gmra.mxu0 %v334
        %v514 = vpop.f32.mrf.mxu0
        %v515 = vadd.f32 %v438, %v514
        %516 = vmatmul.f32.gmra.mxu0 %v335
        %v517 = vpop.f32.mrf.mxu0
        %v518 = vadd.f32 %v441, %v517
        %519 = vmatmul.f32.gmra.mxu0 %v336
        %v520 = vpop.f32.mrf.mxu0
        %v521 = vadd.f32 %v444, %v520
        %522 = vmatmul.f32.gmra.mxu0 %v337
        %v523 = vpop.f32.mrf.mxu0
        %v524 = vadd.f32 %v447, %v523
        %525 = vmatmul.f32.gmra.mxu0 %v338
        %v526 = vpop.f32.mrf.mxu0
        %v527 = vadd.f32 %v450, %v526
        %528 = vmatmul.f32.gmra.mxu0 %v339
        %v529 = vpop.f32.mrf.mxu0
        %v530 = vadd.f32 %v453, %v529
        %531 = vmatmul.f32.gmra.mxu0 %v340
        %v532 = vpop.f32.mrf.mxu0
        %v533 = vadd.f32 %v456, %v532
        %534 = vmatmul.f32.gmra.mxu0 %v341
        %v535 = vpop.f32.mrf.mxu0
        %v536 = vadd.f32 %v459, %v535
        %537 = vmatmul.f32.gmra.mxu0 %v342
        %v538 = vpop.f32.mrf.mxu0
        %v539 = vadd.f32 %v462, %v538
        %540 = vmatmul.f32.gmra.mxu0 %v343
        %v541 = vpop.f32.mrf.mxu0
        %v542 = vadd.f32 %v465, %v541
        %543 = vmatmul.f32.gmra.mxu0 %v344
        %v544 = vpop.f32.mrf.mxu0
        %v545 = vadd.f32 %v468, %v544
        %546 = vmatmul.f32.gmra.mxu0 %v345
        %v547 = vpop.f32.mrf.mxu0
        %v548 = vadd.f32 %v471, %v547
        %549 = vdwg.mxu0
        %550 = vmatpush.msra.mxu0 %v395
        %551 = vmatpush.msra.mxu0 %v394
        %552 = vmatpush.msra.mxu0 %v393
        %553 = vmatpush.msra.mxu0 %v392
        %554 = vmatpush.msra.mxu0 %v391
        %555 = vmatpush.msra.mxu0 %v390
        %556 = vmatpush.msra.mxu0 %v389
        %557 = vmatpush.msra.mxu0 %v388
        %558 = vmatpush.msra.mxu0 %v387
        %559 = vmatpush.msra.mxu0 %v386
        %560 = vmatpush.msra.mxu0 %v385
        %561 = vmatpush.msra.mxu0 %v384
        %562 = vmatpush.msra.mxu0 %v383
        %563 = vmatpush.msra.mxu0 %v382
        %564 = vmatpush.msra.mxu0 %v381
        %565 = vmatpush.msra.mxu0 %v380
        %566 = vmatmul.f32.gmra.mxu0 %v328
        %v567 = vpop.f32.mrf.mxu0
        %v568 = vadd.f32 %v491, %v567
        %569 = vmatmul.f32.gmra.mxu0 %v329
        %v570 = vpop.f32.mrf.mxu0
        %v571 = vadd.f32 %v494, %v570
        %572 = vmatmul.f32.gmra.mxu0 %v330
        %v573 = vpop.f32.mrf.mxu0
        %v574 = vadd.f32 %v497, %v573
        %575 = vmatmul.f32.gmra.mxu0 %v331
        %v576 = vpop.f32.mrf.mxu0
        %v577 = vadd.f32 %v500, %v576
        %578 = vmatmul.f32.gmra.mxu0 %v332
        %v579 = vpop.f32.mrf.mxu0
        %v580 = vadd.f32 %v503, %v579
        %581 = vmatmul.f32.gmra.mxu0 %v333
        %v582 = vpop.f32.mrf.mxu0
        %v583 = vadd.f32 %v506, %v582
        %584 = vmatmul.f32.gmra.mxu0 %v334
        %v585 = vpop.f32.mrf.mxu0
        %v586 = vadd.f32 %v509, %v585
        %587 = vmatmul.f32.gmra.mxu0 %v335
        %v588 = vpop.f32.mrf.mxu0
        %v589 = vadd.f32 %v512, %v588
        %590 = vmatmul.f32.gmra.mxu0 %v336
        %v591 = vpop.f32.mrf.mxu0
        %v592 = vadd.f32 %v515, %v591
        %593 = vmatmul.f32.gmra.mxu0 %v337
        %v594 = vpop.f32.mrf.mxu0
        %v595 = vadd.f32 %v518, %v594
        %596 = vmatmul.f32.gmra.mxu0 %v338
        %v597 = vpop.f32.mrf.mxu0
        %v598 = vadd.f32 %v521, %v597
        %599 = vmatmul.f32.gmra.mxu0 %v339
        %v600 = vpop.f32.mrf.mxu0
        %v601 = vadd.f32 %v524, %v600
        %602 = vmatmul.f32.gmra.mxu0 %v340
        %v603 = vpop.f32.mrf.mxu0
        %v604 = vadd.f32 %v527, %v603
        %605 = vmatmul.f32.gmra.mxu0 %v341
        %v606 = vpop.f32.mrf.mxu0
        %v607 = vadd.f32 %v530, %v606
        %608 = vmatmul.f32.gmra.mxu0 %v342
        %v609 = vpop.f32.mrf.mxu0
        %v610 = vadd.f32 %v533, %v609
        %611 = vmatmul.f32.gmra.mxu0 %v343
        %v612 = vpop.f32.mrf.mxu0
        %v613 = vadd.f32 %v536, %v612
        %614 = vmatmul.f32.gmra.mxu0 %v344
        %v615 = vpop.f32.mrf.mxu0
        %v616 = vadd.f32 %v539, %v615
        %617 = vmatmul.f32.gmra.mxu0 %v345
        %v618 = vpop.f32.mrf.mxu0
        %v619 = vadd.f32 %v542, %v618
        %620 = vmatmul.f32.gmra.mxu0 %v346
        %v621 = vpop.f32.mrf.mxu0
        %v622 = vadd.f32 %v545, %v621
        %623 = vmatmul.f32.gmra.mxu0 %v347
        %v624 = vpop.f32.mrf.mxu0
        %v625 = vadd.f32 %v548, %v624
        %626 = vdwg.mxu0
        %v627 = vld [vmem:[%s5] sm:$0xff]
        %v628 = vld [vmem:[%s5 + $0x8] sm:$0xff]
        %v629 = vld [vmem:[%s5 + $0x10] sm:$0xff]
        %v630 = vld [vmem:[%s5 + $0x18] sm:$0xff]
        %v631 = vld [vmem:[%s5 + $0x20] sm:$0xff]
        %v632 = vld [vmem:[%s5 + $0x28] sm:$0xff]
        %v633 = vld [vmem:[%s5 + $0x30] sm:$0xff]
        %v634 = vld [vmem:[%s5 + $0x38] sm:$0xff]
        %v635 = vld [vmem:[%s5 + $0x40] sm:$0xff]
        %v636 = vld [vmem:[%s5 + $0x48] sm:$0xff]
        %v637 = vld [vmem:[%s5 + $0x50] sm:$0xff]
        %v638 = vld [vmem:[%s5 + $0x58] sm:$0xff]
        %v639 = vld [vmem:[%s5 + $0x60] sm:$0xff]
        %v640 = vld [vmem:[%s5 + $0x68] sm:$0xff]
        %v641 = vld [vmem:[%s5 + $0x70] sm:$0xff]
        %v642 = vld [vmem:[%s5 + $0x78] sm:$0xff]
        %v643 = vld [vmem:[%s5 + $0x80] sm:$0xff]
        %v644 = vld [vmem:[%s5 + $0x88] sm:$0xff]
        %v645 = vld [vmem:[%s5 + $0x90] sm:$0xff]
        %v646 = vld [vmem:[%s5 + $0x98] sm:$0xff]
        %648 = vset.pattern.permute.xlu0 0
        %649 = vperm.xlu0 %648, %v627
        %v650 = vpop.permute.xlu0 %649
        %653 = vset.pattern.permute.xlu0 0
        %654 = vperm.xlu0 %653, %v628
        %v655 = vpop.permute.xlu0 %654
        %658 = vset.pattern.permute.xlu0 0
        %659 = vperm.xlu0 %658, %v629
        %v660 = vpop.permute.xlu0 %659
        %663 = vset.pattern.permute.xlu0 0
        %664 = vperm.xlu0 %663, %v630
        %v665 = vpop.permute.xlu0 %664
        %668 = vset.pattern.permute.xlu0 0
        %669 = vperm.xlu0 %668, %v631
        %v670 = vpop.permute.xlu0 %669
        %673 = vset.pattern.permute.xlu0 0
        %674 = vperm.xlu0 %673, %v632
        %v675 = vpop.permute.xlu0 %674
        %678 = vset.pattern.permute.xlu0 0
        %679 = vperm.xlu0 %678, %v633
        %v680 = vpop.permute.xlu0 %679
        %683 = vset.pattern.permute.xlu0 0
        %684 = vperm.xlu0 %683, %v634
        %v685 = vpop.permute.xlu0 %684
        %688 = vset.pattern.permute.xlu0 0
        %689 = vperm.xlu0 %688, %v635
        %v690 = vpop.permute.xlu0 %689
        %693 = vset.pattern.permute.xlu0 0
        %694 = vperm.xlu0 %693, %v636
        %v695 = vpop.permute.xlu0 %694
        %698 = vset.pattern.permute.xlu0 0
        %699 = vperm.xlu0 %698, %v637
        %v700 = vpop.permute.xlu0 %699
        %703 = vset.pattern.permute.xlu0 0
        %704 = vperm.xlu0 %703, %v638
        %v705 = vpop.permute.xlu0 %704
        %708 = vset.pattern.permute.xlu0 0
        %709 = vperm.xlu0 %708, %v639
        %v710 = vpop.permute.xlu0 %709
        %713 = vset.pattern.permute.xlu0 0
        %714 = vperm.xlu0 %713, %v640
        %v715 = vpop.permute.xlu0 %714
        %718 = vset.pattern.permute.xlu0 0
        %719 = vperm.xlu0 %718, %v641
        %v720 = vpop.permute.xlu0 %719
        %723 = vset.pattern.permute.xlu0 0
        %724 = vperm.xlu0 %723, %v642
        %v725 = vpop.permute.xlu0 %724
        %728 = vset.pattern.permute.xlu0 0
        %729 = vperm.xlu0 %728, %v643
        %v730 = vpop.permute.xlu0 %729
        %733 = vset.pattern.permute.xlu0 0
        %734 = vperm.xlu0 %733, %v644
        %v735 = vpop.permute.xlu0 %734
        %738 = vset.pattern.permute.xlu0 0
        %739 = vperm.xlu0 %738, %v645
        %v740 = vpop.permute.xlu0 %739
        %743 = vset.pattern.permute.xlu0 0
        %744 = vperm.xlu0 %743, %v646
        %v745 = vpop.permute.xlu0 %744
        %v747 = vmul.f32 %v568, %v650
        %v748 = vmul.f32 %v571, %v655
        %v749 = vmul.f32 %v574, %v660
        %v750 = vmul.f32 %v577, %v665
        %v751 = vmul.f32 %v580, %v670
        %v752 = vmul.f32 %v583, %v675
        %v753 = vmul.f32 %v586, %v680
        %v754 = vmul.f32 %v589, %v685
        %v755 = vmul.f32 %v592, %v690
        %v756 = vmul.f32 %v595, %v695
        %v757 = vmul.f32 %v598, %v700
        %v758 = vmul.f32 %v601, %v705
        %v759 = vmul.f32 %v604, %v710
        %v760 = vmul.f32 %v607, %v715
        %v761 = vmul.f32 %v610, %v720
        %v762 = vmul.f32 %v613, %v725
        %v763 = vmul.f32 %v616, %v730
        %v764 = vmul.f32 %v619, %v735
        %v765 = vmul.f32 %v622, %v740
        %v766 = vmul.f32 %v625, %v745
        %v767 = vld [vmem:[%s283 + $0x8] sm:$0xff]
        %v768 = vld [vmem:[%s283 + $0x10] sm:$0xff]
        %v769 = vld [vmem:[%s283 + $0x18] sm:$0xff]
        %v770 = vld [vmem:[%s283 + $0x20] sm:$0xff]
        %v771 = vld [vmem:[%s283 + $0x28] sm:$0xff]
        %v772 = vld [vmem:[%s283 + $0x30] sm:$0xff]
        %v773 = vld [vmem:[%s283 + $0x38] sm:$0xff]
        %v774 = vld [vmem:[%s283 + $0x40] sm:$0xff]
        %v775 = vld [vmem:[%s283 + $0x48] sm:$0xff]
        %v776 = vld [vmem:[%s283 + $0x50] sm:$0xff]
        %v777 = vld [vmem:[%s283 + $0x58] sm:$0xff]
        %v778 = vld [vmem:[%s283 + $0x60] sm:$0xff]
        %v779 = vld [vmem:[%s283 + $0x68] sm:$0xff]
        %v780 = vld [vmem:[%s283 + $0x70] sm:$0xff]
        %v781 = vld [vmem:[%s283 + $0x78] sm:$0xff]
        %v782 = vld [vmem:[%s283 + $0x80] sm:$0xff]
        %v783 = vld [vmem:[%s283 + $0x88] sm:$0xff]
        %v784 = vld [vmem:[%s283 + $0x90] sm:$0xff]
        %v785 = vld [vmem:[%s283 + $0x98] sm:$0xff]
        %v786 = vld [vmem:[%s283 + $0xa0] sm:$0xff]
        %v787 = vld [vmem:[%s283 + $0xa8] sm:$0xff]
        %v788 = vld [vmem:[%s283 + $0xb0] sm:$0xff]
        %v789 = vld [vmem:[%s283 + $0xb8] sm:$0xff]
        %v790 = vld [vmem:[%s283 + $0xc0] sm:$0xff]
        %s791 = scalar_lea.vmem [#allocation6], 384
        %v792 = vld [vmem:[%s791] sm:$0xff]
        %v793 = vld [vmem:[%s791 + $0x8] sm:$0xff]
        %v794 = vld [vmem:[%s791 + $0x10] sm:$0xff]
        %v795 = vld [vmem:[%s791 + $0x18] sm:$0xff]
        %v796 = vld [vmem:[%s791 + $0x20] sm:$0xff]
        %v797 = vld [vmem:[%s791 + $0x28] sm:$0xff]
        %v798 = vld [vmem:[%s791 + $0x30] sm:$0xff]
        %v799 = vld [vmem:[%s791 + $0x38] sm:$0xff]
        %v800 = vld [vmem:[%s791 + $0x40] sm:$0xff]
        %v801 = vld [vmem:[%s791 + $0x48] sm:$0xff]
        %v802 = vld [vmem:[%s791 + $0x50] sm:$0xff]
        %v803 = vld [vmem:[%s791 + $0x58] sm:$0xff]
        %v804 = vld [vmem:[%s791 + $0x60] sm:$0xff]
        %v805 = vld [vmem:[%s791 + $0x68] sm:$0xff]
        %v806 = vld [vmem:[%s791 + $0x70] sm:$0xff]
        %v807 = vld [vmem:[%s791 + $0x78] sm:$0xff]
        %v808 = vld [vmem:[%s791 + $0x80] sm:$0xff]
        %v809 = vld [vmem:[%s791 + $0x88] sm:$0xff]
        %v810 = vld [vmem:[%s791 + $0x90] sm:$0xff]
        %v811 = vld [vmem:[%s791 + $0x98] sm:$0xff]
        %v812 = vld [vmem:[%s791 + $0xa0] sm:$0xff]
        %v813 = vld [vmem:[%s791 + $0xa8] sm:$0xff]
        %v814 = vld [vmem:[%s791 + $0xb0] sm:$0xff]
        %v815 = vld [vmem:[%s791 + $0xb8] sm:$0xff]
        %v816 = vld [vmem:[%s791 + $0xc0] sm:$0xff]
        %v817 = vld [vmem:[%s791 + $0xc8] sm:$0xff]
        %v818 = vld [vmem:[%s791 + $0xd0] sm:$0xff]
        %v819 = vld [vmem:[%s791 + $0xd8] sm:$0xff]
        %v820 = vld [vmem:[%s791 + $0xe0] sm:$0xff]
        %v821 = vld [vmem:[%s791 + $0xe8] sm:$0xff]
        %v822 = vld [vmem:[%s791 + $0xf0] sm:$0xff]
        %v823 = vld [vmem:[%s791 + $0xf8] sm:$0xff]
        %v824 = vld [vmem:[%s791 + $0x100] sm:$0xff]
        %v825 = vld [vmem:[%s791 + $0x108] sm:$0xff]
        %v826 = vld [vmem:[%s791 + $0x110] sm:$0xff]
        %v827 = vld [vmem:[%s791 + $0x118] sm:$0xff]
        %v828 = vld [vmem:[%s791 + $0x120] sm:$0xff]
        %v829 = vld [vmem:[%s791 + $0x128] sm:$0xff]
        %v830 = vld [vmem:[%s791 + $0x130] sm:$0xff]
        %v831 = vld [vmem:[%s791 + $0x138] sm:$0xff]
        %v832 = vld [vmem:[%s791 + $0x140] sm:$0xff]
        %v833 = vld [vmem:[%s791 + $0x148] sm:$0xff]
        %v834 = vld [vmem:[%s791 + $0x150] sm:$0xff]
        %v835 = vld [vmem:[%s791 + $0x158] sm:$0xff]
        %v836 = vld [vmem:[%s791 + $0x160] sm:$0xff]
        %v837 = vld [vmem:[%s791 + $0x168] sm:$0xff]
        %v838 = vld [vmem:[%s791 + $0x170] sm:$0xff]
        %v839 = vld [vmem:[%s791 + $0x178] sm:$0xff]
        %840 = vmatpush.msra.mxu0 %v807
        %841 = vmatpush.msra.mxu0 %v806
        %842 = vmatpush.msra.mxu0 %v805
        %843 = vmatpush.msra.mxu0 %v804
        %844 = vmatpush.msra.mxu0 %v803
        %845 = vmatpush.msra.mxu0 %v802
        %846 = vmatpush.msra.mxu0 %v801
        %847 = vmatpush.msra.mxu0 %v800
        %848 = vmatpush.msra.mxu0 %v799
        %849 = vmatpush.msra.mxu0 %v798
        %850 = vmatpush.msra.mxu0 %v797
        %851 = vmatpush.msra.mxu0 %v796
        %852 = vmatpush.msra.mxu0 %v795
        %853 = vmatpush.msra.mxu0 %v794
        %854 = vmatpush.msra.mxu0 %v793
        %855 = vmatpush.msra.mxu0 %v792
        %856 = vmatmul.f32.gmra.mxu0 %v767
        %v857 = vpop.f32.mrf.mxu0
        %v858 = vadd.f32 0.0, %v857
        %859 = vmatmul.f32.gmra.mxu0 %v768
        %v860 = vpop.f32.mrf.mxu0
        %v861 = vadd.f32 0.0, %v860
        %862 = vmatmul.f32.gmra.mxu0 %v769
        %v863 = vpop.f32.mrf.mxu0
        %v864 = vadd.f32 0.0, %v863
        %865 = vmatmul.f32.gmra.mxu0 %v770
        %v866 = vpop.f32.mrf.mxu0
        %v867 = vadd.f32 0.0, %v866
        %868 = vmatmul.f32.gmra.mxu0 %v771
        %v869 = vpop.f32.mrf.mxu0
        %v870 = vadd.f32 0.0, %v869
        %871 = vmatmul.f32.gmra.mxu0 %v772
        %v872 = vpop.f32.mrf.mxu0
        %v873 = vadd.f32 0.0, %v872
        %874 = vmatmul.f32.gmra.mxu0 %v773
        %v875 = vpop.f32.mrf.mxu0
        %v876 = vadd.f32 0.0, %v875
        %877 = vmatmul.f32.gmra.mxu0 %v774
        %v878 = vpop.f32.mrf.mxu0
        %v879 = vadd.f32 0.0, %v878
        %880 = vmatmul.f32.gmra.mxu0 %v775
        %v881 = vpop.f32.mrf.mxu0
        %v882 = vadd.f32 0.0, %v881
        %883 = vmatmul.f32.gmra.mxu0 %v776
        %v884 = vpop.f32.mrf.mxu0
        %v885 = vadd.f32 0.0, %v884
        %886 = vmatmul.f32.gmra.mxu0 %v777
        %v887 = vpop.f32.mrf.mxu0
        %v888 = vadd.f32 0.0, %v887
        %889 = vmatmul.f32.gmra.mxu0 %v778
        %v890 = vpop.f32.mrf.mxu0
        %v891 = vadd.f32 0.0, %v890
        %892 = vmatmul.f32.gmra.mxu0 %v779
        %v893 = vpop.f32.mrf.mxu0
        %v894 = vadd.f32 0.0, %v893
        %895 = vmatmul.f32.gmra.mxu0 %v780
        %v896 = vpop.f32.mrf.mxu0
        %v897 = vadd.f32 0.0, %v896
        %898 = vmatmul.f32.gmra.mxu0 %v781
        %v899 = vpop.f32.mrf.mxu0
        %v900 = vadd.f32 0.0, %v899
        %901 = vmatmul.f32.gmra.mxu0 %v782
        %v902 = vpop.f32.mrf.mxu0
        %v903 = vadd.f32 0.0, %v902
        %904 = vmatmul.f32.gmra.mxu0 %v783
        %v905 = vpop.f32.mrf.mxu0
        %v906 = vadd.f32 0.0, %v905
        %907 = vmatmul.f32.gmra.mxu0 %v784
        %v908 = vpop.f32.mrf.mxu0
        %v909 = vadd.f32 0.0, %v908
        %910 = vmatmul.f32.gmra.mxu0 %v785
        %v911 = vpop.f32.mrf.mxu0
        %v912 = vadd.f32 0.0, %v911
        %913 = vmatmul.f32.gmra.mxu0 %v786
        %v914 = vpop.f32.mrf.mxu0
        %v915 = vadd.f32 0.0, %v914
        %916 = vdwg.mxu0
        %917 = vmatpush.msra.mxu0 %v823
        %918 = vmatpush.msra.mxu0 %v822
        %919 = vmatpush.msra.mxu0 %v821
        %920 = vmatpush.msra.mxu0 %v820
        %921 = vmatpush.msra.mxu0 %v819
        %922 = vmatpush.msra.mxu0 %v818
        %923 = vmatpush.msra.mxu0 %v817
        %924 = vmatpush.msra.mxu0 %v816
        %925 = vmatpush.msra.mxu0 %v815
        %926 = vmatpush.msra.mxu0 %v814
        %927 = vmatpush.msra.mxu0 %v813
        %928 = vmatpush.msra.mxu0 %v812
        %929 = vmatpush.msra.mxu0 %v811
        %930 = vmatpush.msra.mxu0 %v810
        %931 = vmatpush.msra.mxu0 %v809
        %932 = vmatpush.msra.mxu0 %v808
        %933 = vmatmul.f32.gmra.mxu0 %v769
        %v934 = vpop.f32.mrf.mxu0
        %v935 = vadd.f32 %v858, %v934
        %936 = vmatmul.f32.gmra.mxu0 %v770
        %v937 = vpop.f32.mrf.mxu0
        %v938 = vadd.f32 %v861, %v937
        %939 = vmatmul.f32.gmra.mxu0 %v771
        %v940 = vpop.f32.mrf.mxu0
        %v941 = vadd.f32 %v864, %v940
        %942 = vmatmul.f32.gmra.mxu0 %v772
        %v943 = vpop.f32.mrf.mxu0
        %v944 = vadd.f32 %v867, %v943
        %945 = vmatmul.f32.gmra.mxu0 %v773
        %v946 = vpop.f32.mrf.mxu0
        %v947 = vadd.f32 %v870, %v946
        %948 = vmatmul.f32.gmra.mxu0 %v774
        %v949 = vpop.f32.mrf.mxu0
        %v950 = vadd.f32 %v873, %v949
        %951 = vmatmul.f32.gmra.mxu0 %v775
        %v952 = vpop.f32.mrf.mxu0
        %v953 = vadd.f32 %v876, %v952
        %954 = vmatmul.f32.gmra.mxu0 %v776
        %v955 = vpop.f32.mrf.mxu0
        %v956 = vadd.f32 %v879, %v955
        %957 = vmatmul.f32.gmra.mxu0 %v777
        %v958 = vpop.f32.mrf.mxu0
        %v959 = vadd.f32 %v882, %v958
        %960 = vmatmul.f32.gmra.mxu0 %v778
        %v961 = vpop.f32.mrf.mxu0
        %v962 = vadd.f32 %v885, %v961
        %963 = vmatmul.f32.gmra.mxu0 %v779
        %v964 = vpop.f32.mrf.mxu0
        %v965 = vadd.f32 %v888, %v964
        %966 = vmatmul.f32.gmra.mxu0 %v780
        %v967 = vpop.f32.mrf.mxu0
        %v968 = vadd.f32 %v891, %v967
        %969 = vmatmul.f32.gmra.mxu0 %v781
        %v970 = vpop.f32.mrf.mxu0
        %v971 = vadd.f32 %v894, %v970
        %972 = vmatmul.f32.gmra.mxu0 %v782
        %v973 = vpop.f32.mrf.mxu0
        %v974 = vadd.f32 %v897, %v973
        %975 = vmatmul.f32.gmra.mxu0 %v783
        %v976 = vpop.f32.mrf.mxu0
        %v977 = vadd.f32 %v900, %v976
        %978 = vmatmul.f32.gmra.mxu0 %v784
        %v979 = vpop.f32.mrf.mxu0
        %v980 = vadd.f32 %v903, %v979
        %981 = vmatmul.f32.gmra.mxu0 %v785
        %v982 = vpop.f32.mrf.mxu0
        %v983 = vadd.f32 %v906, %v982
        %984 = vmatmul.f32.gmra.mxu0 %v786
        %v985 = vpop.f32.mrf.mxu0
        %v986 = vadd.f32 %v909, %v985
        %987 = vmatmul.f32.gmra.mxu0 %v787
        %v988 = vpop.f32.mrf.mxu0
        %v989 = vadd.f32 %v912, %v988
        %990 = vmatmul.f32.gmra.mxu0 %v788
        %v991 = vpop.f32.mrf.mxu0
        %v992 = vadd.f32 %v915, %v991
        %993 = vdwg.mxu0
        %994 = vmatpush.msra.mxu0 %v839
        %995 = vmatpush.msra.mxu0 %v838
        %996 = vmatpush.msra.mxu0 %v837
        %997 = vmatpush.msra.mxu0 %v836
        %998 = vmatpush.msra.mxu0 %v835
        %999 = vmatpush.msra.mxu0 %v834
        %1000 = vmatpush.msra.mxu0 %v833
        %1001 = vmatpush.msra.mxu0 %v832
        %1002 = vmatpush.msra.mxu0 %v831
        %1003 = vmatpush.msra.mxu0 %v830
        %1004 = vmatpush.msra.mxu0 %v829
        %1005 = vmatpush.msra.mxu0 %v828
        %1006 = vmatpush.msra.mxu0 %v827
        %1007 = vmatpush.msra.mxu0 %v826
        %1008 = vmatpush.msra.mxu0 %v825
        %1009 = vmatpush.msra.mxu0 %v824
        %1010 = vmatmul.f32.gmra.mxu0 %v771
        %v1011 = vpop.f32.mrf.mxu0
        %v1012 = vadd.f32 %v935, %v1011
        %1013 = vmatmul.f32.gmra.mxu0 %v772
        %v1014 = vpop.f32.mrf.mxu0
        %v1015 = vadd.f32 %v938, %v1014
        %1016 = vmatmul.f32.gmra.mxu0 %v773
        %v1017 = vpop.f32.mrf.mxu0
        %v1018 = vadd.f32 %v941, %v1017
        %1019 = vmatmul.f32.gmra.mxu0 %v774
        %v1020 = vpop.f32.mrf.mxu0
        %v1021 = vadd.f32 %v944, %v1020
        %1022 = vmatmul.f32.gmra.mxu0 %v775
        %v1023 = vpop.f32.mrf.mxu0
        %v1024 = vadd.f32 %v947, %v1023
        %1025 = vmatmul.f32.gmra.mxu0 %v776
        %v1026 = vpop.f32.mrf.mxu0
        %v1027 = vadd.f32 %v950, %v1026
        %1028 = vmatmul.f32.gmra.mxu0 %v777
        %v1029 = vpop.f32.mrf.mxu0
        %v1030 = vadd.f32 %v953, %v1029
        %1031 = vmatmul.f32.gmra.mxu0 %v778
        %v1032 = vpop.f32.mrf.mxu0
        %v1033 = vadd.f32 %v956, %v1032
        %1034 = vmatmul.f32.gmra.mxu0 %v779
        %v1035 = vpop.f32.mrf.mxu0
        %v1036 = vadd.f32 %v959, %v1035
        %1037 = vmatmul.f32.gmra.mxu0 %v780
        %v1038 = vpop.f32.mrf.mxu0
        %v1039 = vadd.f32 %v962, %v1038
        %1040 = vmatmul.f32.gmra.mxu0 %v781
        %v1041 = vpop.f32.mrf.mxu0
        %v1042 = vadd.f32 %v965, %v1041
        %1043 = vmatmul.f32.gmra.mxu0 %v782
        %v1044 = vpop.f32.mrf.mxu0
        %v1045 = vadd.f32 %v968, %v1044
        %1046 = vmatmul.f32.gmra.mxu0 %v783
        %v1047 = vpop.f32.mrf.mxu0
        %v1048 = vadd.f32 %v971, %v1047
        %1049 = vmatmul.f32.gmra.mxu0 %v784
        %v1050 = vpop.f32.mrf.mxu0
        %v1051 = vadd.f32 %v974, %v1050
        %1052 = vmatmul.f32.gmra.mxu0 %v785
        %v1053 = vpop.f32.mrf.mxu0
        %v1054 = vadd.f32 %v977, %v1053
        %1055 = vmatmul.f32.gmra.mxu0 %v786
        %v1056 = vpop.f32.mrf.mxu0
        %v1057 = vadd.f32 %v980, %v1056
        %1058 = vmatmul.f32.gmra.mxu0 %v787
        %v1059 = vpop.f32.mrf.mxu0
        %v1060 = vadd.f32 %v983, %v1059
        %1061 = vmatmul.f32.gmra.mxu0 %v788
        %v1062 = vpop.f32.mrf.mxu0
        %v1063 = vadd.f32 %v986, %v1062
        %1064 = vmatmul.f32.gmra.mxu0 %v789
        %v1065 = vpop.f32.mrf.mxu0
        %v1066 = vadd.f32 %v989, %v1065
        %1067 = vmatmul.f32.gmra.mxu0 %v790
        %v1068 = vpop.f32.mrf.mxu0
        %v1069 = vadd.f32 %v992, %v1068
        %1070 = vdwg.mxu0
        %v1071 = vadd.f32 %v747, %v1012
        %v1072 = vadd.f32 %v748, %v1015
        %v1073 = vadd.f32 %v749, %v1018
        %v1074 = vadd.f32 %v750, %v1021
        %v1075 = vadd.f32 %v751, %v1024
        %v1076 = vadd.f32 %v752, %v1027
        %v1077 = vadd.f32 %v753, %v1030
        %v1078 = vadd.f32 %v754, %v1033
        %v1079 = vadd.f32 %v755, %v1036
        %v1080 = vadd.f32 %v756, %v1039
        %v1081 = vadd.f32 %v757, %v1042
        %v1082 = vadd.f32 %v758, %v1045
        %v1083 = vadd.f32 %v759, %v1048
        %v1084 = vadd.f32 %v760, %v1051
        %v1085 = vadd.f32 %v761, %v1054
        %v1086 = vadd.f32 %v762, %v1057
        %v1087 = vadd.f32 %v763, %v1060
        %v1088 = vadd.f32 %v764, %v1063
        %v1089 = vadd.f32 %v765, %v1066
        %v1090 = vadd.f32 %v766, %v1069
        %v1091 = vld [vmem:[%s283 + $0x9] sm:$0xff]
        %v1092 = vld [vmem:[%s283 + $0x11] sm:$0xff]
        %v1093 = vld [vmem:[%s283 + $0x19] sm:$0xff]
        %v1094 = vld [vmem:[%s283 + $0x21] sm:$0xff]
        %v1095 = vld [vmem:[%s283 + $0x29] sm:$0xff]
        %v1096 = vld [vmem:[%s283 + $0x31] sm:$0xff]
        %v1097 = vld [vmem:[%s283 + $0x39] sm:$0xff]
        %v1098 = vld [vmem:[%s283 + $0x41] sm:$0xff]
        %v1099 = vld [vmem:[%s283 + $0x49] sm:$0xff]
        %v1100 = vld [vmem:[%s283 + $0x51] sm:$0xff]
        %v1101 = vld [vmem:[%s283 + $0x59] sm:$0xff]
        %v1102 = vld [vmem:[%s283 + $0x61] sm:$0xff]
        %v1103 = vld [vmem:[%s283 + $0x69] sm:$0xff]
        %v1104 = vld [vmem:[%s283 + $0x71] sm:$0xff]
        %v1105 = vld [vmem:[%s283 + $0x79] sm:$0xff]
        %v1106 = vld [vmem:[%s283 + $0x81] sm:$0xff]
        %v1107 = vld [vmem:[%s283 + $0x89] sm:$0xff]
        %v1108 = vld [vmem:[%s283 + $0x91] sm:$0xff]
        %v1109 = vld [vmem:[%s283 + $0x99] sm:$0xff]
        %v1110 = vld [vmem:[%s283 + $0xa1] sm:$0xff]
        %v1111 = vld [vmem:[%s283 + $0xa9] sm:$0xff]
        %v1112 = vld [vmem:[%s283 + $0xb1] sm:$0xff]
        %v1113 = vld [vmem:[%s283 + $0xb9] sm:$0xff]
        %v1114 = vld [vmem:[%s283 + $0xc1] sm:$0xff]
        %s1115 = scalar_lea.vmem [#allocation6], 768
        %v1116 = vld [vmem:[%s1115] sm:$0xff]
        %v1117 = vld [vmem:[%s1115 + $0x8] sm:$0xff]
        %v1118 = vld [vmem:[%s1115 + $0x10] sm:$0xff]
        %v1119 = vld [vmem:[%s1115 + $0x18] sm:$0xff]
        %v1120 = vld [vmem:[%s1115 + $0x20] sm:$0xff]
        %v1121 = vld [vmem:[%s1115 + $0x28] sm:$0xff]
        %v1122 = vld [vmem:[%s1115 + $0x30] sm:$0xff]
        %v1123 = vld [vmem:[%s1115 + $0x38] sm:$0xff]
        %v1124 = vld [vmem:[%s1115 + $0x40] sm:$0xff]
        %v1125 = vld [vmem:[%s1115 + $0x48] sm:$0xff]
        %v1126 = vld [vmem:[%s1115 + $0x50] sm:$0xff]
        %v1127 = vld [vmem:[%s1115 + $0x58] sm:$0xff]
        %v1128 = vld [vmem:[%s1115 + $0x60] sm:$0xff]
        %v1129 = vld [vmem:[%s1115 + $0x68] sm:$0xff]
        %v1130 = vld [vmem:[%s1115 + $0x70] sm:$0xff]
        %v1131 = vld [vmem:[%s1115 + $0x78] sm:$0xff]
        %v1132 = vld [vmem:[%s1115 + $0x80] sm:$0xff]
        %v1133 = vld [vmem:[%s1115 + $0x88] sm:$0xff]
        %v1134 = vld [vmem:[%s1115 + $0x90] sm:$0xff]
        %v1135 = vld [vmem:[%s1115 + $0x98] sm:$0xff]
        %v1136 = vld [vmem:[%s1115 + $0xa0] sm:$0xff]
        %v1137 = vld [vmem:[%s1115 + $0xa8] sm:$0xff]
        %v1138 = vld [vmem:[%s1115 + $0xb0] sm:$0xff]
        %v1139 = vld [vmem:[%s1115 + $0xb8] sm:$0xff]
        %v1140 = vld [vmem:[%s1115 + $0xc0] sm:$0xff]
        %v1141 = vld [vmem:[%s1115 + $0xc8] sm:$0xff]
        %v1142 = vld [vmem:[%s1115 + $0xd0] sm:$0xff]
        %v1143 = vld [vmem:[%s1115 + $0xd8] sm:$0xff]
        %v1144 = vld [vmem:[%s1115 + $0xe0] sm:$0xff]
        %v1145 = vld [vmem:[%s1115 + $0xe8] sm:$0xff]
        %v1146 = vld [vmem:[%s1115 + $0xf0] sm:$0xff]
        %v1147 = vld [vmem:[%s1115 + $0xf8] sm:$0xff]
        %v1148 = vld [vmem:[%s1115 + $0x100] sm:$0xff]
        %v1149 = vld [vmem:[%s1115 + $0x108] sm:$0xff]
        %v1150 = vld [vmem:[%s1115 + $0x110] sm:$0xff]
        %v1151 = vld [vmem:[%s1115 + $0x118] sm:$0xff]
        %v1152 = vld [vmem:[%s1115 + $0x120] sm:$0xff]
        %v1153 = vld [vmem:[%s1115 + $0x128] sm:$0xff]
        %v1154 = vld [vmem:[%s1115 + $0x130] sm:$0xff]
        %v1155 = vld [vmem:[%s1115 + $0x138] sm:$0xff]
        %v1156 = vld [vmem:[%s1115 + $0x140] sm:$0xff]
        %v1157 = vld [vmem:[%s1115 + $0x148] sm:$0xff]
        %v1158 = vld [vmem:[%s1115 + $0x150] sm:$0xff]
        %v1159 = vld [vmem:[%s1115 + $0x158] sm:$0xff]
        %v1160 = vld [vmem:[%s1115 + $0x160] sm:$0xff]
        %v1161 = vld [vmem:[%s1115 + $0x168] sm:$0xff]
        %v1162 = vld [vmem:[%s1115 + $0x170] sm:$0xff]
        %v1163 = vld [vmem:[%s1115 + $0x178] sm:$0xff]
        %1164 = vmatpush.msra.mxu0 %v1131
        %1165 = vmatpush.msra.mxu0 %v1130
        %1166 = vmatpush.msra.mxu0 %v1129
        %1167 = vmatpush.msra.mxu0 %v1128
        %1168 = vmatpush.msra.mxu0 %v1127
        %1169 = vmatpush.msra.mxu0 %v1126
        %1170 = vmatpush.msra.mxu0 %v1125
        %1171 = vmatpush.msra.mxu0 %v1124
        %1172 = vmatpush.msra.mxu0 %v1123
        %1173 = vmatpush.msra.mxu0 %v1122
        %1174 = vmatpush.msra.mxu0 %v1121
        %1175 = vmatpush.msra.mxu0 %v1120
        %1176 = vmatpush.msra.mxu0 %v1119
        %1177 = vmatpush.msra.mxu0 %v1118
        %1178 = vmatpush.msra.mxu0 %v1117
        %1179 = vmatpush.msra.mxu0 %v1116
        %1180 = vmatmul.f32.gmra.mxu0 %v1091
        %v1181 = vpop.f32.mrf.mxu0
        %v1182 = vadd.f32 0.0, %v1181
        %1183 = vmatmul.f32.gmra.mxu0 %v1092
        %v1184 = vpop.f32.mrf.mxu0
        %v1185 = vadd.f32 0.0, %v1184
        %1186 = vmatmul.f32.gmra.mxu0 %v1093
        %v1187 = vpop.f32.mrf.mxu0
        %v1188 = vadd.f32 0.0, %v1187
        %1189 = vmatmul.f32.gmra.mxu0 %v1094
        %v1190 = vpop.f32.mrf.mxu0
        %v1191 = vadd.f32 0.0, %v1190
        %1192 = vmatmul.f32.gmra.mxu0 %v1095
        %v1193 = vpop.f32.mrf.mxu0
        %v1194 = vadd.f32 0.0, %v1193
        %1195 = vmatmul.f32.gmra.mxu0 %v1096
        %v1196 = vpop.f32.mrf.mxu0
        %v1197 = vadd.f32 0.0, %v1196
        %1198 = vmatmul.f32.gmra.mxu0 %v1097
        %v1199 = vpop.f32.mrf.mxu0
        %v1200 = vadd.f32 0.0, %v1199
        %1201 = vmatmul.f32.gmra.mxu0 %v1098
        %v1202 = vpop.f32.mrf.mxu0
        %v1203 = vadd.f32 0.0, %v1202
        %1204 = vmatmul.f32.gmra.mxu0 %v1099
        %v1205 = vpop.f32.mrf.mxu0
        %v1206 = vadd.f32 0.0, %v1205
        %1207 = vmatmul.f32.gmra.mxu0 %v1100
        %v1208 = vpop.f32.mrf.mxu0
        %v1209 = vadd.f32 0.0, %v1208
        %1210 = vmatmul.f32.gmra.mxu0 %v1101
        %v1211 = vpop.f32.mrf.mxu0
        %v1212 = vadd.f32 0.0, %v1211
        %1213 = vmatmul.f32.gmra.mxu0 %v1102
        %v1214 = vpop.f32.mrf.mxu0
        %v1215 = vadd.f32 0.0, %v1214
        %1216 = vmatmul.f32.gmra.mxu0 %v1103
        %v1217 = vpop.f32.mrf.mxu0
        %v1218 = vadd.f32 0.0, %v1217
        %1219 = vmatmul.f32.gmra.mxu0 %v1104
        %v1220 = vpop.f32.mrf.mxu0
        %v1221 = vadd.f32 0.0, %v1220
        %1222 = vmatmul.f32.gmra.mxu0 %v1105
        %v1223 = vpop.f32.mrf.mxu0
        %v1224 = vadd.f32 0.0, %v1223
        %1225 = vmatmul.f32.gmra.mxu0 %v1106
        %v1226 = vpop.f32.mrf.mxu0
        %v1227 = vadd.f32 0.0, %v1226
        %1228 = vmatmul.f32.gmra.mxu0 %v1107
        %v1229 = vpop.f32.mrf.mxu0
        %v1230 = vadd.f32 0.0, %v1229
        %1231 = vmatmul.f32.gmra.mxu0 %v1108
        %v1232 = vpop.f32.mrf.mxu0
        %v1233 = vadd.f32 0.0, %v1232
        %1234 = vmatmul.f32.gmra.mxu0 %v1109
        %v1235 = vpop.f32.mrf.mxu0
        %v1236 = vadd.f32 0.0, %v1235
        %1237 = vmatmul.f32.gmra.mxu0 %v1110
        %v1238 = vpop.f32.mrf.mxu0
        %v1239 = vadd.f32 0.0, %v1238
        %1240 = vdwg.mxu0
        %1241 = vmatpush.msra.mxu0 %v1147
        %1242 = vmatpush.msra.mxu0 %v1146
        %1243 = vmatpush.msra.mxu0 %v1145
        %1244 = vmatpush.msra.mxu0 %v1144
        %1245 = vmatpush.msra.mxu0 %v1143
        %1246 = vmatpush.msra.mxu0 %v1142
        %1247 = vmatpush.msra.mxu0 %v1141
        %1248 = vmatpush.msra.mxu0 %v1140
        %1249 = vmatpush.msra.mxu0 %v1139
        %1250 = vmatpush.msra.mxu0 %v1138
        %1251 = vmatpush.msra.mxu0 %v1137
        %1252 = vmatpush.msra.mxu0 %v1136
        %1253 = vmatpush.msra.mxu0 %v1135
        %1254 = vmatpush.msra.mxu0 %v1134
        %1255 = vmatpush.msra.mxu0 %v1133
        %1256 = vmatpush.msra.mxu0 %v1132
        %1257 = vmatmul.f32.gmra.mxu0 %v1093
        %v1258 = vpop.f32.mrf.mxu0
        %v1259 = vadd.f32 %v1182, %v1258
        %1260 = vmatmul.f32.gmra.mxu0 %v1094
        %v1261 = vpop.f32.mrf.mxu0
        %v1262 = vadd.f32 %v1185, %v1261
        %1263 = vmatmul.f32.gmra.mxu0 %v1095
        %v1264 = vpop.f32.mrf.mxu0
        %v1265 = vadd.f32 %v1188, %v1264
        %1266 = vmatmul.f32.gmra.mxu0 %v1096
        %v1267 = vpop.f32.mrf.mxu0
        %v1268 = vadd.f32 %v1191, %v1267
        %1269 = vmatmul.f32.gmra.mxu0 %v1097
        %v1270 = vpop.f32.mrf.mxu0
        %v1271 = vadd.f32 %v1194, %v1270
        %1272 = vmatmul.f32.gmra.mxu0 %v1098
        %v1273 = vpop.f32.mrf.mxu0
        %v1274 = vadd.f32 %v1197, %v1273
        %1275 = vmatmul.f32.gmra.mxu0 %v1099
        %v1276 = vpop.f32.mrf.mxu0
        %v1277 = vadd.f32 %v1200, %v1276
        %1278 = vmatmul.f32.gmra.mxu0 %v1100
        %v1279 = vpop.f32.mrf.mxu0
        %v1280 = vadd.f32 %v1203, %v1279
        %1281 = vmatmul.f32.gmra.mxu0 %v1101
        %v1282 = vpop.f32.mrf.mxu0
        %v1283 = vadd.f32 %v1206, %v1282
        %1284 = vmatmul.f32.gmra.mxu0 %v1102
        %v1285 = vpop.f32.mrf.mxu0
        %v1286 = vadd.f32 %v1209, %v1285
        %1287 = vmatmul.f32.gmra.mxu0 %v1103
        %v1288 = vpop.f32.mrf.mxu0
        %v1289 = vadd.f32 %v1212, %v1288
        %1290 = vmatmul.f32.gmra.mxu0 %v1104
        %v1291 = vpop.f32.mrf.mxu0
        %v1292 = vadd.f32 %v1215, %v1291
        %1293 = vmatmul.f32.gmra.mxu0 %v1105
        %v1294 = vpop.f32.mrf.mxu0
        %v1295 = vadd.f32 %v1218, %v1294
        %1296 = vmatmul.f32.gmra.mxu0 %v1106
        %v1297 = vpop.f32.mrf.mxu0
        %v1298 = vadd.f32 %v1221, %v1297
        %1299 = vmatmul.f32.gmra.mxu0 %v1107
        %v1300 = vpop.f32.mrf.mxu0
        %v1301 = vadd.f32 %v1224, %v1300
        %1302 = vmatmul.f32.gmra.mxu0 %v1108
        %v1303 = vpop.f32.mrf.mxu0
        %v1304 = vadd.f32 %v1227, %v1303
        %1305 = vmatmul.f32.gmra.mxu0 %v1109
        %v1306 = vpop.f32.mrf.mxu0
        %v1307 = vadd.f32 %v1230, %v1306
        %1308 = vmatmul.f32.gmra.mxu0 %v1110
        %v1309 = vpop.f32.mrf.mxu0
        %v1310 = vadd.f32 %v1233, %v1309
        %1311 = vmatmul.f32.gmra.mxu0 %v1111
        %v1312 = vpop.f32.mrf.mxu0
        %v1313 = vadd.f32 %v1236, %v1312
        %1314 = vmatmul.f32.gmra.mxu0 %v1112
        %v1315 = vpop.f32.mrf.mxu0
        %v1316 = vadd.f32 %v1239, %v1315
        %1317 = vdwg.mxu0
        %1318 = vmatpush.msra.mxu0 %v1163
        %1319 = vmatpush.msra.mxu0 %v1162
        %1320 = vmatpush.msra.mxu0 %v1161
        %1321 = vmatpush.msra.mxu0 %v1160
        %1322 = vmatpush.msra.mxu0 %v1159
        %1323 = vmatpush.msra.mxu0 %v1158
        %1324 = vmatpush.msra.mxu0 %v1157
        %1325 = vmatpush.msra.mxu0 %v1156
        %1326 = vmatpush.msra.mxu0 %v1155
        %1327 = vmatpush.msra.mxu0 %v1154
        %1328 = vmatpush.msra.mxu0 %v1153
        %1329 = vmatpush.msra.mxu0 %v1152
        %1330 = vmatpush.msra.mxu0 %v1151
        %1331 = vmatpush.msra.mxu0 %v1150
        %1332 = vmatpush.msra.mxu0 %v1149
        %1333 = vmatpush.msra.mxu0 %v1148
        %1334 = vmatmul.f32.gmra.mxu0 %v1095
        %v1335 = vpop.f32.mrf.mxu0
        %v1336 = vadd.f32 %v1259, %v1335
        %1337 = vmatmul.f32.gmra.mxu0 %v1096
        %v1338 = vpop.f32.mrf.mxu0
        %v1339 = vadd.f32 %v1262, %v1338
        %1340 = vmatmul.f32.gmra.mxu0 %v1097
        %v1341 = vpop.f32.mrf.mxu0
        %v1342 = vadd.f32 %v1265, %v1341
        %1343 = vmatmul.f32.gmra.mxu0 %v1098
        %v1344 = vpop.f32.mrf.mxu0
        %v1345 = vadd.f32 %v1268, %v1344
        %1346 = vmatmul.f32.gmra.mxu0 %v1099
        %v1347 = vpop.f32.mrf.mxu0
        %v1348 = vadd.f32 %v1271, %v1347
        %1349 = vmatmul.f32.gmra.mxu0 %v1100
        %v1350 = vpop.f32.mrf.mxu0
        %v1351 = vadd.f32 %v1274, %v1350
        %1352 = vmatmul.f32.gmra.mxu0 %v1101
        %v1353 = vpop.f32.mrf.mxu0
        %v1354 = vadd.f32 %v1277, %v1353
        %1355 = vmatmul.f32.gmra.mxu0 %v1102
        %v1356 = vpop.f32.mrf.mxu0
        %v1357 = vadd.f32 %v1280, %v1356
        %1358 = vmatmul.f32.gmra.mxu0 %v1103
        %v1359 = vpop.f32.mrf.mxu0
        %v1360 = vadd.f32 %v1283, %v1359
        %1361 = vmatmul.f32.gmra.mxu0 %v1104
        %v1362 = vpop.f32.mrf.mxu0
        %v1363 = vadd.f32 %v1286, %v1362
        %1364 = vmatmul.f32.gmra.mxu0 %v1105
        %v1365 = vpop.f32.mrf.mxu0
        %v1366 = vadd.f32 %v1289, %v1365
        %1367 = vmatmul.f32.gmra.mxu0 %v1106
        %v1368 = vpop.f32.mrf.mxu0
        %v1369 = vadd.f32 %v1292, %v1368
        %1370 = vmatmul.f32.gmra.mxu0 %v1107
        %v1371 = vpop.f32.mrf.mxu0
        %v1372 = vadd.f32 %v1295, %v1371
        %1373 = vmatmul.f32.gmra.mxu0 %v1108
        %v1374 = vpop.f32.mrf.mxu0
        %v1375 = vadd.f32 %v1298, %v1374
        %1376 = vmatmul.f32.gmra.mxu0 %v1109
        %v1377 = vpop.f32.mrf.mxu0
        %v1378 = vadd.f32 %v1301, %v1377
        %1379 = vmatmul.f32.gmra.mxu0 %v1110
        %v1380 = vpop.f32.mrf.mxu0
        %v1381 = vadd.f32 %v1304, %v1380
        %1382 = vmatmul.f32.gmra.mxu0 %v1111
        %v1383 = vpop.f32.mrf.mxu0
        %v1384 = vadd.f32 %v1307, %v1383
        %1385 = vmatmul.f32.gmra.mxu0 %v1112
        %v1386 = vpop.f32.mrf.mxu0
        %v1387 = vadd.f32 %v1310, %v1386
        %1388 = vmatmul.f32.gmra.mxu0 %v1113
        %v1389 = vpop.f32.mrf.mxu0
        %v1390 = vadd.f32 %v1313, %v1389
        %1391 = vmatmul.f32.gmra.mxu0 %v1114
        %v1392 = vpop.f32.mrf.mxu0
        %v1393 = vadd.f32 %v1316, %v1392
        %1394 = vdwg.mxu0
        %s1395 = scalar_lea.vmem %s5, 160
        %v1396 = vld [vmem:[%s1395] sm:$0xff]
        %v1397 = vld [vmem:[%s1395 + $0x8] sm:$0xff]
        %v1398 = vld [vmem:[%s1395 + $0x10] sm:$0xff]
        %v1399 = vld [vmem:[%s1395 + $0x18] sm:$0xff]
        %v1400 = vld [vmem:[%s1395 + $0x20] sm:$0xff]
        %v1401 = vld [vmem:[%s1395 + $0x28] sm:$0xff]
        %v1402 = vld [vmem:[%s1395 + $0x30] sm:$0xff]
        %v1403 = vld [vmem:[%s1395 + $0x38] sm:$0xff]
        %v1404 = vld [vmem:[%s1395 + $0x40] sm:$0xff]
        %v1405 = vld [vmem:[%s1395 + $0x48] sm:$0xff]
        %v1406 = vld [vmem:[%s1395 + $0x50] sm:$0xff]
        %v1407 = vld [vmem:[%s1395 + $0x58] sm:$0xff]
        %v1408 = vld [vmem:[%s1395 + $0x60] sm:$0xff]
        %v1409 = vld [vmem:[%s1395 + $0x68] sm:$0xff]
        %v1410 = vld [vmem:[%s1395 + $0x70] sm:$0xff]
        %v1411 = vld [vmem:[%s1395 + $0x78] sm:$0xff]
        %v1412 = vld [vmem:[%s1395 + $0x80] sm:$0xff]
        %v1413 = vld [vmem:[%s1395 + $0x88] sm:$0xff]
        %v1414 = vld [vmem:[%s1395 + $0x90] sm:$0xff]
        %v1415 = vld [vmem:[%s1395 + $0x98] sm:$0xff]
        %1417 = vset.pattern.permute.xlu0 0
        %1418 = vperm.xlu0 %1417, %v1396
        %v1419 = vpop.permute.xlu0 %1418
        %1422 = vset.pattern.permute.xlu0 0
        %1423 = vperm.xlu0 %1422, %v1397
        %v1424 = vpop.permute.xlu0 %1423
        %1427 = vset.pattern.permute.xlu0 0
        %1428 = vperm.xlu0 %1427, %v1398
        %v1429 = vpop.permute.xlu0 %1428
        %1432 = vset.pattern.permute.xlu0 0
        %1433 = vperm.xlu0 %1432, %v1399
        %v1434 = vpop.permute.xlu0 %1433
        %1437 = vset.pattern.permute.xlu0 0
        %1438 = vperm.xlu0 %1437, %v1400
        %v1439 = vpop.permute.xlu0 %1438
        %1442 = vset.pattern.permute.xlu0 0
        %1443 = vperm.xlu0 %1442, %v1401
        %v1444 = vpop.permute.xlu0 %1443
        %1447 = vset.pattern.permute.xlu0 0
        %1448 = vperm.xlu0 %1447, %v1402
        %v1449 = vpop.permute.xlu0 %1448
        %1452 = vset.pattern.permute.xlu0 0
        %1453 = vperm.xlu0 %1452, %v1403
        %v1454 = vpop.permute.xlu0 %1453
        %1457 = vset.pattern.permute.xlu0 0
        %1458 = vperm.xlu0 %1457, %v1404
        %v1459 = vpop.permute.xlu0 %1458
        %1462 = vset.pattern.permute.xlu0 0
        %1463 = vperm.xlu0 %1462, %v1405
        %v1464 = vpop.permute.xlu0 %1463
        %1467 = vset.pattern.permute.xlu0 0
        %1468 = vperm.xlu0 %1467, %v1406
        %v1469 = vpop.permute.xlu0 %1468
        %1472 = vset.pattern.permute.xlu0 0
        %1473 = vperm.xlu0 %1472, %v1407
        %v1474 = vpop.permute.xlu0 %1473
        %1477 = vset.pattern.permute.xlu0 0
        %1478 = vperm.xlu0 %1477, %v1408
        %v1479 = vpop.permute.xlu0 %1478
        %1482 = vset.pattern.permute.xlu0 0
        %1483 = vperm.xlu0 %1482, %v1409
        %v1484 = vpop.permute.xlu0 %1483
        %1487 = vset.pattern.permute.xlu0 0
        %1488 = vperm.xlu0 %1487, %v1410
        %v1489 = vpop.permute.xlu0 %1488
        %1492 = vset.pattern.permute.xlu0 0
        %1493 = vperm.xlu0 %1492, %v1411
        %v1494 = vpop.permute.xlu0 %1493
        %1497 = vset.pattern.permute.xlu0 0
        %1498 = vperm.xlu0 %1497, %v1412
        %v1499 = vpop.permute.xlu0 %1498
        %1502 = vset.pattern.permute.xlu0 0
        %1503 = vperm.xlu0 %1502, %v1413
        %v1504 = vpop.permute.xlu0 %1503
        %1507 = vset.pattern.permute.xlu0 0
        %1508 = vperm.xlu0 %1507, %v1414
        %v1509 = vpop.permute.xlu0 %1508
        %1512 = vset.pattern.permute.xlu0 0
        %1513 = vperm.xlu0 %1512, %v1415
        %v1514 = vpop.permute.xlu0 %1513
        %v1516 = vmul.f32 %v1336, %v1419
        %v1517 = vmul.f32 %v1339, %v1424
        %v1518 = vmul.f32 %v1342, %v1429
        %v1519 = vmul.f32 %v1345, %v1434
        %v1520 = vmul.f32 %v1348, %v1439
        %v1521 = vmul.f32 %v1351, %v1444
        %v1522 = vmul.f32 %v1354, %v1449
        %v1523 = vmul.f32 %v1357, %v1454
        %v1524 = vmul.f32 %v1360, %v1459
        %v1525 = vmul.f32 %v1363, %v1464
        %v1526 = vmul.f32 %v1366, %v1469
        %v1527 = vmul.f32 %v1369, %v1474
        %v1528 = vmul.f32 %v1372, %v1479
        %v1529 = vmul.f32 %v1375, %v1484
        %v1530 = vmul.f32 %v1378, %v1489
        %v1531 = vmul.f32 %v1381, %v1494
        %v1532 = vmul.f32 %v1384, %v1499
        %v1533 = vmul.f32 %v1387, %v1504
        %v1534 = vmul.f32 %v1390, %v1509
        %v1535 = vmul.f32 %v1393, %v1514
        %v1536 = vadd.f32 %v1071, %v1516
        %v1537 = vadd.f32 %v1072, %v1517
        %v1538 = vadd.f32 %v1073, %v1518
        %v1539 = vadd.f32 %v1074, %v1519
        %v1540 = vadd.f32 %v1075, %v1520
        %v1541 = vadd.f32 %v1076, %v1521
        %v1542 = vadd.f32 %v1077, %v1522
        %v1543 = vadd.f32 %v1078, %v1523
        %v1544 = vadd.f32 %v1079, %v1524
        %v1545 = vadd.f32 %v1080, %v1525
        %v1546 = vadd.f32 %v1081, %v1526
        %v1547 = vadd.f32 %v1082, %v1527
        %v1548 = vadd.f32 %v1083, %v1528
        %v1549 = vadd.f32 %v1084, %v1529
        %v1550 = vadd.f32 %v1085, %v1530
        %v1551 = vadd.f32 %v1086, %v1531
        %v1552 = vadd.f32 %v1087, %v1532
        %v1553 = vadd.f32 %v1088, %v1533
        %v1554 = vadd.f32 %v1089, %v1534
        %v1555 = vadd.f32 %v1090, %v1535
        %v1556 = vld [vmem:[%s3] sm:$0x1]
        %v1558 = vperm.slane %v1556, 0
        %v1560 = vadd.f32 %v1536, %v1558
        %v1561 = vadd.f32 %v1537, %v1558
        %v1562 = vadd.f32 %v1538, %v1558
        %v1563 = vadd.f32 %v1539, %v1558
        %v1564 = vadd.f32 %v1540, %v1558
        %v1565 = vadd.f32 %v1541, %v1558
        %v1566 = vadd.f32 %v1542, %v1558
        %v1567 = vadd.f32 %v1543, %v1558
        %v1568 = vadd.f32 %v1544, %v1558
        %v1569 = vadd.f32 %v1545, %v1558
        %v1570 = vadd.f32 %v1546, %v1558
        %v1571 = vadd.f32 %v1547, %v1558
        %v1572 = vadd.f32 %v1548, %v1558
        %v1573 = vadd.f32 %v1549, %v1558
        %v1574 = vadd.f32 %v1550, %v1558
        %v1575 = vadd.f32 %v1551, %v1558
        %v1576 = vadd.f32 %v1552, %v1558
        %v1577 = vadd.f32 %v1553, %v1558
        %v1578 = vadd.f32 %v1554, %v1558
        %v1579 = vadd.f32 %v1555, %v1558
        %v1580 = vmax.f32 %v1560, 0.0
        %v1581 = vmax.f32 %v1561, 0.0
        %v1582 = vmax.f32 %v1562, 0.0
        %v1583 = vmax.f32 %v1563, 0.0
        %v1584 = vmax.f32 %v1564, 0.0
        %v1585 = vmax.f32 %v1565, 0.0
        %v1586 = vmax.f32 %v1566, 0.0
        %v1587 = vmax.f32 %v1567, 0.0
        %v1588 = vmax.f32 %v1568, 0.0
        %v1589 = vmax.f32 %v1569, 0.0
        %v1590 = vmax.f32 %v1570, 0.0
        %v1591 = vmax.f32 %v1571, 0.0
        %v1592 = vmax.f32 %v1572, 0.0
        %v1593 = vmax.f32 %v1573, 0.0
        %v1594 = vmax.f32 %v1574, 0.0
        %v1595 = vmax.f32 %v1575, 0.0
        %v1596 = vmax.f32 %v1576, 0.0
        %v1597 = vmax.f32 %v1577, 0.0
        %v1598 = vmax.f32 %v1578, 0.0
        %v1599 = vmax.f32 %v1579, 0.0
        %1600 = vst [vmem:[#allocation2] sm:$0xff] 0.0
        %1601 = vst [vmem:[#allocation2 + $0xa8] sm:$0xff] 0.0
        %1602 = vst [vmem:[#allocation2 + $0x8] sm:$0xff] %v1580
        %1603 = vst [vmem:[#allocation2 + $0x10] sm:$0xff] %v1581
        %1604 = vst [vmem:[#allocation2 + $0x18] sm:$0xff] %v1582
        %1605 = vst [vmem:[#allocation2 + $0x20] sm:$0xff] %v1583
        %1606 = vst [vmem:[#allocation2 + $0x28] sm:$0xff] %v1584
        %1607 = vst [vmem:[#allocation2 + $0x30] sm:$0xff] %v1585
        %1608 = vst [vmem:[#allocation2 + $0x38] sm:$0xff] %v1586
        %1609 = vst [vmem:[#allocation2 + $0x40] sm:$0xff] %v1587
        %1610 = vst [vmem:[#allocation2 + $0x48] sm:$0xff] %v1588
        %1611 = vst [vmem:[#allocation2 + $0x50] sm:$0xff] %v1589
        %1612 = vst [vmem:[#allocation2 + $0x58] sm:$0xff] %v1590
        %1613 = vst [vmem:[#allocation2 + $0x60] sm:$0xff] %v1591
        %1614 = vst [vmem:[#allocation2 + $0x68] sm:$0xff] %v1592
        %1615 = vst [vmem:[#allocation2 + $0x70] sm:$0xff] %v1593
        %1616 = vst [vmem:[#allocation2 + $0x78] sm:$0xff] %v1594
        %1617 = vst [vmem:[#allocation2 + $0x80] sm:$0xff] %v1595
        %1618 = vst [vmem:[#allocation2 + $0x88] sm:$0xff] %v1596
        %1619 = vst [vmem:[#allocation2 + $0x90] sm:$0xff] %v1597
        %1620 = vst [vmem:[#allocation2 + $0x98] sm:$0xff] %v1598
        %1621 = vst [vmem:[#allocation2 + $0xa0] sm:$0xff] %v1599
        %p1622 = scmp.eq.s32.totalorder %s29, 0
        // Predicated region
        $region57: #{tpu_custom_call.1} parent=43 // pred_check
          %p1623 = pneg %p1622
        $region58: #{tpu_custom_call.1} parent=43 // pred_check_branch
          %1625 = sbr.rel (%p1623) target = $region60
        $region59: #{tpu_custom_call.1} parent=43 // pred_region
          %1626 = vst [vmem:[#allocation2 + $0x8] sm:$0xff] 0.0
          %1627 = vst [vmem:[#allocation2 + $0x10] sm:$0xff] 0.0
        $region60: #{tpu_custom_call.1} parent=43 // pred_fallthru
          _
        %p1628 = scmp.eq.s32.totalorder %s29, 1
        // Predicated region
        $region61: #{tpu_custom_call.1} parent=43 // pred_check
          %p1629 = pneg %p1628
        $region62: #{tpu_custom_call.1} parent=43 // pred_check_branch
          %1631 = sbr.rel (%p1629) target = $region64
        $region63: #{tpu_custom_call.1} parent=43 // pred_region
          %1632 = vst [vmem:[#allocation2 + $0x98] sm:$0xff] 0.0
          %1633 = vst [vmem:[#allocation2 + $0xa0] sm:$0xff] 0.0
        $region64: #{tpu_custom_call.1} parent=43 // pred_fallthru
          _
        %v1634 = vld [vmem:[#allocation2 + $0x7] sm:$0xff]
        %v1635 = vld [vmem:[#allocation2 + $0xf] sm:$0xff]
        %v1636 = vld [vmem:[#allocation2 + $0x17] sm:$0xff]
        %v1637 = vld [vmem:[#allocation2 + $0x1f] sm:$0xff]
        %v1638 = vld [vmem:[#allocation2 + $0x27] sm:$0xff]
        %v1639 = vld [vmem:[#allocation2 + $0x2f] sm:$0xff]
        %v1640 = vld [vmem:[#allocation2 + $0x37] sm:$0xff]
        %v1641 = vld [vmem:[#allocation2 + $0x3f] sm:$0xff]
        %v1642 = vld [vmem:[#allocation2 + $0x47] sm:$0xff]
        %v1643 = vld [vmem:[#allocation2 + $0x4f] sm:$0xff]
        %v1644 = vld [vmem:[#allocation2 + $0x57] sm:$0xff]
        %v1645 = vld [vmem:[#allocation2 + $0x5f] sm:$0xff]
        %v1646 = vld [vmem:[#allocation2 + $0x67] sm:$0xff]
        %v1647 = vld [vmem:[#allocation2 + $0x6f] sm:$0xff]
        %v1648 = vld [vmem:[#allocation2 + $0x77] sm:$0xff]
        %v1649 = vld [vmem:[#allocation2 + $0x7f] sm:$0xff]
        %v1650 = vld [vmem:[#allocation2 + $0x87] sm:$0xff]
        %v1651 = vld [vmem:[#allocation2 + $0x8f] sm:$0xff]
        %v1652 = vld [vmem:[#allocation2 + $0x97] sm:$0xff]
        %v1653 = vld [vmem:[#allocation2 + $0x9f] sm:$0xff]
        %v1654 = vld [vmem:[#allocation8] sm:$0xff]
        %v1655 = vld [vmem:[#allocation8 + $0x8] sm:$0xff]
        %v1656 = vld [vmem:[#allocation8 + $0x10] sm:$0xff]
        %v1657 = vld [vmem:[#allocation8 + $0x18] sm:$0xff]
        %v1658 = vld [vmem:[#allocation8 + $0x20] sm:$0xff]
        %v1659 = vld [vmem:[#allocation8 + $0x28] sm:$0xff]
        %v1660 = vld [vmem:[#allocation8 + $0x30] sm:$0xff]
        %v1661 = vld [vmem:[#allocation8 + $0x38] sm:$0xff]
        %v1662 = vld [vmem:[#allocation8 + $0x40] sm:$0xff]
        %v1663 = vld [vmem:[#allocation8 + $0x48] sm:$0xff]
        %v1664 = vld [vmem:[#allocation8 + $0x50] sm:$0xff]
        %v1665 = vld [vmem:[#allocation8 + $0x58] sm:$0xff]
        %v1666 = vld [vmem:[#allocation8 + $0x60] sm:$0xff]
        %v1667 = vld [vmem:[#allocation8 + $0x68] sm:$0xff]
        %v1668 = vld [vmem:[#allocation8 + $0x70] sm:$0xff]
        %v1669 = vld [vmem:[#allocation8 + $0x78] sm:$0xff]
        %v1670 = vld [vmem:[#allocation8 + $0x80] sm:$0xff]
        %v1671 = vld [vmem:[#allocation8 + $0x88] sm:$0xff]
        %v1672 = vld [vmem:[#allocation8 + $0x90] sm:$0xff]
        %v1673 = vld [vmem:[#allocation8 + $0x98] sm:$0xff]
        %v1674 = vld [vmem:[#allocation8 + $0xa0] sm:$0xff]
        %v1675 = vld [vmem:[#allocation8 + $0xa8] sm:$0xff]
        %v1676 = vld [vmem:[#allocation8 + $0xb0] sm:$0xff]
        %v1677 = vld [vmem:[#allocation8 + $0xb8] sm:$0xff]
        %v1678 = vld [vmem:[#allocation8 + $0xc0] sm:$0xff]
        %v1679 = vld [vmem:[#allocation8 + $0xc8] sm:$0xff]
        %v1680 = vld [vmem:[#allocation8 + $0xd0] sm:$0xff]
        %v1681 = vld [vmem:[#allocation8 + $0xd8] sm:$0xff]
        %v1682 = vld [vmem:[#allocation8 + $0xe0] sm:$0xff]
        %v1683 = vld [vmem:[#allocation8 + $0xe8] sm:$0xff]
        %v1684 = vld [vmem:[#allocation8 + $0xf0] sm:$0xff]
        %v1685 = vld [vmem:[#allocation8 + $0xf8] sm:$0xff]
        %v1686 = vld [vmem:[#allocation8 + $0x100] sm:$0xff]
        %v1687 = vld [vmem:[#allocation8 + $0x108] sm:$0xff]
        %v1688 = vld [vmem:[#allocation8 + $0x110] sm:$0xff]
        %v1689 = vld [vmem:[#allocation8 + $0x118] sm:$0xff]
        %v1690 = vld [vmem:[#allocation8 + $0x120] sm:$0xff]
        %v1691 = vld [vmem:[#allocation8 + $0x128] sm:$0xff]
        %v1692 = vld [vmem:[#allocation8 + $0x130] sm:$0xff]
        %v1693 = vld [vmem:[#allocation8 + $0x138] sm:$0xff]
        %v1694 = vld [vmem:[#allocation8 + $0x140] sm:$0xff]
        %v1695 = vld [vmem:[#allocation8 + $0x148] sm:$0xff]
        %v1696 = vld [vmem:[#allocation8 + $0x150] sm:$0xff]
        %v1697 = vld [vmem:[#allocation8 + $0x158] sm:$0xff]
        %v1698 = vld [vmem:[#allocation8 + $0x160] sm:$0xff]
        %v1699 = vld [vmem:[#allocation8 + $0x168] sm:$0xff]
        %v1700 = vld [vmem:[#allocation8 + $0x170] sm:$0xff]
        %v1701 = vld [vmem:[#allocation8 + $0x178] sm:$0xff]
        %1702 = vmatpush.msra.mxu0 %v1669
        %1703 = vmatpush.msra.mxu0 %v1668
        %1704 = vmatpush.msra.mxu0 %v1667
        %1705 = vmatpush.msra.mxu0 %v1666
        %1706 = vmatpush.msra.mxu0 %v1665
        %1707 = vmatpush.msra.mxu0 %v1664
        %1708 = vmatpush.msra.mxu0 %v1663
        %1709 = vmatpush.msra.mxu0 %v1662
        %1710 = vmatpush.msra.mxu0 %v1661
        %1711 = vmatpush.msra.mxu0 %v1660
        %1712 = vmatpush.msra.mxu0 %v1659
        %1713 = vmatpush.msra.mxu0 %v1658
        %1714 = vmatpush.msra.mxu0 %v1657
        %1715 = vmatpush.msra.mxu0 %v1656
        %1716 = vmatpush.msra.mxu0 %v1655
        %1717 = vmatpush.msra.mxu0 %v1654
        %1718 = vmatmul.f32.gmra.mxu0 %v1634
        %v1719 = vpop.f32.mrf.mxu0
        %v1720 = vadd.f32 0.0, %v1719
        %1721 = vmatmul.f32.gmra.mxu0 %v1635
        %v1722 = vpop.f32.mrf.mxu0
        %v1723 = vadd.f32 0.0, %v1722
        %1724 = vmatmul.f32.gmra.mxu0 %v1636
        %v1725 = vpop.f32.mrf.mxu0
        %v1726 = vadd.f32 0.0, %v1725
        %1727 = vmatmul.f32.gmra.mxu0 %v1637
        %v1728 = vpop.f32.mrf.mxu0
        %v1729 = vadd.f32 0.0, %v1728
        %1730 = vmatmul.f32.gmra.mxu0 %v1638
        %v1731 = vpop.f32.mrf.mxu0
        %v1732 = vadd.f32 0.0, %v1731
        %1733 = vmatmul.f32.gmra.mxu0 %v1639
        %v1734 = vpop.f32.mrf.mxu0
        %v1735 = vadd.f32 0.0, %v1734
        %1736 = vmatmul.f32.gmra.mxu0 %v1640
        %v1737 = vpop.f32.mrf.mxu0
        %v1738 = vadd.f32 0.0, %v1737
        %1739 = vmatmul.f32.gmra.mxu0 %v1641
        %v1740 = vpop.f32.mrf.mxu0
        %v1741 = vadd.f32 0.0, %v1740
        %1742 = vmatmul.f32.gmra.mxu0 %v1642
        %v1743 = vpop.f32.mrf.mxu0
        %v1744 = vadd.f32 0.0, %v1743
        %1745 = vmatmul.f32.gmra.mxu0 %v1643
        %v1746 = vpop.f32.mrf.mxu0
        %v1747 = vadd.f32 0.0, %v1746
        %1748 = vmatmul.f32.gmra.mxu0 %v1644
        %v1749 = vpop.f32.mrf.mxu0
        %v1750 = vadd.f32 0.0, %v1749
        %1751 = vmatmul.f32.gmra.mxu0 %v1645
        %v1752 = vpop.f32.mrf.mxu0
        %v1753 = vadd.f32 0.0, %v1752
        %1754 = vmatmul.f32.gmra.mxu0 %v1646
        %v1755 = vpop.f32.mrf.mxu0
        %v1756 = vadd.f32 0.0, %v1755
        %1757 = vmatmul.f32.gmra.mxu0 %v1647
        %v1758 = vpop.f32.mrf.mxu0
        %v1759 = vadd.f32 0.0, %v1758
        %1760 = vmatmul.f32.gmra.mxu0 %v1648
        %v1761 = vpop.f32.mrf.mxu0
        %v1762 = vadd.f32 0.0, %v1761
        %1763 = vmatmul.f32.gmra.mxu0 %v1649
        %v1764 = vpop.f32.mrf.mxu0
        %v1765 = vadd.f32 0.0, %v1764
        %1766 = vdwg.mxu0
        %1767 = vmatpush.msra.mxu0 %v1685
        %1768 = vmatpush.msra.mxu0 %v1684
        %1769 = vmatpush.msra.mxu0 %v1683
        %1770 = vmatpush.msra.mxu0 %v1682
        %1771 = vmatpush.msra.mxu0 %v1681
        %1772 = vmatpush.msra.mxu0 %v1680
        %1773 = vmatpush.msra.mxu0 %v1679
        %1774 = vmatpush.msra.mxu0 %v1678
        %1775 = vmatpush.msra.mxu0 %v1677
        %1776 = vmatpush.msra.mxu0 %v1676
        %1777 = vmatpush.msra.mxu0 %v1675
        %1778 = vmatpush.msra.mxu0 %v1674
        %1779 = vmatpush.msra.mxu0 %v1673
        %1780 = vmatpush.msra.mxu0 %v1672
        %1781 = vmatpush.msra.mxu0 %v1671
        %1782 = vmatpush.msra.mxu0 %v1670
        %1783 = vmatmul.f32.gmra.mxu0 %v1636
        %v1784 = vpop.f32.mrf.mxu0
        %v1785 = vadd.f32 %v1720, %v1784
        %1786 = vmatmul.f32.gmra.mxu0 %v1637
        %v1787 = vpop.f32.mrf.mxu0
        %v1788 = vadd.f32 %v1723, %v1787
        %1789 = vmatmul.f32.gmra.mxu0 %v1638
        %v1790 = vpop.f32.mrf.mxu0
        %v1791 = vadd.f32 %v1726, %v1790
        %1792 = vmatmul.f32.gmra.mxu0 %v1639
        %v1793 = vpop.f32.mrf.mxu0
        %v1794 = vadd.f32 %v1729, %v1793
        %1795 = vmatmul.f32.gmra.mxu0 %v1640
        %v1796 = vpop.f32.mrf.mxu0
        %v1797 = vadd.f32 %v1732, %v1796
        %1798 = vmatmul.f32.gmra.mxu0 %v1641
        %v1799 = vpop.f32.mrf.mxu0
        %v1800 = vadd.f32 %v1735, %v1799
        %1801 = vmatmul.f32.gmra.mxu0 %v1642
        %v1802 = vpop.f32.mrf.mxu0
        %v1803 = vadd.f32 %v1738, %v1802
        %1804 = vmatmul.f32.gmra.mxu0 %v1643
        %v1805 = vpop.f32.mrf.mxu0
        %v1806 = vadd.f32 %v1741, %v1805
        %1807 = vmatmul.f32.gmra.mxu0 %v1644
        %v1808 = vpop.f32.mrf.mxu0
        %v1809 = vadd.f32 %v1744, %v1808
        %1810 = vmatmul.f32.gmra.mxu0 %v1645
        %v1811 = vpop.f32.mrf.mxu0
        %v1812 = vadd.f32 %v1747, %v1811
        %1813 = vmatmul.f32.gmra.mxu0 %v1646
        %v1814 = vpop.f32.mrf.mxu0
        %v1815 = vadd.f32 %v1750, %v1814
        %1816 = vmatmul.f32.gmra.mxu0 %v1647
        %v1817 = vpop.f32.mrf.mxu0
        %v1818 = vadd.f32 %v1753, %v1817
        %1819 = vmatmul.f32.gmra.mxu0 %v1648
        %v1820 = vpop.f32.mrf.mxu0
        %v1821 = vadd.f32 %v1756, %v1820
        %1822 = vmatmul.f32.gmra.mxu0 %v1649
        %v1823 = vpop.f32.mrf.mxu0
        %v1824 = vadd.f32 %v1759, %v1823
        %1825 = vmatmul.f32.gmra.mxu0 %v1650
        %v1826 = vpop.f32.mrf.mxu0
        %v1827 = vadd.f32 %v1762, %v1826
        %1828 = vmatmul.f32.gmra.mxu0 %v1651
        %v1829 = vpop.f32.mrf.mxu0
        %v1830 = vadd.f32 %v1765, %v1829
        %1831 = vdwg.mxu0
        %1832 = vmatpush.msra.mxu0 %v1701
        %1833 = vmatpush.msra.mxu0 %v1700
        %1834 = vmatpush.msra.mxu0 %v1699
        %1835 = vmatpush.msra.mxu0 %v1698
        %1836 = vmatpush.msra.mxu0 %v1697
        %1837 = vmatpush.msra.mxu0 %v1696
        %1838 = vmatpush.msra.mxu0 %v1695
        %1839 = vmatpush.msra.mxu0 %v1694
        %1840 = vmatpush.msra.mxu0 %v1693
        %1841 = vmatpush.msra.mxu0 %v1692
        %1842 = vmatpush.msra.mxu0 %v1691
        %1843 = vmatpush.msra.mxu0 %v1690
        %1844 = vmatpush.msra.mxu0 %v1689
        %1845 = vmatpush.msra.mxu0 %v1688
        %1846 = vmatpush.msra.mxu0 %v1687
        %1847 = vmatpush.msra.mxu0 %v1686
        %1848 = vmatmul.f32.gmra.mxu0 %v1638
        %v1849 = vpop.f32.mrf.mxu0
        %v1850 = vadd.f32 %v1785, %v1849
        %1851 = vmatmul.f32.gmra.mxu0 %v1639
        %v1852 = vpop.f32.mrf.mxu0
        %v1853 = vadd.f32 %v1788, %v1852
        %1854 = vmatmul.f32.gmra.mxu0 %v1640
        %v1855 = vpop.f32.mrf.mxu0
        %v1856 = vadd.f32 %v1791, %v1855
        %1857 = vmatmul.f32.gmra.mxu0 %v1641
        %v1858 = vpop.f32.mrf.mxu0
        %v1859 = vadd.f32 %v1794, %v1858
        %1860 = vmatmul.f32.gmra.mxu0 %v1642
        %v1861 = vpop.f32.mrf.mxu0
        %v1862 = vadd.f32 %v1797, %v1861
        %1863 = vmatmul.f32.gmra.mxu0 %v1643
        %v1864 = vpop.f32.mrf.mxu0
        %v1865 = vadd.f32 %v1800, %v1864
        %1866 = vmatmul.f32.gmra.mxu0 %v1644
        %v1867 = vpop.f32.mrf.mxu0
        %v1868 = vadd.f32 %v1803, %v1867
        %1869 = vmatmul.f32.gmra.mxu0 %v1645
        %v1870 = vpop.f32.mrf.mxu0
        %v1871 = vadd.f32 %v1806, %v1870
        %1872 = vmatmul.f32.gmra.mxu0 %v1646
        %v1873 = vpop.f32.mrf.mxu0
        %v1874 = vadd.f32 %v1809, %v1873
        %1875 = vmatmul.f32.gmra.mxu0 %v1647
        %v1876 = vpop.f32.mrf.mxu0
        %v1877 = vadd.f32 %v1812, %v1876
        %1878 = vmatmul.f32.gmra.mxu0 %v1648
        %v1879 = vpop.f32.mrf.mxu0
        %v1880 = vadd.f32 %v1815, %v1879
        %1881 = vmatmul.f32.gmra.mxu0 %v1649
        %v1882 = vpop.f32.mrf.mxu0
        %v1883 = vadd.f32 %v1818, %v1882
        %1884 = vmatmul.f32.gmra.mxu0 %v1650
        %v1885 = vpop.f32.mrf.mxu0
        %v1886 = vadd.f32 %v1821, %v1885
        %1887 = vmatmul.f32.gmra.mxu0 %v1651
        %v1888 = vpop.f32.mrf.mxu0
        %v1889 = vadd.f32 %v1824, %v1888
        %1890 = vmatmul.f32.gmra.mxu0 %v1652
        %v1891 = vpop.f32.mrf.mxu0
        %v1892 = vadd.f32 %v1827, %v1891
        %1893 = vmatmul.f32.gmra.mxu0 %v1653
        %v1894 = vpop.f32.mrf.mxu0
        %v1895 = vadd.f32 %v1830, %v1894
        %1896 = vdwg.mxu0
        %v1897 = vld [vmem:[%s5] sm:$0xff]
        %v1898 = vld [vmem:[%s5 + $0x8] sm:$0xff]
        %v1899 = vld [vmem:[%s5 + $0x10] sm:$0xff]
        %v1900 = vld [vmem:[%s5 + $0x18] sm:$0xff]
        %v1901 = vld [vmem:[%s5 + $0x20] sm:$0xff]
        %v1902 = vld [vmem:[%s5 + $0x28] sm:$0xff]
        %v1903 = vld [vmem:[%s5 + $0x30] sm:$0xff]
        %v1904 = vld [vmem:[%s5 + $0x38] sm:$0xff]
        %v1905 = vld [vmem:[%s5 + $0x40] sm:$0xff]
        %v1906 = vld [vmem:[%s5 + $0x48] sm:$0xff]
        %v1907 = vld [vmem:[%s5 + $0x50] sm:$0xff]
        %v1908 = vld [vmem:[%s5 + $0x58] sm:$0xff]
        %v1909 = vld [vmem:[%s5 + $0x60] sm:$0xff]
        %v1910 = vld [vmem:[%s5 + $0x68] sm:$0xff]
        %v1911 = vld [vmem:[%s5 + $0x70] sm:$0xff]
        %v1912 = vld [vmem:[%s5 + $0x78] sm:$0xff]
        %1914 = vset.pattern.permute.xlu0 0
        %1915 = vperm.xlu0 %1914, %v1897
        %v1916 = vpop.permute.xlu0 %1915
        %1919 = vset.pattern.permute.xlu0 0
        %1920 = vperm.xlu0 %1919, %v1898
        %v1921 = vpop.permute.xlu0 %1920
        %1924 = vset.pattern.permute.xlu0 0
        %1925 = vperm.xlu0 %1924, %v1899
        %v1926 = vpop.permute.xlu0 %1925
        %1929 = vset.pattern.permute.xlu0 0
        %1930 = vperm.xlu0 %1929, %v1900
        %v1931 = vpop.permute.xlu0 %1930
        %1934 = vset.pattern.permute.xlu0 0
        %1935 = vperm.xlu0 %1934, %v1901
        %v1936 = vpop.permute.xlu0 %1935
        %1939 = vset.pattern.permute.xlu0 0
        %1940 = vperm.xlu0 %1939, %v1902
        %v1941 = vpop.permute.xlu0 %1940
        %1944 = vset.pattern.permute.xlu0 0
        %1945 = vperm.xlu0 %1944, %v1903
        %v1946 = vpop.permute.xlu0 %1945
        %1949 = vset.pattern.permute.xlu0 0
        %1950 = vperm.xlu0 %1949, %v1904
        %v1951 = vpop.permute.xlu0 %1950
        %1954 = vset.pattern.permute.xlu0 0
        %1955 = vperm.xlu0 %1954, %v1905
        %v1956 = vpop.permute.xlu0 %1955
        %1959 = vset.pattern.permute.xlu0 0
        %1960 = vperm.xlu0 %1959, %v1906
        %v1961 = vpop.permute.xlu0 %1960
        %1964 = vset.pattern.permute.xlu0 0
        %1965 = vperm.xlu0 %1964, %v1907
        %v1966 = vpop.permute.xlu0 %1965
        %1969 = vset.pattern.permute.xlu0 0
        %1970 = vperm.xlu0 %1969, %v1908
        %v1971 = vpop.permute.xlu0 %1970
        %1974 = vset.pattern.permute.xlu0 0
        %1975 = vperm.xlu0 %1974, %v1909
        %v1976 = vpop.permute.xlu0 %1975
        %1979 = vset.pattern.permute.xlu0 0
        %1980 = vperm.xlu0 %1979, %v1910
        %v1981 = vpop.permute.xlu0 %1980
        %1984 = vset.pattern.permute.xlu0 0
        %1985 = vperm.xlu0 %1984, %v1911
        %v1986 = vpop.permute.xlu0 %1985
        %1989 = vset.pattern.permute.xlu0 0
        %1990 = vperm.xlu0 %1989, %v1912
        %v1991 = vpop.permute.xlu0 %1990
        %v1993 = vmul.f32 %v1850, %v1916
        %v1994 = vmul.f32 %v1853, %v1921
        %v1995 = vmul.f32 %v1856, %v1926
        %v1996 = vmul.f32 %v1859, %v1931
        %v1997 = vmul.f32 %v1862, %v1936
        %v1998 = vmul.f32 %v1865, %v1941
        %v1999 = vmul.f32 %v1868, %v1946
        %v2000 = vmul.f32 %v1871, %v1951
        %v2001 = vmul.f32 %v1874, %v1956
        %v2002 = vmul.f32 %v1877, %v1961
        %v2003 = vmul.f32 %v1880, %v1966
        %v2004 = vmul.f32 %v1883, %v1971
        %v2005 = vmul.f32 %v1886, %v1976
        %v2006 = vmul.f32 %v1889, %v1981
        %v2007 = vmul.f32 %v1892, %v1986
        %v2008 = vmul.f32 %v1895, %v1991
        %v2009 = vld [vmem:[#allocation2 + $0x8] sm:$0xff]
        %v2010 = vld [vmem:[#allocation2 + $0x10] sm:$0xff]
        %v2011 = vld [vmem:[#allocation2 + $0x18] sm:$0xff]
        %v2012 = vld [vmem:[#allocation2 + $0x20] sm:$0xff]
        %v2013 = vld [vmem:[#allocation2 + $0x28] sm:$0xff]
        %v2014 = vld [vmem:[#allocation2 + $0x30] sm:$0xff]
        %v2015 = vld [vmem:[#allocation2 + $0x38] sm:$0xff]
        %v2016 = vld [vmem:[#allocation2 + $0x40] sm:$0xff]
        %v2017 = vld [vmem:[#allocation2 + $0x48] sm:$0xff]
        %v2018 = vld [vmem:[#allocation2 + $0x50] sm:$0xff]
        %v2019 = vld [vmem:[#allocation2 + $0x58] sm:$0xff]
        %v2020 = vld [vmem:[#allocation2 + $0x60] sm:$0xff]
        %v2021 = vld [vmem:[#allocation2 + $0x68] sm:$0xff]
        %v2022 = vld [vmem:[#allocation2 + $0x70] sm:$0xff]
        %v2023 = vld [vmem:[#allocation2 + $0x78] sm:$0xff]
        %v2024 = vld [vmem:[#allocation2 + $0x80] sm:$0xff]
        %v2025 = vld [vmem:[#allocation2 + $0x88] sm:$0xff]
        %v2026 = vld [vmem:[#allocation2 + $0x90] sm:$0xff]
        %v2027 = vld [vmem:[#allocation2 + $0x98] sm:$0xff]
        %v2028 = vld [vmem:[#allocation2 + $0xa0] sm:$0xff]
        %s2029 = scalar_lea.vmem [#allocation8], 384
        %v2030 = vld [vmem:[%s2029] sm:$0xff]
        %v2031 = vld [vmem:[%s2029 + $0x8] sm:$0xff]
        %v2032 = vld [vmem:[%s2029 + $0x10] sm:$0xff]
        %v2033 = vld [vmem:[%s2029 + $0x18] sm:$0xff]
        %v2034 = vld [vmem:[%s2029 + $0x20] sm:$0xff]
        %v2035 = vld [vmem:[%s2029 + $0x28] sm:$0xff]
        %v2036 = vld [vmem:[%s2029 + $0x30] sm:$0xff]
        %v2037 = vld [vmem:[%s2029 + $0x38] sm:$0xff]
        %v2038 = vld [vmem:[%s2029 + $0x40] sm:$0xff]
        %v2039 = vld [vmem:[%s2029 + $0x48] sm:$0xff]
        %v2040 = vld [vmem:[%s2029 + $0x50] sm:$0xff]
        %v2041 = vld [vmem:[%s2029 + $0x58] sm:$0xff]
        %v2042 = vld [vmem:[%s2029 + $0x60] sm:$0xff]
        %v2043 = vld [vmem:[%s2029 + $0x68] sm:$0xff]
        %v2044 = vld [vmem:[%s2029 + $0x70] sm:$0xff]
        %v2045 = vld [vmem:[%s2029 + $0x78] sm:$0xff]
        %v2046 = vld [vmem:[%s2029 + $0x80] sm:$0xff]
        %v2047 = vld [vmem:[%s2029 + $0x88] sm:$0xff]
        %v2048 = vld [vmem:[%s2029 + $0x90] sm:$0xff]
        %v2049 = vld [vmem:[%s2029 + $0x98] sm:$0xff]
        %v2050 = vld [vmem:[%s2029 + $0xa0] sm:$0xff]
        %v2051 = vld [vmem:[%s2029 + $0xa8] sm:$0xff]
        %v2052 = vld [vmem:[%s2029 + $0xb0] sm:$0xff]
        %v2053 = vld [vmem:[%s2029 + $0xb8] sm:$0xff]
        %v2054 = vld [vmem:[%s2029 + $0xc0] sm:$0xff]
        %v2055 = vld [vmem:[%s2029 + $0xc8] sm:$0xff]
        %v2056 = vld [vmem:[%s2029 + $0xd0] sm:$0xff]
        %v2057 = vld [vmem:[%s2029 + $0xd8] sm:$0xff]
        %v2058 = vld [vmem:[%s2029 + $0xe0] sm:$0xff]
        %v2059 = vld [vmem:[%s2029 + $0xe8] sm:$0xff]
        %v2060 = vld [vmem:[%s2029 + $0xf0] sm:$0xff]
        %v2061 = vld [vmem:[%s2029 + $0xf8] sm:$0xff]
        %v2062 = vld [vmem:[%s2029 + $0x100] sm:$0xff]
        %v2063 = vld [vmem:[%s2029 + $0x108] sm:$0xff]
        %v2064 = vld [vmem:[%s2029 + $0x110] sm:$0xff]
        %v2065 = vld [vmem:[%s2029 + $0x118] sm:$0xff]
        %v2066 = vld [vmem:[%s2029 + $0x120] sm:$0xff]
        %v2067 = vld [vmem:[%s2029 + $0x128] sm:$0xff]
        %v2068 = vld [vmem:[%s2029 + $0x130] sm:$0xff]
        %v2069 = vld [vmem:[%s2029 + $0x138] sm:$0xff]
        %v2070 = vld [vmem:[%s2029 + $0x140] sm:$0xff]
        %v2071 = vld [vmem:[%s2029 + $0x148] sm:$0xff]
        %v2072 = vld [vmem:[%s2029 + $0x150] sm:$0xff]
        %v2073 = vld [vmem:[%s2029 + $0x158] sm:$0xff]
        %v2074 = vld [vmem:[%s2029 + $0x160] sm:$0xff]
        %v2075 = vld [vmem:[%s2029 + $0x168] sm:$0xff]
        %v2076 = vld [vmem:[%s2029 + $0x170] sm:$0xff]
        %v2077 = vld [vmem:[%s2029 + $0x178] sm:$0xff]
        %2078 = vmatpush.msra.mxu0 %v2045
        %2079 = vmatpush.msra.mxu0 %v2044
        %2080 = vmatpush.msra.mxu0 %v2043
        %2081 = vmatpush.msra.mxu0 %v2042
        %2082 = vmatpush.msra.mxu0 %v2041
        %2083 = vmatpush.msra.mxu0 %v2040
        %2084 = vmatpush.msra.mxu0 %v2039
        %2085 = vmatpush.msra.mxu0 %v2038
        %2086 = vmatpush.msra.mxu0 %v2037
        %2087 = vmatpush.msra.mxu0 %v2036
        %2088 = vmatpush.msra.mxu0 %v2035
        %2089 = vmatpush.msra.mxu0 %v2034
        %2090 = vmatpush.msra.mxu0 %v2033
        %2091 = vmatpush.msra.mxu0 %v2032
        %2092 = vmatpush.msra.mxu0 %v2031
        %2093 = vmatpush.msra.mxu0 %v2030
        %2094 = vmatmul.f32.gmra.mxu0 %v2009
        %v2095 = vpop.f32.mrf.mxu0
        %v2096 = vadd.f32 0.0, %v2095
        %2097 = vmatmul.f32.gmra.mxu0 %v2010
        %v2098 = vpop.f32.mrf.mxu0
        %v2099 = vadd.f32 0.0, %v2098
        %2100 = vmatmul.f32.gmra.mxu0 %v2011
        %v2101 = vpop.f32.mrf.mxu0
        %v2102 = vadd.f32 0.0, %v2101
        %2103 = vmatmul.f32.gmra.mxu0 %v2012
        %v2104 = vpop.f32.mrf.mxu0
        %v2105 = vadd.f32 0.0, %v2104
        %2106 = vmatmul.f32.gmra.mxu0 %v2013
        %v2107 = vpop.f32.mrf.mxu0
        %v2108 = vadd.f32 0.0, %v2107
        %2109 = vmatmul.f32.gmra.mxu0 %v2014
        %v2110 = vpop.f32.mrf.mxu0
        %v2111 = vadd.f32 0.0, %v2110
        %2112 = vmatmul.f32.gmra.mxu0 %v2015
        %v2113 = vpop.f32.mrf.mxu0
        %v2114 = vadd.f32 0.0, %v2113
        %2115 = vmatmul.f32.gmra.mxu0 %v2016
        %v2116 = vpop.f32.mrf.mxu0
        %v2117 = vadd.f32 0.0, %v2116
        %2118 = vmatmul.f32.gmra.mxu0 %v2017
        %v2119 = vpop.f32.mrf.mxu0
        %v2120 = vadd.f32 0.0, %v2119
        %2121 = vmatmul.f32.gmra.mxu0 %v2018
        %v2122 = vpop.f32.mrf.mxu0
        %v2123 = vadd.f32 0.0, %v2122
        %2124 = vmatmul.f32.gmra.mxu0 %v2019
        %v2125 = vpop.f32.mrf.mxu0
        %v2126 = vadd.f32 0.0, %v2125
        %2127 = vmatmul.f32.gmra.mxu0 %v2020
        %v2128 = vpop.f32.mrf.mxu0
        %v2129 = vadd.f32 0.0, %v2128
        %2130 = vmatmul.f32.gmra.mxu0 %v2021
        %v2131 = vpop.f32.mrf.mxu0
        %v2132 = vadd.f32 0.0, %v2131
        %2133 = vmatmul.f32.gmra.mxu0 %v2022
        %v2134 = vpop.f32.mrf.mxu0
        %v2135 = vadd.f32 0.0, %v2134
        %2136 = vmatmul.f32.gmra.mxu0 %v2023
        %v2137 = vpop.f32.mrf.mxu0
        %v2138 = vadd.f32 0.0, %v2137
        %2139 = vmatmul.f32.gmra.mxu0 %v2024
        %v2140 = vpop.f32.mrf.mxu0
        %v2141 = vadd.f32 0.0, %v2140
        %2142 = vdwg.mxu0
        %2143 = vmatpush.msra.mxu0 %v2061
        %2144 = vmatpush.msra.mxu0 %v2060
        %2145 = vmatpush.msra.mxu0 %v2059
        %2146 = vmatpush.msra.mxu0 %v2058
        %2147 = vmatpush.msra.mxu0 %v2057
        %2148 = vmatpush.msra.mxu0 %v2056
        %2149 = vmatpush.msra.mxu0 %v2055
        %2150 = vmatpush.msra.mxu0 %v2054
        %2151 = vmatpush.msra.mxu0 %v2053
        %2152 = vmatpush.msra.mxu0 %v2052
        %2153 = vmatpush.msra.mxu0 %v2051
        %2154 = vmatpush.msra.mxu0 %v2050
        %2155 = vmatpush.msra.mxu0 %v2049
        %2156 = vmatpush.msra.mxu0 %v2048
        %2157 = vmatpush.msra.mxu0 %v2047
        %2158 = vmatpush.msra.mxu0 %v2046
        %2159 = vmatmul.f32.gmra.mxu0 %v2011
        %v2160 = vpop.f32.mrf.mxu0
        %v2161 = vadd.f32 %v2096, %v2160
        %2162 = vmatmul.f32.gmra.mxu0 %v2012
        %v2163 = vpop.f32.mrf.mxu0
        %v2164 = vadd.f32 %v2099, %v2163
        %2165 = vmatmul.f32.gmra.mxu0 %v2013
        %v2166 = vpop.f32.mrf.mxu0
        %v2167 = vadd.f32 %v2102, %v2166
        %2168 = vmatmul.f32.gmra.mxu0 %v2014
        %v2169 = vpop.f32.mrf.mxu0
        %v2170 = vadd.f32 %v2105, %v2169
        %2171 = vmatmul.f32.gmra.mxu0 %v2015
        %v2172 = vpop.f32.mrf.mxu0
        %v2173 = vadd.f32 %v2108, %v2172
        %2174 = vmatmul.f32.gmra.mxu0 %v2016
        %v2175 = vpop.f32.mrf.mxu0
        %v2176 = vadd.f32 %v2111, %v2175
        %2177 = vmatmul.f32.gmra.mxu0 %v2017
        %v2178 = vpop.f32.mrf.mxu0
        %v2179 = vadd.f32 %v2114, %v2178
        %2180 = vmatmul.f32.gmra.mxu0 %v2018
        %v2181 = vpop.f32.mrf.mxu0
        %v2182 = vadd.f32 %v2117, %v2181
        %2183 = vmatmul.f32.gmra.mxu0 %v2019
        %v2184 = vpop.f32.mrf.mxu0
        %v2185 = vadd.f32 %v2120, %v2184
        %2186 = vmatmul.f32.gmra.mxu0 %v2020
        %v2187 = vpop.f32.mrf.mxu0
        %v2188 = vadd.f32 %v2123, %v2187
        %2189 = vmatmul.f32.gmra.mxu0 %v2021
        %v2190 = vpop.f32.mrf.mxu0
        %v2191 = vadd.f32 %v2126, %v2190
        %2192 = vmatmul.f32.gmra.mxu0 %v2022
        %v2193 = vpop.f32.mrf.mxu0
        %v2194 = vadd.f32 %v2129, %v2193
        %2195 = vmatmul.f32.gmra.mxu0 %v2023
        %v2196 = vpop.f32.mrf.mxu0
        %v2197 = vadd.f32 %v2132, %v2196
        %2198 = vmatmul.f32.gmra.mxu0 %v2024
        %v2199 = vpop.f32.mrf.mxu0
        %v2200 = vadd.f32 %v2135, %v2199
        %2201 = vmatmul.f32.gmra.mxu0 %v2025
        %v2202 = vpop.f32.mrf.mxu0
        %v2203 = vadd.f32 %v2138, %v2202
        %2204 = vmatmul.f32.gmra.mxu0 %v2026
        %v2205 = vpop.f32.mrf.mxu0
        %v2206 = vadd.f32 %v2141, %v2205
        %2207 = vdwg.mxu0
        %2208 = vmatpush.msra.mxu0 %v2077
        %2209 = vmatpush.msra.mxu0 %v2076
        %2210 = vmatpush.msra.mxu0 %v2075
        %2211 = vmatpush.msra.mxu0 %v2074
        %2212 = vmatpush.msra.mxu0 %v2073
        %2213 = vmatpush.msra.mxu0 %v2072
        %2214 = vmatpush.msra.mxu0 %v2071
        %2215 = vmatpush.msra.mxu0 %v2070
        %2216 = vmatpush.msra.mxu0 %v2069
        %2217 = vmatpush.msra.mxu0 %v2068
        %2218 = vmatpush.msra.mxu0 %v2067
        %2219 = vmatpush.msra.mxu0 %v2066
        %2220 = vmatpush.msra.mxu0 %v2065
        %2221 = vmatpush.msra.mxu0 %v2064
        %2222 = vmatpush.msra.mxu0 %v2063
        %2223 = vmatpush.msra.mxu0 %v2062
        %2224 = vmatmul.f32.gmra.mxu0 %v2013
        %v2225 = vpop.f32.mrf.mxu0
        %v2226 = vadd.f32 %v2161, %v2225
        %2227 = vmatmul.f32.gmra.mxu0 %v2014
        %v2228 = vpop.f32.mrf.mxu0
        %v2229 = vadd.f32 %v2164, %v2228
        %2230 = vmatmul.f32.gmra.mxu0 %v2015
        %v2231 = vpop.f32.mrf.mxu0
        %v2232 = vadd.f32 %v2167, %v2231
        %2233 = vmatmul.f32.gmra.mxu0 %v2016
        %v2234 = vpop.f32.mrf.mxu0
        %v2235 = vadd.f32 %v2170, %v2234
        %2236 = vmatmul.f32.gmra.mxu0 %v2017
        %v2237 = vpop.f32.mrf.mxu0
        %v2238 = vadd.f32 %v2173, %v2237
        %2239 = vmatmul.f32.gmra.mxu0 %v2018
        %v2240 = vpop.f32.mrf.mxu0
        %v2241 = vadd.f32 %v2176, %v2240
        %2242 = vmatmul.f32.gmra.mxu0 %v2019
        %v2243 = vpop.f32.mrf.mxu0
        %v2244 = vadd.f32 %v2179, %v2243
        %2245 = vmatmul.f32.gmra.mxu0 %v2020
        %v2246 = vpop.f32.mrf.mxu0
        %v2247 = vadd.f32 %v2182, %v2246
        %2248 = vmatmul.f32.gmra.mxu0 %v2021
        %v2249 = vpop.f32.mrf.mxu0
        %v2250 = vadd.f32 %v2185, %v2249
        %2251 = vmatmul.f32.gmra.mxu0 %v2022
        %v2252 = vpop.f32.mrf.mxu0
        %v2253 = vadd.f32 %v2188, %v2252
        %2254 = vmatmul.f32.gmra.mxu0 %v2023
        %v2255 = vpop.f32.mrf.mxu0
        %v2256 = vadd.f32 %v2191, %v2255
        %2257 = vmatmul.f32.gmra.mxu0 %v2024
        %v2258 = vpop.f32.mrf.mxu0
        %v2259 = vadd.f32 %v2194, %v2258
        %2260 = vmatmul.f32.gmra.mxu0 %v2025
        %v2261 = vpop.f32.mrf.mxu0
        %v2262 = vadd.f32 %v2197, %v2261
        %2263 = vmatmul.f32.gmra.mxu0 %v2026
        %v2264 = vpop.f32.mrf.mxu0
        %v2265 = vadd.f32 %v2200, %v2264
        %2266 = vmatmul.f32.gmra.mxu0 %v2027
        %v2267 = vpop.f32.mrf.mxu0
        %v2268 = vadd.f32 %v2203, %v2267
        %2269 = vmatmul.f32.gmra.mxu0 %v2028
        %v2270 = vpop.f32.mrf.mxu0
        %v2271 = vadd.f32 %v2206, %v2270
        %2272 = vdwg.mxu0
        %v2273 = vadd.f32 %v1993, %v2226
        %v2274 = vadd.f32 %v1994, %v2229
        %v2275 = vadd.f32 %v1995, %v2232
        %v2276 = vadd.f32 %v1996, %v2235
        %v2277 = vadd.f32 %v1997, %v2238
        %v2278 = vadd.f32 %v1998, %v2241
        %v2279 = vadd.f32 %v1999, %v2244
        %v2280 = vadd.f32 %v2000, %v2247
        %v2281 = vadd.f32 %v2001, %v2250
        %v2282 = vadd.f32 %v2002, %v2253
        %v2283 = vadd.f32 %v2003, %v2256
        %v2284 = vadd.f32 %v2004, %v2259
        %v2285 = vadd.f32 %v2005, %v2262
        %v2286 = vadd.f32 %v2006, %v2265
        %v2287 = vadd.f32 %v2007, %v2268
        %v2288 = vadd.f32 %v2008, %v2271
        %v2289 = vld [vmem:[#allocation2 + $0x9] sm:$0xff]
        %v2290 = vld [vmem:[#allocation2 + $0x11] sm:$0xff]
        %v2291 = vld [vmem:[#allocation2 + $0x19] sm:$0xff]
        %v2292 = vld [vmem:[#allocation2 + $0x21] sm:$0xff]
        %v2293 = vld [vmem:[#allocation2 + $0x29] sm:$0xff]
        %v2294 = vld [vmem:[#allocation2 + $0x31] sm:$0xff]
        %v2295 = vld [vmem:[#allocation2 + $0x39] sm:$0xff]
        %v2296 = vld [vmem:[#allocation2 + $0x41] sm:$0xff]
        %v2297 = vld [vmem:[#allocation2 + $0x49] sm:$0xff]
        %v2298 = vld [vmem:[#allocation2 + $0x51] sm:$0xff]
        %v2299 = vld [vmem:[#allocation2 + $0x59] sm:$0xff]
        %v2300 = vld [vmem:[#allocation2 + $0x61] sm:$0xff]
        %v2301 = vld [vmem:[#allocation2 + $0x69] sm:$0xff]
        %v2302 = vld [vmem:[#allocation2 + $0x71] sm:$0xff]
        %v2303 = vld [vmem:[#allocation2 + $0x79] sm:$0xff]
        %v2304 = vld [vmem:[#allocation2 + $0x81] sm:$0xff]
        %v2305 = vld [vmem:[#allocation2 + $0x89] sm:$0xff]
        %v2306 = vld [vmem:[#allocation2 + $0x91] sm:$0xff]
        %v2307 = vld [vmem:[#allocation2 + $0x99] sm:$0xff]
        %v2308 = vld [vmem:[#allocation2 + $0xa1] sm:$0xff]
        %s2309 = scalar_lea.vmem [#allocation8], 768
        %v2310 = vld [vmem:[%s2309] sm:$0xff]
        %v2311 = vld [vmem:[%s2309 + $0x8] sm:$0xff]
        %v2312 = vld [vmem:[%s2309 + $0x10] sm:$0xff]
        %v2313 = vld [vmem:[%s2309 + $0x18] sm:$0xff]
        %v2314 = vld [vmem:[%s2309 + $0x20] sm:$0xff]
        %v2315 = vld [vmem:[%s2309 + $0x28] sm:$0xff]
        %v2316 = vld [vmem:[%s2309 + $0x30] sm:$0xff]
        %v2317 = vld [vmem:[%s2309 + $0x38] sm:$0xff]
        %v2318 = vld [vmem:[%s2309 + $0x40] sm:$0xff]
        %v2319 = vld [vmem:[%s2309 + $0x48] sm:$0xff]
        %v2320 = vld [vmem:[%s2309 + $0x50] sm:$0xff]
        %v2321 = vld [vmem:[%s2309 + $0x58] sm:$0xff]
        %v2322 = vld [vmem:[%s2309 + $0x60] sm:$0xff]
        %v2323 = vld [vmem:[%s2309 + $0x68] sm:$0xff]
        %v2324 = vld [vmem:[%s2309 + $0x70] sm:$0xff]
        %v2325 = vld [vmem:[%s2309 + $0x78] sm:$0xff]
        %v2326 = vld [vmem:[%s2309 + $0x80] sm:$0xff]
        %v2327 = vld [vmem:[%s2309 + $0x88] sm:$0xff]
        %v2328 = vld [vmem:[%s2309 + $0x90] sm:$0xff]
        %v2329 = vld [vmem:[%s2309 + $0x98] sm:$0xff]
        %v2330 = vld [vmem:[%s2309 + $0xa0] sm:$0xff]
        %v2331 = vld [vmem:[%s2309 + $0xa8] sm:$0xff]
        %v2332 = vld [vmem:[%s2309 + $0xb0] sm:$0xff]
        %v2333 = vld [vmem:[%s2309 + $0xb8] sm:$0xff]
        %v2334 = vld [vmem:[%s2309 + $0xc0] sm:$0xff]
        %v2335 = vld [vmem:[%s2309 + $0xc8] sm:$0xff]
        %v2336 = vld [vmem:[%s2309 + $0xd0] sm:$0xff]
        %v2337 = vld [vmem:[%s2309 + $0xd8] sm:$0xff]
        %v2338 = vld [vmem:[%s2309 + $0xe0] sm:$0xff]
        %v2339 = vld [vmem:[%s2309 + $0xe8] sm:$0xff]
        %v2340 = vld [vmem:[%s2309 + $0xf0] sm:$0xff]
        %v2341 = vld [vmem:[%s2309 + $0xf8] sm:$0xff]
        %v2342 = vld [vmem:[%s2309 + $0x100] sm:$0xff]
        %v2343 = vld [vmem:[%s2309 + $0x108] sm:$0xff]
        %v2344 = vld [vmem:[%s2309 + $0x110] sm:$0xff]
        %v2345 = vld [vmem:[%s2309 + $0x118] sm:$0xff]
        %v2346 = vld [vmem:[%s2309 + $0x120] sm:$0xff]
        %v2347 = vld [vmem:[%s2309 + $0x128] sm:$0xff]
        %v2348 = vld [vmem:[%s2309 + $0x130] sm:$0xff]
        %v2349 = vld [vmem:[%s2309 + $0x138] sm:$0xff]
        %v2350 = vld [vmem:[%s2309 + $0x140] sm:$0xff]
        %v2351 = vld [vmem:[%s2309 + $0x148] sm:$0xff]
        %v2352 = vld [vmem:[%s2309 + $0x150] sm:$0xff]
        %v2353 = vld [vmem:[%s2309 + $0x158] sm:$0xff]
        %v2354 = vld [vmem:[%s2309 + $0x160] sm:$0xff]
        %v2355 = vld [vmem:[%s2309 + $0x168] sm:$0xff]
        %v2356 = vld [vmem:[%s2309 + $0x170] sm:$0xff]
        %v2357 = vld [vmem:[%s2309 + $0x178] sm:$0xff]
        %2358 = vmatpush.msra.mxu0 %v2325
        %2359 = vmatpush.msra.mxu0 %v2324
        %2360 = vmatpush.msra.mxu0 %v2323
        %2361 = vmatpush.msra.mxu0 %v2322
        %2362 = vmatpush.msra.mxu0 %v2321
        %2363 = vmatpush.msra.mxu0 %v2320
        %2364 = vmatpush.msra.mxu0 %v2319
        %2365 = vmatpush.msra.mxu0 %v2318
        %2366 = vmatpush.msra.mxu0 %v2317
        %2367 = vmatpush.msra.mxu0 %v2316
        %2368 = vmatpush.msra.mxu0 %v2315
        %2369 = vmatpush.msra.mxu0 %v2314
        %2370 = vmatpush.msra.mxu0 %v2313
        %2371 = vmatpush.msra.mxu0 %v2312
        %2372 = vmatpush.msra.mxu0 %v2311
        %2373 = vmatpush.msra.mxu0 %v2310
        %2374 = vmatmul.f32.gmra.mxu0 %v2289
        %v2375 = vpop.f32.mrf.mxu0
        %v2376 = vadd.f32 0.0, %v2375
        %2377 = vmatmul.f32.gmra.mxu0 %v2290
        %v2378 = vpop.f32.mrf.mxu0
        %v2379 = vadd.f32 0.0, %v2378
        %2380 = vmatmul.f32.gmra.mxu0 %v2291
        %v2381 = vpop.f32.mrf.mxu0
        %v2382 = vadd.f32 0.0, %v2381
        %2383 = vmatmul.f32.gmra.mxu0 %v2292
        %v2384 = vpop.f32.mrf.mxu0
        %v2385 = vadd.f32 0.0, %v2384
        %2386 = vmatmul.f32.gmra.mxu0 %v2293
        %v2387 = vpop.f32.mrf.mxu0
        %v2388 = vadd.f32 0.0, %v2387
        %2389 = vmatmul.f32.gmra.mxu0 %v2294
        %v2390 = vpop.f32.mrf.mxu0
        %v2391 = vadd.f32 0.0, %v2390
        %2392 = vmatmul.f32.gmra.mxu0 %v2295
        %v2393 = vpop.f32.mrf.mxu0
        %v2394 = vadd.f32 0.0, %v2393
        %2395 = vmatmul.f32.gmra.mxu0 %v2296
        %v2396 = vpop.f32.mrf.mxu0
        %v2397 = vadd.f32 0.0, %v2396
        %2398 = vmatmul.f32.gmra.mxu0 %v2297
        %v2399 = vpop.f32.mrf.mxu0
        %v2400 = vadd.f32 0.0, %v2399
        %2401 = vmatmul.f32.gmra.mxu0 %v2298
        %v2402 = vpop.f32.mrf.mxu0
        %v2403 = vadd.f32 0.0, %v2402
        %2404 = vmatmul.f32.gmra.mxu0 %v2299
        %v2405 = vpop.f32.mrf.mxu0
        %v2406 = vadd.f32 0.0, %v2405
        %2407 = vmatmul.f32.gmra.mxu0 %v2300
        %v2408 = vpop.f32.mrf.mxu0
        %v2409 = vadd.f32 0.0, %v2408
        %2410 = vmatmul.f32.gmra.mxu0 %v2301
        %v2411 = vpop.f32.mrf.mxu0
        %v2412 = vadd.f32 0.0, %v2411
        %2413 = vmatmul.f32.gmra.mxu0 %v2302
        %v2414 = vpop.f32.mrf.mxu0
        %v2415 = vadd.f32 0.0, %v2414
        %2416 = vmatmul.f32.gmra.mxu0 %v2303
        %v2417 = vpop.f32.mrf.mxu0
        %v2418 = vadd.f32 0.0, %v2417
        %2419 = vmatmul.f32.gmra.mxu0 %v2304
        %v2420 = vpop.f32.mrf.mxu0
        %v2421 = vadd.f32 0.0, %v2420
        %2422 = vdwg.mxu0
        %2423 = vmatpush.msra.mxu0 %v2341
        %2424 = vmatpush.msra.mxu0 %v2340
        %2425 = vmatpush.msra.mxu0 %v2339
        %2426 = vmatpush.msra.mxu0 %v2338
        %2427 = vmatpush.msra.mxu0 %v2337
        %2428 = vmatpush.msra.mxu0 %v2336
        %2429 = vmatpush.msra.mxu0 %v2335
        %2430 = vmatpush.msra.mxu0 %v2334
        %2431 = vmatpush.msra.mxu0 %v2333
        %2432 = vmatpush.msra.mxu0 %v2332
        %2433 = vmatpush.msra.mxu0 %v2331
        %2434 = vmatpush.msra.mxu0 %v2330
        %2435 = vmatpush.msra.mxu0 %v2329
        %2436 = vmatpush.msra.mxu0 %v2328
        %2437 = vmatpush.msra.mxu0 %v2327
        %2438 = vmatpush.msra.mxu0 %v2326
        %2439 = vmatmul.f32.gmra.mxu0 %v2291
        %v2440 = vpop.f32.mrf.mxu0
        %v2441 = vadd.f32 %v2376, %v2440
        %2442 = vmatmul.f32.gmra.mxu0 %v2292
        %v2443 = vpop.f32.mrf.mxu0
        %v2444 = vadd.f32 %v2379, %v2443
        %2445 = vmatmul.f32.gmra.mxu0 %v2293
        %v2446 = vpop.f32.mrf.mxu0
        %v2447 = vadd.f32 %v2382, %v2446
        %2448 = vmatmul.f32.gmra.mxu0 %v2294
        %v2449 = vpop.f32.mrf.mxu0
        %v2450 = vadd.f32 %v2385, %v2449
        %2451 = vmatmul.f32.gmra.mxu0 %v2295
        %v2452 = vpop.f32.mrf.mxu0
        %v2453 = vadd.f32 %v2388, %v2452
        %2454 = vmatmul.f32.gmra.mxu0 %v2296
        %v2455 = vpop.f32.mrf.mxu0
        %v2456 = vadd.f32 %v2391, %v2455
        %2457 = vmatmul.f32.gmra.mxu0 %v2297
        %v2458 = vpop.f32.mrf.mxu0
        %v2459 = vadd.f32 %v2394, %v2458
        %2460 = vmatmul.f32.gmra.mxu0 %v2298
        %v2461 = vpop.f32.mrf.mxu0
        %v2462 = vadd.f32 %v2397, %v2461
        %2463 = vmatmul.f32.gmra.mxu0 %v2299
        %v2464 = vpop.f32.mrf.mxu0
        %v2465 = vadd.f32 %v2400, %v2464
        %2466 = vmatmul.f32.gmra.mxu0 %v2300
        %v2467 = vpop.f32.mrf.mxu0
        %v2468 = vadd.f32 %v2403, %v2467
        %2469 = vmatmul.f32.gmra.mxu0 %v2301
        %v2470 = vpop.f32.mrf.mxu0
        %v2471 = vadd.f32 %v2406, %v2470
        %2472 = vmatmul.f32.gmra.mxu0 %v2302
        %v2473 = vpop.f32.mrf.mxu0
        %v2474 = vadd.f32 %v2409, %v2473
        %2475 = vmatmul.f32.gmra.mxu0 %v2303
        %v2476 = vpop.f32.mrf.mxu0
        %v2477 = vadd.f32 %v2412, %v2476
        %2478 = vmatmul.f32.gmra.mxu0 %v2304
        %v2479 = vpop.f32.mrf.mxu0
        %v2480 = vadd.f32 %v2415, %v2479
        %2481 = vmatmul.f32.gmra.mxu0 %v2305
        %v2482 = vpop.f32.mrf.mxu0
        %v2483 = vadd.f32 %v2418, %v2482
        %2484 = vmatmul.f32.gmra.mxu0 %v2306
        %v2485 = vpop.f32.mrf.mxu0
        %v2486 = vadd.f32 %v2421, %v2485
        %2487 = vdwg.mxu0
        %2488 = vmatpush.msra.mxu0 %v2357
        %2489 = vmatpush.msra.mxu0 %v2356
        %2490 = vmatpush.msra.mxu0 %v2355
        %2491 = vmatpush.msra.mxu0 %v2354
        %2492 = vmatpush.msra.mxu0 %v2353
        %2493 = vmatpush.msra.mxu0 %v2352
        %2494 = vmatpush.msra.mxu0 %v2351
        %2495 = vmatpush.msra.mxu0 %v2350
        %2496 = vmatpush.msra.mxu0 %v2349
        %2497 = vmatpush.msra.mxu0 %v2348
        %2498 = vmatpush.msra.mxu0 %v2347
        %2499 = vmatpush.msra.mxu0 %v2346
        %2500 = vmatpush.msra.mxu0 %v2345
        %2501 = vmatpush.msra.mxu0 %v2344
        %2502 = vmatpush.msra.mxu0 %v2343
        %2503 = vmatpush.msra.mxu0 %v2342
        %2504 = vmatmul.f32.gmra.mxu0 %v2293
        %v2505 = vpop.f32.mrf.mxu0
        %v2506 = vadd.f32 %v2441, %v2505
        %2507 = vmatmul.f32.gmra.mxu0 %v2294
        %v2508 = vpop.f32.mrf.mxu0
        %v2509 = vadd.f32 %v2444, %v2508
        %2510 = vmatmul.f32.gmra.mxu0 %v2295
        %v2511 = vpop.f32.mrf.mxu0
        %v2512 = vadd.f32 %v2447, %v2511
        %2513 = vmatmul.f32.gmra.mxu0 %v2296
        %v2514 = vpop.f32.mrf.mxu0
        %v2515 = vadd.f32 %v2450, %v2514
        %2516 = vmatmul.f32.gmra.mxu0 %v2297
        %v2517 = vpop.f32.mrf.mxu0
        %v2518 = vadd.f32 %v2453, %v2517
        %2519 = vmatmul.f32.gmra.mxu0 %v2298
        %v2520 = vpop.f32.mrf.mxu0
        %v2521 = vadd.f32 %v2456, %v2520
        %2522 = vmatmul.f32.gmra.mxu0 %v2299
        %v2523 = vpop.f32.mrf.mxu0
        %v2524 = vadd.f32 %v2459, %v2523
        %2525 = vmatmul.f32.gmra.mxu0 %v2300
        %v2526 = vpop.f32.mrf.mxu0
        %v2527 = vadd.f32 %v2462, %v2526
        %2528 = vmatmul.f32.gmra.mxu0 %v2301
        %v2529 = vpop.f32.mrf.mxu0
        %v2530 = vadd.f32 %v2465, %v2529
        %2531 = vmatmul.f32.gmra.mxu0 %v2302
        %v2532 = vpop.f32.mrf.mxu0
        %v2533 = vadd.f32 %v2468, %v2532
        %2534 = vmatmul.f32.gmra.mxu0 %v2303
        %v2535 = vpop.f32.mrf.mxu0
        %v2536 = vadd.f32 %v2471, %v2535
        %2537 = vmatmul.f32.gmra.mxu0 %v2304
        %v2538 = vpop.f32.mrf.mxu0
        %v2539 = vadd.f32 %v2474, %v2538
        %2540 = vmatmul.f32.gmra.mxu0 %v2305
        %v2541 = vpop.f32.mrf.mxu0
        %v2542 = vadd.f32 %v2477, %v2541
        %2543 = vmatmul.f32.gmra.mxu0 %v2306
        %v2544 = vpop.f32.mrf.mxu0
        %v2545 = vadd.f32 %v2480, %v2544
        %2546 = vmatmul.f32.gmra.mxu0 %v2307
        %v2547 = vpop.f32.mrf.mxu0
        %v2548 = vadd.f32 %v2483, %v2547
        %2549 = vmatmul.f32.gmra.mxu0 %v2308
        %v2550 = vpop.f32.mrf.mxu0
        %v2551 = vadd.f32 %v2486, %v2550
        %2552 = vdwg.mxu0
        %v2553 = vld [vmem:[%s1395] sm:$0xff]
        %v2554 = vld [vmem:[%s1395 + $0x8] sm:$0xff]
        %v2555 = vld [vmem:[%s1395 + $0x10] sm:$0xff]
        %v2556 = vld [vmem:[%s1395 + $0x18] sm:$0xff]
        %v2557 = vld [vmem:[%s1395 + $0x20] sm:$0xff]
        %v2558 = vld [vmem:[%s1395 + $0x28] sm:$0xff]
        %v2559 = vld [vmem:[%s1395 + $0x30] sm:$0xff]
        %v2560 = vld [vmem:[%s1395 + $0x38] sm:$0xff]
        %v2561 = vld [vmem:[%s1395 + $0x40] sm:$0xff]
        %v2562 = vld [vmem:[%s1395 + $0x48] sm:$0xff]
        %v2563 = vld [vmem:[%s1395 + $0x50] sm:$0xff]
        %v2564 = vld [vmem:[%s1395 + $0x58] sm:$0xff]
        %v2565 = vld [vmem:[%s1395 + $0x60] sm:$0xff]
        %v2566 = vld [vmem:[%s1395 + $0x68] sm:$0xff]
        %v2567 = vld [vmem:[%s1395 + $0x70] sm:$0xff]
        %v2568 = vld [vmem:[%s1395 + $0x78] sm:$0xff]
        %2570 = vset.pattern.permute.xlu0 0
        %2571 = vperm.xlu0 %2570, %v2553
        %v2572 = vpop.permute.xlu0 %2571
        %2575 = vset.pattern.permute.xlu0 0
        %2576 = vperm.xlu0 %2575, %v2554
        %v2577 = vpop.permute.xlu0 %2576
        %2580 = vset.pattern.permute.xlu0 0
        %2581 = vperm.xlu0 %2580, %v2555
        %v2582 = vpop.permute.xlu0 %2581
        %2585 = vset.pattern.permute.xlu0 0
        %2586 = vperm.xlu0 %2585, %v2556
        %v2587 = vpop.permute.xlu0 %2586
        %2590 = vset.pattern.permute.xlu0 0
        %2591 = vperm.xlu0 %2590, %v2557
        %v2592 = vpop.permute.xlu0 %2591
        %2595 = vset.pattern.permute.xlu0 0
        %2596 = vperm.xlu0 %2595, %v2558
        %v2597 = vpop.permute.xlu0 %2596
        %2600 = vset.pattern.permute.xlu0 0
        %2601 = vperm.xlu0 %2600, %v2559
        %v2602 = vpop.permute.xlu0 %2601
        %2605 = vset.pattern.permute.xlu0 0
        %2606 = vperm.xlu0 %2605, %v2560
        %v2607 = vpop.permute.xlu0 %2606
        %2610 = vset.pattern.permute.xlu0 0
        %2611 = vperm.xlu0 %2610, %v2561
        %v2612 = vpop.permute.xlu0 %2611
        %2615 = vset.pattern.permute.xlu0 0
        %2616 = vperm.xlu0 %2615, %v2562
        %v2617 = vpop.permute.xlu0 %2616
        %2620 = vset.pattern.permute.xlu0 0
        %2621 = vperm.xlu0 %2620, %v2563
        %v2622 = vpop.permute.xlu0 %2621
        %2625 = vset.pattern.permute.xlu0 0
        %2626 = vperm.xlu0 %2625, %v2564
        %v2627 = vpop.permute.xlu0 %2626
        %2630 = vset.pattern.permute.xlu0 0
        %2631 = vperm.xlu0 %2630, %v2565
        %v2632 = vpop.permute.xlu0 %2631
        %2635 = vset.pattern.permute.xlu0 0
        %2636 = vperm.xlu0 %2635, %v2566
        %v2637 = vpop.permute.xlu0 %2636
        %2640 = vset.pattern.permute.xlu0 0
        %2641 = vperm.xlu0 %2640, %v2567
        %v2642 = vpop.permute.xlu0 %2641
        %2645 = vset.pattern.permute.xlu0 0
        %2646 = vperm.xlu0 %2645, %v2568
        %v2647 = vpop.permute.xlu0 %2646
        %v2649 = vmul.f32 %v2506, %v2572
        %v2650 = vmul.f32 %v2509, %v2577
        %v2651 = vmul.f32 %v2512, %v2582
        %v2652 = vmul.f32 %v2515, %v2587
        %v2653 = vmul.f32 %v2518, %v2592
        %v2654 = vmul.f32 %v2521, %v2597
        %v2655 = vmul.f32 %v2524, %v2602
        %v2656 = vmul.f32 %v2527, %v2607
        %v2657 = vmul.f32 %v2530, %v2612
        %v2658 = vmul.f32 %v2533, %v2617
        %v2659 = vmul.f32 %v2536, %v2622
        %v2660 = vmul.f32 %v2539, %v2627
        %v2661 = vmul.f32 %v2542, %v2632
        %v2662 = vmul.f32 %v2545, %v2637
        %v2663 = vmul.f32 %v2548, %v2642
        %v2664 = vmul.f32 %v2551, %v2647
        %v2665 = vadd.f32 %v2273, %v2649
        %v2666 = vadd.f32 %v2274, %v2650
        %v2667 = vadd.f32 %v2275, %v2651
        %v2668 = vadd.f32 %v2276, %v2652
        %v2669 = vadd.f32 %v2277, %v2653
        %v2670 = vadd.f32 %v2278, %v2654
        %v2671 = vadd.f32 %v2279, %v2655
        %v2672 = vadd.f32 %v2280, %v2656
        %v2673 = vadd.f32 %v2281, %v2657
        %v2674 = vadd.f32 %v2282, %v2658
        %v2675 = vadd.f32 %v2283, %v2659
        %v2676 = vadd.f32 %v2284, %v2660
        %v2677 = vadd.f32 %v2285, %v2661
        %v2678 = vadd.f32 %v2286, %v2662
        %v2679 = vadd.f32 %v2287, %v2663
        %v2680 = vadd.f32 %v2288, %v2664
        %v2681 = vld [vmem:[%s4] sm:$0x1]
        %v2683 = vperm.slane %v2681, 0
        %v2685 = vadd.f32 %v2665, %v2683
        %v2686 = vadd.f32 %v2666, %v2683
        %v2687 = vadd.f32 %v2667, %v2683
        %v2688 = vadd.f32 %v2668, %v2683
        %v2689 = vadd.f32 %v2669, %v2683
        %v2690 = vadd.f32 %v2670, %v2683
        %v2691 = vadd.f32 %v2671, %v2683
        %v2692 = vadd.f32 %v2672, %v2683
        %v2693 = vadd.f32 %v2673, %v2683
        %v2694 = vadd.f32 %v2674, %v2683
        %v2695 = vadd.f32 %v2675, %v2683
        %v2696 = vadd.f32 %v2676, %v2683
        %v2697 = vadd.f32 %v2677, %v2683
        %v2698 = vadd.f32 %v2678, %v2683
        %v2699 = vadd.f32 %v2679, %v2683
        %v2700 = vadd.f32 %v2680, %v2683
        %v2701 = vld [vmem:[%s283 + $0x28] sm:$0xff]
        %v2702 = vld [vmem:[%s283 + $0x30] sm:$0xff]
        %v2703 = vld [vmem:[%s283 + $0x38] sm:$0xff]
        %v2704 = vld [vmem:[%s283 + $0x40] sm:$0xff]
        %v2705 = vld [vmem:[%s283 + $0x48] sm:$0xff]
        %v2706 = vld [vmem:[%s283 + $0x50] sm:$0xff]
        %v2707 = vld [vmem:[%s283 + $0x58] sm:$0xff]
        %v2708 = vld [vmem:[%s283 + $0x60] sm:$0xff]
        %v2709 = vld [vmem:[%s283 + $0x68] sm:$0xff]
        %v2710 = vld [vmem:[%s283 + $0x70] sm:$0xff]
        %v2711 = vld [vmem:[%s283 + $0x78] sm:$0xff]
        %v2712 = vld [vmem:[%s283 + $0x80] sm:$0xff]
        %v2713 = vld [vmem:[%s283 + $0x88] sm:$0xff]
        %v2714 = vld [vmem:[%s283 + $0x90] sm:$0xff]
        %v2715 = vld [vmem:[%s283 + $0x98] sm:$0xff]
        %v2716 = vld [vmem:[%s283 + $0xa0] sm:$0xff]
        %v2717 = vadd.f32 %v2685, %v2701
        %v2718 = vadd.f32 %v2686, %v2702
        %v2719 = vadd.f32 %v2687, %v2703
        %v2720 = vadd.f32 %v2688, %v2704
        %v2721 = vadd.f32 %v2689, %v2705
        %v2722 = vadd.f32 %v2690, %v2706
        %v2723 = vadd.f32 %v2691, %v2707
        %v2724 = vadd.f32 %v2692, %v2708
        %v2725 = vadd.f32 %v2693, %v2709
        %v2726 = vadd.f32 %v2694, %v2710
        %v2727 = vadd.f32 %v2695, %v2711
        %v2728 = vadd.f32 %v2696, %v2712
        %v2729 = vadd.f32 %v2697, %v2713
        %v2730 = vadd.f32 %v2698, %v2714
        %v2731 = vadd.f32 %v2699, %v2715
        %v2732 = vadd.f32 %v2700, %v2716
        %v2733 = vmax.f32 %v2717, 0.0
        %v2734 = vmax.f32 %v2718, 0.0
        %v2735 = vmax.f32 %v2719, 0.0
        %v2736 = vmax.f32 %v2720, 0.0
        %v2737 = vmax.f32 %v2721, 0.0
        %v2738 = vmax.f32 %v2722, 0.0
        %v2739 = vmax.f32 %v2723, 0.0
        %v2740 = vmax.f32 %v2724, 0.0
        %v2741 = vmax.f32 %v2725, 0.0
        %v2742 = vmax.f32 %v2726, 0.0
        %v2743 = vmax.f32 %v2727, 0.0
        %v2744 = vmax.f32 %v2728, 0.0
        %v2745 = vmax.f32 %v2729, 0.0
        %v2746 = vmax.f32 %v2730, 0.0
        %v2747 = vmax.f32 %v2731, 0.0
        %v2748 = vmax.f32 %v2732, 0.0
        %2749 = vst [vmem:[%s322] sm:$0xff] %v2733
        %2750 = vst [vmem:[%s322 + $0x8] sm:$0xff] %v2734
        %2751 = vst [vmem:[%s322 + $0x10] sm:$0xff] %v2735
        %2752 = vst [vmem:[%s322 + $0x18] sm:$0xff] %v2736
        %2753 = vst [vmem:[%s322 + $0x20] sm:$0xff] %v2737
        %2754 = vst [vmem:[%s322 + $0x28] sm:$0xff] %v2738
        %2755 = vst [vmem:[%s322 + $0x30] sm:$0xff] %v2739
        %2756 = vst [vmem:[%s322 + $0x38] sm:$0xff] %v2740
        %2757 = vst [vmem:[%s322 + $0x40] sm:$0xff] %v2741
        %2758 = vst [vmem:[%s322 + $0x48] sm:$0xff] %v2742
        %2759 = vst [vmem:[%s322 + $0x50] sm:$0xff] %v2743
        %2760 = vst [vmem:[%s322 + $0x58] sm:$0xff] %v2744
        %2761 = vst [vmem:[%s322 + $0x60] sm:$0xff] %v2745
        %2762 = vst [vmem:[%s322 + $0x68] sm:$0xff] %v2746
        %2763 = vst [vmem:[%s322 + $0x70] sm:$0xff] %v2747
        %2764 = vst [vmem:[%s322 + $0x78] sm:$0xff] %v2748
        %s2765 = sand.u32 %s179, 1
        %s2766 = scalar_lea.sflag [#allocation5], %s2765
        %s2767 = sand.u32 %s179, 1
        %s2768 = smul.addr %s2767, 128
        %s2769 = scalar_lea.vmem [#allocation9], %s2768
        // Predicated region
        $region65: #{tpu_custom_call.1} parent=43 // pred_check
          %p2770 = pneg %p189
        $region66: #{tpu_custom_call.1} parent=43 // pred_check_branch
          %2772 = sbr.rel (%p2770) target = $region68
        $region67: #{tpu_custom_call.1} parent=43 // pred_region
          %s2773 = smul.u32 16, %s29
          %2775 = vsyncadd %s2766, 0
          %s2776 = smul.addr %s28, 32
          %s2777 = sadd.s32 %s2773, %s2776
          %s2778 = smul.addr %s2777, 8
          %s2779 = scalar_lea.hbm %s6, %s2778
          %s2780 = sshll.u32 %s2769, 4
          %s2781 = int_to_ptr.vmem [resolvable:$true] %s2780
          %s2782 = sshll.u32 %s2779, 4
          %s2783 = int_to_ptr.hbm [resolvable:$true] %s2782
          %2788 = dma.vmem_to_hbm [thread:$0]  %s2781, 2048, %s2783, %s2766, 128, 128, 8
        $region68: #{tpu_custom_call.1} parent=43 // pred_fallthru
          _
      $region44: #{tpu_custom_call.1} parent=5 // pred_fallthru
        _
      %p2789 = scmp.le.s32.totalorder 2, %s19
      // Predicated region
      $region69: #{tpu_custom_call.1} parent=5 // pred_check
        %p2790 = pneg %p2789
      $region70: #{tpu_custom_call.1} parent=5 // pred_check_branch
        %2792 = sbr.rel (%p2790) target = $region72
      $region71: #{tpu_custom_call.1} parent=5 // pred_region
        %s2793 = ssub.s32 %s19, 2
        // Predicated region
        $region73: #{tpu_custom_call.1} parent=71 // pred_check
          %p2794 = pneg %p195
        $region74: #{tpu_custom_call.1} parent=71 // pred_check_branch
          %2796 = sbr.rel (%p2794) target = $region76
        $region75: #{tpu_custom_call.1} parent=71 // pred_region
          %s2797 = sand.u32 %s180, 1
          %s2798 = scalar_lea.sflag [#allocation5], %s2797
          %s2799 = sand.u32 %s180, 1
          %s2800 = smul.addr %s2799, 128
          %s2801 = scalar_lea.vmem [#allocation9], %s2800
          %2803 = dma.done %s2798, 2048
        $region76: #{tpu_custom_call.1} parent=71 // pred_fallthru
          _
      $region72: #{tpu_custom_call.1} parent=5 // pred_fallthru
        _
    $region6: #{tpu_custom_call.1} parent=1 // loop_footer
      %s23 = sadd.s32 1, %s19
    $region7: #{tpu_custom_call.1} parent=1 // loop_footer_branch
      %18 = sbr.rel target = $region3
    $region8: #{tpu_custom_call.1} parent=1 // loop_exit
      _
    %2804 = vsyncpa [#allocation4], 1
    %s2805 = scalar_lea.sflag [#allocation4], 1
    %2806 = vsyncpa %s2805, 1
    %2807 = vsyncpa [#allocation7], 1
    %2808 = vsyncpa [#allocation5], 1
    %s2809 = scalar_lea.sflag [#allocation5], 1
    %2810 = vsyncpa %s2809, 1

</llo_original>
